<compile_context>
chip_gen: v6e
topology: v6e:2x2x1
jax: 0.10.0
libtpu: 0.0.40
codegen_flags: <defaults>
</compile_context>

<pallas_src>
import functools

import numpy as np
import jax
import jax.numpy as jnp
from jax.experimental import pallas as pl
from jax.experimental.pallas import tpu as pltpu


# ----------------------------------------------------------------------------
# Pallas kernels
# ----------------------------------------------------------------------------

def _round_up(x, m):
    return (x + m - 1) // m * m


def _mm_kernel(act, x_ref, w_ref, b_ref, o_ref):
    """o = act(x @ w + shift); bf16 MXU inputs, f32 accumulation/epilogue."""
    y = jnp.dot(x_ref[...], w_ref[...], preferred_element_type=jnp.float32)
    y = y + b_ref[...]
    if act == "relu":
        y = jnp.maximum(y, 0.0)
    o_ref[...] = y.astype(o_ref.dtype)


def pallas_matmul(x, w, shift=None, act="none", out_dtype=jnp.bfloat16):
    """(M,K) @ (K,N) on the MXU with fused per-column shift and optional ReLU.

    Inputs are cast to bf16 (f32 accumulation).  2-D (M,N) parallel grid so
    both v7x TensorCores get work; N tile is 256 when N allows, else 128.
    """
    M, K = x.shape
    Kw, N = w.shape
    assert K == Kw

    Kp = _round_up(K, 16)                 # bf16 sublane-pack friendly
    Np = _round_up(N, 128)
    TN = 256 if Np % 256 == 0 else 128
    TM = min(128, _round_up(M, 8))
    Mp = _round_up(M, TM)

    xp = x.astype(jnp.bfloat16)
    wp = w.astype(jnp.bfloat16)
    if (Mp, Kp) != (M, K):
        xp = jnp.pad(xp, ((0, Mp - M), (0, Kp - K)))
    if (Kp, Np) != (K, N):
        wp = jnp.pad(wp, ((0, Kp - K), (0, Np - N)))
    if shift is None:
        bp = jnp.zeros((1, Np), jnp.float32)
    else:
        bp = jnp.pad(shift.astype(jnp.float32).reshape(1, N), ((0, 0), (0, Np - N)))

    out = pl.pallas_call(
        functools.partial(_mm_kernel, act),
        out_shape=jax.ShapeDtypeStruct((Mp, Np), out_dtype),
        grid=(Mp // TM, Np // TN),
        in_specs=[
            pl.BlockSpec((TM, Kp), lambda i, j: (i, 0)),
            pl.BlockSpec((Kp, TN), lambda i, j: (0, j)),
            pl.BlockSpec((1, TN), lambda i, j: (0, j)),
        ],
        out_specs=pl.BlockSpec((TM, TN), lambda i, j: (i, j)),
        compiler_params=pltpu.CompilerParams(
            dimension_semantics=("parallel", "parallel")),
    )(xp, wp, bp)

    if (Mp, Np) != (M, N):
        out = out[:M, :N]
    return out


def _resize_heads_kernel(x_ref, k_ref, o_ref, t_ref, s_ref):
    """Fused final bilinear upsample (GEMM) + tanh/sigmoid heads."""
    y = jnp.dot(x_ref[...], k_ref[...], preferred_element_type=jnp.float32)
    o_ref[...] = y
    t_ref[...] = jnp.tanh(y)
    s_ref[...] = 0.5 * (jnp.tanh(0.5 * y) + 1.0)   # sigmoid via EUP tanh


def resize_heads(logits_d, Hin, Win):
    """(B,Hd,Wd,1) -> bilinear(align_corners) upsample to (Hin,Win) + heads.

    One Pallas launch: logits, tanh(logits), sigmoid(logits) in NCHW.
    """
    B, Hd, Wd, _ = logits_d.shape
    Kmat = jnp.asarray(np.kron(_interp_matrix_np(Hd, Hin),
                               _interp_matrix_np(Wd, Win)))      # (Hd*Wd, Hin*Win)
    Kdim, N = Hd * Wd, Hin * Win
    Mp = _round_up(B, 16)
    Kp = _round_up(Kdim, 16)
    Np = _round_up(N, 128)

    x = logits_d.reshape(B, Kdim).astype(jnp.bfloat16)
    xp = jnp.pad(x, ((0, Mp - B), (0, Kp - Kdim)))
    kp = jnp.pad(Kmat.astype(jnp.bfloat16), ((0, Kp - Kdim), (0, Np - N)))

    logits, tanh_o, sig_o = pl.pallas_call(
        _resize_heads_kernel,
        out_shape=(jax.ShapeDtypeStruct((Mp, Np), jnp.float32),) * 3,
    )(xp, kp)

    def _fin(o):
        return o[:B, :N].reshape(B, 1, Hin, Win)                  # NCHW

    return _fin(tanh_o), _fin(sig_o), _fin(logits)


# ----------------------------------------------------------------------------
# Layers built on the Pallas GEMM (im2col / interp matrices are glue)
# ----------------------------------------------------------------------------

def conv_bn_act(x, layer, *, stride=1, padding=0, dilation=1, act="relu",
                out_dtype=jnp.bfloat16):
    """NHWC conv + folded BN + activation via im2col + Pallas GEMM."""
    w4 = layer["w"]                                   # [kh,kw,cin,cout] bf16 (scale folded)
    kh, kw, cin, cout = w4.shape
    B, H, W, _ = x.shape
    x = x.astype(jnp.bfloat16)
    Hout = (H + 2 * padding - dilation * (kh - 1) - 1) // stride + 1
    Wout = (W + 2 * padding - dilation * (kw - 1) - 1) // stride + 1

    if kh == 1 and kw == 1 and stride == 1 and padding == 0:
        Xm = x.reshape(B * H * W, cin)
    else:
        xp = jnp.pad(x, ((0, 0), (padding, padding), (padding, padding), (0, 0)))
        cols = []
        for i in range(kh):
            for j in range(kw):
                h0, w0 = i * dilation, j * dilation
                cols.append(
                    xp[:, h0:h0 + stride * (Hout - 1) + 1:stride,
                          w0:w0 + stride * (Wout - 1) + 1:stride, :])
        Xm = jnp.concatenate(cols, axis=-1).reshape(B * Hout * Wout, kh * kw * cin)

    Wm = w4.reshape(kh * kw * cin, cout)
    y = pallas_matmul(Xm, Wm, layer["shift"], act=act, out_dtype=out_dtype)
    return y.reshape(B, Hout, Wout, cout)


def pooled_conv(h, layer):
    """Fused global-average-pool + 1x1 conv + BN + ReLU as a single GEMM.

    mean_hw(h) @ W == h.reshape(B, HW*C) @ tile(W, HW) / (HW).
    """
    B, H, W, C = h.shape
    cout = layer["w"].shape[3]
    w = layer["w"].reshape(C, cout).astype(jnp.float32)
    wbig = jnp.tile(w / float(H * W), (H * W, 1)).astype(jnp.bfloat16)  # (HW*C, cout)
    xm = h.astype(jnp.bfloat16).reshape(B, H * W * C)
    y = pallas_matmul(xm, wbig, layer["shift"], act="relu")
    return y.reshape(B, 1, 1, cout)


def _interp_matrix_np(n_in, n_out):
    """Columns: bilinear align_corners=True interpolation weights."""
    A = np.zeros((n_in, n_out), np.float32)
    if n_in == 1:
        A[0, :] = 1.0
    elif n_out == 1:
        A[0, 0] = 1.0
    else:
        scale = (n_in - 1) / (n_out - 1)
        for k in range(n_out):
            src = k * scale
            i0 = min(int(np.floor(src)), n_in - 1)
            i1 = min(i0 + 1, n_in - 1)
            f = src - i0
            A[i0, k] += 1.0 - f
            A[i1, k] += f
    return A


def bilinear_resize(x, Hout, Wout):
    """F.interpolate(mode='bilinear', align_corners=True) as ONE Pallas GEMM
    against kron(Ah, Aw); the 1x1-source case is a pure broadcast."""
    B, H, W, C = x.shape
    if H == 1 and W == 1:
        return jnp.broadcast_to(x, (B, Hout, Wout, C))
    Kmat = jnp.asarray(np.kron(_interp_matrix_np(H, Hout),
                               _interp_matrix_np(W, Wout)))      # (H*W, Hout*Wout)
    t = jnp.transpose(x, (0, 3, 1, 2)).reshape(B * C, H * W)
    y = pallas_matmul(t, Kmat)
    y = y.reshape(B, C, Hout, Wout)
    return jnp.transpose(y, (0, 2, 3, 1))                        # NHWC


# ----------------------------------------------------------------------------
# Parameter init (deterministic, synthetic); BN scale folded into weights
# ----------------------------------------------------------------------------

def _init_conv_bn(key, kh, kw, cin, cout):
    kw_, kg, kbeta, km, kv = jax.random.split(key, 5)
    fan_in = kh * kw * cin
    w = jax.random.normal(kw_, (kh, kw, cin, cout), jnp.float32) / np.sqrt(fan_in)
    gamma = 1.0 + 0.1 * jax.random.normal(kg, (cout,), jnp.float32)
    beta = 0.1 * jax.random.normal(kbeta, (cout,), jnp.float32)
    mean = 0.1 * jax.random.normal(km, (cout,), jnp.float32)
    var = jax.random.uniform(kv, (cout,), jnp.float32, 0.5, 1.5)
    scale = gamma / jnp.sqrt(var + 1e-5)
    shift = beta - mean * scale
    w_folded = (w * scale[None, None, None, :]).astype(jnp.bfloat16)
    return {"w": w_folded, "shift": shift.astype(jnp.float32)}


def _init_conv_bias(key, kh, kw, cin, cout):
    kw_, kb = jax.random.split(key)
    fan_in = kh * kw * cin
    w = jax.random.normal(kw_, (kh, kw, cin, cout), jnp.float32) / np.sqrt(fan_in)
    b = 0.1 * jax.random.normal(kb, (cout,), jnp.float32)
    return {"w": w.astype(jnp.bfloat16), "shift": b}


def init_params(key):
    ks = jax.random.split(key, 15)
    p = {}
    # simplified ResNet-style backbone (output_stride=16, low-level tap @ stride 4)
    p["conv1"] = _init_conv_bn(ks[0], 3, 3, 1, 8)     # stride 2
    p["conv2"] = _init_conv_bn(ks[1], 3, 3, 8, 16)    # stride 4 -> low_level_feat
    p["conv3"] = _init_conv_bn(ks[2], 3, 3, 16, 32)   # stride 8
    p["conv4"] = _init_conv_bn(ks[3], 3, 3, 32, 32)   # stride 16
    p["conv5"] = _init_conv_bn(ks[4], 3, 3, 32, 64)   # dilation 2 -> x
    # ASPP
    p["aspp1"] = _init_conv_bn(ks[5], 1, 1, 64, 32)
    p["aspp2"] = _init_conv_bn(ks[6], 3, 3, 64, 32)   # dilation 6
    p["aspp3"] = _init_conv_bn(ks[7], 3, 3, 64, 32)   # dilation 12
    p["aspp4"] = _init_conv_bn(ks[8], 3, 3, 64, 32)   # dilation 18
    p["aspp_pool"] = _init_conv_bn(ks[9], 1, 1, 64, 32)
    p["aspp_proj"] = _init_conv_bn(ks[10], 1, 1, 160, 32)
    # decoder
    p["dec_low"] = _init_conv_bn(ks[11], 1, 1, 16, 8)
    p["dec1"] = _init_conv_bn(ks[12], 3, 3, 40, 32)
    p["dec2"] = _init_conv_bn(ks[13], 3, 3, 32, 32)
    p["cls"] = _init_conv_bias(ks[14], 1, 1, 32, 1)
    return p


# ----------------------------------------------------------------------------
# DeepLab forward
# ----------------------------------------------------------------------------

def deeplab_forward(x_nchw, p):
    x = jnp.transpose(x_nchw, (0, 2, 3, 1))                      # NHWC
    B, Hin, Win = x.shape[0], x.shape[1], x.shape[2]

    # ---- backbone ----
    h = conv_bn_act(x, p["conv1"], stride=2, padding=1)
    low = conv_bn_act(h, p["conv2"], stride=2, padding=1)        # low_level_feat
    h = conv_bn_act(low, p["conv3"], stride=2, padding=1)
    h = conv_bn_act(h, p["conv4"], stride=2, padding=1)
    h = conv_bn_act(h, p["conv5"], stride=1, padding=2, dilation=2)

    # ---- ASPP ----
    b1 = conv_bn_act(h, p["aspp1"])                              # 1x1
    b2 = conv_bn_act(h, p["aspp2"], padding=6, dilation=6)
    b3 = conv_bn_act(h, p["aspp3"], padding=12, dilation=12)
    b4 = conv_bn_act(h, p["aspp4"], padding=18, dilation=18)
    b5 = pooled_conv(h, p["aspp_pool"])                          # fused GAP + 1x1 conv
    b5 = jnp.broadcast_to(b5, (B, h.shape[1], h.shape[2], b5.shape[-1]))
    a = jnp.concatenate([b1, b2, b3, b4, b5], axis=-1)
    a = conv_bn_act(a, p["aspp_proj"])                           # 1x1
    # Dropout(0.5): identity in inference mode.

    # ---- decoder ----
    ll = conv_bn_act(low, p["dec_low"])                          # 1x1
    a_up = bilinear_resize(a, ll.shape[1], ll.shape[2])
    d = jnp.concatenate([a_up, ll], axis=-1)
    d = conv_bn_act(d, p["dec1"], padding=1)
    d = conv_bn_act(d, p["dec2"], padding=1)
    logits_d = conv_bn_act(d, p["cls"], act="none")              # (B, Hd, Wd, 1)

    # ---- fused final upsample + tanh/sigmoid heads (single Pallas launch) ----
    out_tanh, out_sigmoid, logits = resize_heads(logits_d, Hin, Win)
    return out_tanh, out_sigmoid, logits                          # NCHW


# ----------------------------------------------------------------------------

if __name__ == "__main__":
    key = jax.random.PRNGKey(0)
    kx, kp = jax.random.split(key)
    x = jax.random.normal(kx, (2, 1, 32, 32), jnp.float32)       # NCHW, n_in_channels=1
    params = init_params(kp)

    fwd = jax.jit(deeplab_forward)
    out_tanh, out_mask, logits = fwd(x, params)
    jax.block_until_ready((out_tanh, out_mask, logits))

    assert out_tanh.shape == (2, 1, 32, 32)
    assert out_mask.shape == (2, 1, 32, 32)
    assert logits.shape == (2, 1, 32, 32)
    assert bool(jnp.all(jnp.isfinite(logits)))
    assert bool(jnp.all((out_mask >= 0.0) & (out_mask <= 1.0)))
    print("KERNEL_OK")
</pallas_src>

<mosaic_0001>
module attributes {stable_mosaic.version = 11 : i64} {
  func.func @_mm_kernel(%arg0: i32, %arg1: i32, %arg2: memref<128x16xbf16, #tpu.memory_space<vmem>>, %arg3: memref<16x128xbf16, #tpu.memory_space<vmem>>, %arg4: memref<1x128xf32, #tpu.memory_space<vmem>>, %arg5: memref<128x128xbf16, #tpu.memory_space<vmem>>) attributes {dimension_semantics = [#tpu.dimension_semantics<parallel>, #tpu.dimension_semantics<parallel>], iteration_bounds = array<i64: 4, 1>, scalar_prefetch = 0 : i64, scratch_operands = 0 : i64, tpu.core_type = #tpu.core_type<tc>, window_params = [{transform_indices = @transform_0, window_bounds = array<i64: 128, 16>}, {transform_indices = @transform_1, window_bounds = array<i64: 16, 128>}, {transform_indices = @transform_2, window_bounds = array<i64: 1, 128>}, {transform_indices = @transform_3, window_bounds = array<i64: 128, 128>}]} {
    %c0 = arith.constant 0 : index
    %c0_0 = arith.constant 0 : index
    %0 = vector.load %arg2[%c0, %c0_0] : memref<128x16xbf16, #tpu.memory_space<vmem>>, vector<128x16xbf16>
    %c0_1 = arith.constant 0 : index
    %c0_2 = arith.constant 0 : index
    %1 = vector.load %arg3[%c0_1, %c0_2] : memref<16x128xbf16, #tpu.memory_space<vmem>>, vector<16x128xbf16>
    %cst = arith.constant dense<0.000000e+00> : vector<128x128xf32>
    %2 = tpu.matmul %0, %1, %cst {dimension_numbers = #tpu.dot_dimension_numbers<[1], [0], [0], [1], [0, 0, 1, 1], [], []>} : vector<128x16xbf16>, vector<16x128xbf16>, vector<128x128xf32> -> vector<128x128xf32>
    %c0_3 = arith.constant 0 : index
    %c0_4 = arith.constant 0 : index
    %3 = vector.load %arg4[%c0_3, %c0_4] : memref<1x128xf32, #tpu.memory_space<vmem>>, vector<1x128xf32>
    %4 = vector.broadcast %3 : vector<1x128xf32> to vector<128x128xf32>
    %5 = arith.addf %2, %4 : vector<128x128xf32>
    %cst_5 = arith.constant 0.000000e+00 : f32
    %6 = vector.broadcast %cst_5 : f32 to vector<128x128xf32>
    %7 = arith.maximumf %5, %6 : vector<128x128xf32>
    %8 = arith.truncf %7 : vector<128x128xf32> to vector<128x128xbf16>
    %c0_6 = arith.constant 0 : index
    %c0_7 = arith.constant 0 : index
    %9 = vector.load %arg5[%c0_6, %c0_7] : memref<128x128xbf16, #tpu.memory_space<vmem>>, vector<128x128xbf16>
    tpu.vector_store %arg5[%c0_6, %c0_7], %8 {strides = array<i32>} : memref<128x128xbf16, #tpu.memory_space<vmem>>, vector<128x128xbf16>,
    return
  }
  func.func @transform_0(%arg0: i32, %arg1: i32) -> (i32, i32) {
    %c0_i32 = arith.constant 0 : i32
    %c0_i32_0 = arith.constant 0 : i32
    return %arg0, %c0_i32 : i32, i32
  }
  func.func @transform_1(%arg0: i32, %arg1: i32) -> (i32, i32) {
    %c0_i32 = arith.constant 0 : i32
    %c0_i32_0 = arith.constant 0 : i32
    return %c0_i32, %arg1 : i32, i32
  }
  func.func @transform_2(%arg0: i32, %arg1: i32) -> (i32, i32) {
    %c0_i32 = arith.constant 0 : i32
    %c0_i32_0 = arith.constant 0 : i32
    return %c0_i32, %arg1 : i32, i32
  }
  func.func @transform_3(%arg0: i32, %arg1: i32) -> (i32, i32) {
    %c0_i32 = arith.constant 0 : i32
    return %arg0, %arg1 : i32, i32
  }
}

module attributes {stable_mosaic.version = 11 : i64} {
  func.func @_mm_kernel(%arg0: i32, %arg1: i32, %arg2: memref<128x80xbf16, #tpu.memory_space<vmem>>, %arg3: memref<80x128xbf16, #tpu.memory_space<vmem>>, %arg4: memref<1x128xf32, #tpu.memory_space<vmem>>, %arg5: memref<128x128xbf16, #tpu.memory_space<vmem>>) attributes {dimension_semantics = [#tpu.dimension_semantics<parallel>, #tpu.dimension_semantics<parallel>], iteration_bounds = array<i64: 1, 1>, scalar_prefetch = 0 : i64, scratch_operands = 0 : i64, tpu.core_type = #tpu.core_type<tc>, window_params = [{transform_indices = @transform_0, window_bounds = array<i64: 128, 80>}, {transform_indices = @transform_1, window_bounds = array<i64: 80, 128>}, {transform_indices = @transform_2, window_bounds = array<i64: 1, 128>}, {transform_indices = @transform_3, window_bounds = array<i64: 128, 128>}]} {
    %c0 = arith.constant 0 : index
    %c0_0 = arith.constant 0 : index
    %0 = vector.load %arg2[%c0, %c0_0] : memref<128x80xbf16, #tpu.memory_space<vmem>>, vector<128x80xbf16>
    %c0_1 = arith.constant 0 : index
    %c0_2 = arith.constant 0 : index
    %1 = vector.load %arg3[%c0_1, %c0_2] : memref<80x128xbf16, #tpu.memory_space<vmem>>, vector<80x128xbf16>
    %cst = arith.constant dense<0.000000e+00> : vector<128x128xf32>
    %2 = tpu.matmul %0, %1, %cst {dimension_numbers = #tpu.dot_dimension_numbers<[1], [0], [0], [1], [0, 0, 1, 1], [], []>} : vector<128x80xbf16>, vector<80x128xbf16>, vector<128x128xf32> -> vector<128x128xf32>
    %c0_3 = arith.constant 0 : index
    %c0_4 = arith.constant 0 : index
    %3 = vector.load %arg4[%c0_3, %c0_4] : memref<1x128xf32, #tpu.memory_space<vmem>>, vector<1x128xf32>
    %4 = vector.broadcast %3 : vector<1x128xf32> to vector<128x128xf32>
    %5 = arith.addf %2, %4 : vector<128x128xf32>
    %cst_5 = arith.constant 0.000000e+00 : f32
    %6 = vector.broadcast %cst_5 : f32 to vector<128x128xf32>
    %7 = arith.maximumf %5, %6 : vector<128x128xf32>
    %8 = arith.truncf %7 : vector<128x128xf32> to vector<128x128xbf16>
    %c0_6 = arith.constant 0 : index
    %c0_7 = arith.constant 0 : index
    %9 = vector.load %arg5[%c0_6, %c0_7] : memref<128x128xbf16, #tpu.memory_space<vmem>>, vector<128x128xbf16>
    tpu.vector_store %arg5[%c0_6, %c0_7], %8 {strides = array<i32>} : memref<128x128xbf16, #tpu.memory_space<vmem>>, vector<128x128xbf16>,
    return
  }
  func.func @transform_0(%arg0: i32, %arg1: i32) -> (i32, i32) {
    %c0_i32 = arith.constant 0 : i32
    %c0_i32_0 = arith.constant 0 : i32
    return %arg0, %c0_i32 : i32, i32
  }
  func.func @transform_1(%arg0: i32, %arg1: i32) -> (i32, i32) {
    %c0_i32 = arith.constant 0 : i32
    %c0_i32_0 = arith.constant 0 : i32
    return %c0_i32, %arg1 : i32, i32
  }
  func.func @transform_2(%arg0: i32, %arg1: i32) -> (i32, i32) {
    %c0_i32 = arith.constant 0 : i32
    %c0_i32_0 = arith.constant 0 : i32
    return %c0_i32, %arg1 : i32, i32
  }
  func.func @transform_3(%arg0: i32, %arg1: i32) -> (i32, i32) {
    %c0_i32 = arith.constant 0 : i32
    return %arg0, %arg1 : i32, i32
  }
}

module attributes {stable_mosaic.version = 11 : i64} {
  func.func @_mm_kernel(%arg0: i32, %arg1: i32, %arg2: memref<32x144xbf16, #tpu.memory_space<vmem>>, %arg3: memref<144x128xbf16, #tpu.memory_space<vmem>>, %arg4: memref<1x128xf32, #tpu.memory_space<vmem>>, %arg5: memref<32x128xbf16, #tpu.memory_space<vmem>>) attributes {dimension_semantics = [#tpu.dimension_semantics<parallel>, #tpu.dimension_semantics<parallel>], iteration_bounds = array<i64: 1, 1>, scalar_prefetch = 0 : i64, scratch_operands = 0 : i64, tpu.core_type = #tpu.core_type<tc>, window_params = [{transform_indices = @transform_0, window_bounds = array<i64: 32, 144>}, {transform_indices = @transform_1, window_bounds = array<i64: 144, 128>}, {transform_indices = @transform_2, window_bounds = array<i64: 1, 128>}, {transform_indices = @transform_3, window_bounds = array<i64: 32, 128>}]} {
    %c0 = arith.constant 0 : index
    %c0_0 = arith.constant 0 : index
    %0 = vector.load %arg2[%c0, %c0_0] : memref<32x144xbf16, #tpu.memory_space<vmem>>, vector<32x144xbf16>
    %c0_1 = arith.constant 0 : index
    %c0_2 = arith.constant 0 : index
    %1 = vector.load %arg3[%c0_1, %c0_2] : memref<144x128xbf16, #tpu.memory_space<vmem>>, vector<144x128xbf16>
    %cst = arith.constant dense<0.000000e+00> : vector<32x128xf32>
    %2 = tpu.matmul %0, %1, %cst {dimension_numbers = #tpu.dot_dimension_numbers<[1], [0], [0], [1], [0, 0, 1, 1], [], []>} : vector<32x144xbf16>, vector<144x128xbf16>, vector<32x128xf32> -> vector<32x128xf32>
    %c0_3 = arith.constant 0 : index
    %c0_4 = arith.constant 0 : index
    %3 = vector.load %arg4[%c0_3, %c0_4] : memref<1x128xf32, #tpu.memory_space<vmem>>, vector<1x128xf32>
    %4 = vector.broadcast %3 : vector<1x128xf32> to vector<32x128xf32>
    %5 = arith.addf %2, %4 : vector<32x128xf32>
    %cst_5 = arith.constant 0.000000e+00 : f32
    %6 = vector.broadcast %cst_5 : f32 to vector<32x128xf32>
    %7 = arith.maximumf %5, %6 : vector<32x128xf32>
    %8 = arith.truncf %7 : vector<32x128xf32> to vector<32x128xbf16>
    %c0_6 = arith.constant 0 : index
    %c0_7 = arith.constant 0 : index
    %9 = vector.load %arg5[%c0_6, %c0_7] : memref<32x128xbf16, #tpu.memory_space<vmem>>, vector<32x128xbf16>
    tpu.vector_store %arg5[%c0_6, %c0_7], %8 {strides = array<i32>} : memref<32x128xbf16, #tpu.memory_space<vmem>>, vector<32x128xbf16>,
    return
  }
  func.func @transform_0(%arg0: i32, %arg1: i32) -> (i32, i32) {
    %c0_i32 = arith.constant 0 : i32
    %c0_i32_0 = arith.constant 0 : i32
    return %arg0, %c0_i32 : i32, i32
  }
  func.func @transform_1(%arg0: i32, %arg1: i32) -> (i32, i32) {
    %c0_i32 = arith.constant 0 : i32
    %c0_i32_0 = arith.constant 0 : i32
    return %c0_i32, %arg1 : i32, i32
  }
  func.func @transform_2(%arg0: i32, %arg1: i32) -> (i32, i32) {
    %c0_i32 = arith.constant 0 : i32
    %c0_i32_0 = arith.constant 0 : i32
    return %c0_i32, %arg1 : i32, i32
  }
  func.func @transform_3(%arg0: i32, %arg1: i32) -> (i32, i32) {
    %c0_i32 = arith.constant 0 : i32
    return %arg0, %arg1 : i32, i32
  }
}

module attributes {stable_mosaic.version = 11 : i64} {
  func.func @_mm_kernel(%arg0: i32, %arg1: i32, %arg2: memref<8x288xbf16, #tpu.memory_space<vmem>>, %arg3: memref<288x128xbf16, #tpu.memory_space<vmem>>, %arg4: memref<1x128xf32, #tpu.memory_space<vmem>>, %arg5: memref<8x128xbf16, #tpu.memory_space<vmem>>) attributes {dimension_semantics = [#tpu.dimension_semantics<parallel>, #tpu.dimension_semantics<parallel>], iteration_bounds = array<i64: 1, 1>, scalar_prefetch = 0 : i64, scratch_operands = 0 : i64, tpu.core_type = #tpu.core_type<tc>, window_params = [{transform_indices = @transform_0, window_bounds = array<i64: 8, 288>}, {transform_indices = @transform_1, window_bounds = array<i64: 288, 128>}, {transform_indices = @transform_2, window_bounds = array<i64: 1, 128>}, {transform_indices = @transform_3, window_bounds = array<i64: 8, 128>}]} {
    %c0 = arith.constant 0 : index
    %c0_0 = arith.constant 0 : index
    %0 = vector.load %arg2[%c0, %c0_0] : memref<8x288xbf16, #tpu.memory_space<vmem>>, vector<8x288xbf16>
    %c0_1 = arith.constant 0 : index
    %c0_2 = arith.constant 0 : index
    %1 = vector.load %arg3[%c0_1, %c0_2] : memref<288x128xbf16, #tpu.memory_space<vmem>>, vector<288x128xbf16>
    %cst = arith.constant dense<0.000000e+00> : vector<8x128xf32>
    %2 = tpu.matmul %0, %1, %cst {dimension_numbers = #tpu.dot_dimension_numbers<[1], [0], [0], [1], [0, 0, 1, 1], [], []>} : vector<8x288xbf16>, vector<288x128xbf16>, vector<8x128xf32> -> vector<8x128xf32>
    %c0_3 = arith.constant 0 : index
    %c0_4 = arith.constant 0 : index
    %3 = vector.load %arg4[%c0_3, %c0_4] : memref<1x128xf32, #tpu.memory_space<vmem>>, vector<1x128xf32>
    %4 = vector.broadcast %3 : vector<1x128xf32> to vector<8x128xf32>
    %5 = arith.addf %2, %4 : vector<8x128xf32>
    %cst_5 = arith.constant 0.000000e+00 : f32
    %6 = vector.broadcast %cst_5 : f32 to vector<8x128xf32>
    %7 = arith.maximumf %5, %6 : vector<8x128xf32>
    %8 = arith.truncf %7 : vector<8x128xf32> to vector<8x128xbf16>
    %c0_6 = arith.constant 0 : index
    %c0_7 = arith.constant 0 : index
    %9 = vector.load %arg5[%c0_6, %c0_7] : memref<8x128xbf16, #tpu.memory_space<vmem>>, vector<8x128xbf16>
    tpu.vector_store %arg5[%c0_6, %c0_7], %8 {strides = array<i32>} : memref<8x128xbf16, #tpu.memory_space<vmem>>, vector<8x128xbf16>,
    return
  }
  func.func @transform_0(%arg0: i32, %arg1: i32) -> (i32, i32) {
    %c0_i32 = arith.constant 0 : i32
    %c0_i32_0 = arith.constant 0 : i32
    return %arg0, %c0_i32 : i32, i32
  }
  func.func @transform_1(%arg0: i32, %arg1: i32) -> (i32, i32) {
    %c0_i32 = arith.constant 0 : i32
    %c0_i32_0 = arith.constant 0 : i32
    return %c0_i32, %arg1 : i32, i32
  }
  func.func @transform_2(%arg0: i32, %arg1: i32) -> (i32, i32) {
    %c0_i32 = arith.constant 0 : i32
    %c0_i32_0 = arith.constant 0 : i32
    return %c0_i32, %arg1 : i32, i32
  }
  func.func @transform_3(%arg0: i32, %arg1: i32) -> (i32, i32) {
    %c0_i32 = arith.constant 0 : i32
    return %arg0, %arg1 : i32, i32
  }
}

module attributes {stable_mosaic.version = 11 : i64} {
  func.func @_mm_kernel(%arg0: i32, %arg1: i32, %arg2: memref<8x576xbf16, #tpu.memory_space<vmem>>, %arg3: memref<576x128xbf16, #tpu.memory_space<vmem>>, %arg4: memref<1x128xf32, #tpu.memory_space<vmem>>, %arg5: memref<8x128xbf16, #tpu.memory_space<vmem>>) attributes {dimension_semantics = [#tpu.dimension_semantics<parallel>, #tpu.dimension_semantics<parallel>], iteration_bounds = array<i64: 1, 1>, scalar_prefetch = 0 : i64, scratch_operands = 0 : i64, tpu.core_type = #tpu.core_type<tc>, window_params = [{transform_indices = @transform_0, window_bounds = array<i64: 8, 576>}, {transform_indices = @transform_1, window_bounds = array<i64: 576, 128>}, {transform_indices = @transform_2, window_bounds = array<i64: 1, 128>}, {transform_indices = @transform_3, window_bounds = array<i64: 8, 128>}]} {
    %c0 = arith.constant 0 : index
    %c0_0 = arith.constant 0 : index
    %0 = vector.load %arg2[%c0, %c0_0] : memref<8x576xbf16, #tpu.memory_space<vmem>>, vector<8x576xbf16>
    %c0_1 = arith.constant 0 : index
    %c0_2 = arith.constant 0 : index
    %1 = vector.load %arg3[%c0_1, %c0_2] : memref<576x128xbf16, #tpu.memory_space<vmem>>, vector<576x128xbf16>
    %cst = arith.constant dense<0.000000e+00> : vector<8x128xf32>
    %2 = tpu.matmul %0, %1, %cst {dimension_numbers = #tpu.dot_dimension_numbers<[1], [0], [0], [1], [0, 0, 1, 1], [], []>} : vector<8x576xbf16>, vector<576x128xbf16>, vector<8x128xf32> -> vector<8x128xf32>
    %c0_3 = arith.constant 0 : index
    %c0_4 = arith.constant 0 : index
    %3 = vector.load %arg4[%c0_3, %c0_4] : memref<1x128xf32, #tpu.memory_space<vmem>>, vector<1x128xf32>
    %4 = vector.broadcast %3 : vector<1x128xf32> to vector<8x128xf32>
    %5 = arith.addf %2, %4 : vector<8x128xf32>
    %cst_5 = arith.constant 0.000000e+00 : f32
    %6 = vector.broadcast %cst_5 : f32 to vector<8x128xf32>
    %7 = arith.maximumf %5, %6 : vector<8x128xf32>
    %8 = arith.truncf %7 : vector<8x128xf32> to vector<8x128xbf16>
    %c0_6 = arith.constant 0 : index
    %c0_7 = arith.constant 0 : index
    %9 = vector.load %arg5[%c0_6, %c0_7] : memref<8x128xbf16, #tpu.memory_space<vmem>>, vector<8x128xbf16>
    tpu.vector_store %arg5[%c0_6, %c0_7], %8 {strides = array<i32>} : memref<8x128xbf16, #tpu.memory_space<vmem>>, vector<8x128xbf16>,
    return
  }
  func.func @transform_0(%arg0: i32, %arg1: i32) -> (i32, i32) {
    %c0_i32 = arith.constant 0 : i32
    %c0_i32_0 = arith.constant 0 : i32
    return %arg0, %c0_i32 : i32, i32
  }
  func.func @transform_1(%arg0: i32, %arg1: i32) -> (i32, i32) {
    %c0_i32 = arith.constant 0 : i32
    %c0_i32_0 = arith.constant 0 : i32
    return %c0_i32, %arg1 : i32, i32
  }
  func.func @transform_2(%arg0: i32, %arg1: i32) -> (i32, i32) {
    %c0_i32 = arith.constant 0 : i32
    %c0_i32_0 = arith.constant 0 : i32
    return %c0_i32, %arg1 : i32, i32
  }
  func.func @transform_3(%arg0: i32, %arg1: i32) -> (i32, i32) {
    %c0_i32 = arith.constant 0 : i32
    return %arg0, %arg1 : i32, i32
  }
}

module attributes {stable_mosaic.version = 11 : i64} {
  func.func @_mm_kernel(%arg0: i32, %arg1: i32, %arg2: memref<8x256xbf16, #tpu.memory_space<vmem>>, %arg3: memref<256x128xbf16, #tpu.memory_space<vmem>>, %arg4: memref<1x128xf32, #tpu.memory_space<vmem>>, %arg5: memref<8x128xbf16, #tpu.memory_space<vmem>>) attributes {dimension_semantics = [#tpu.dimension_semantics<parallel>, #tpu.dimension_semantics<parallel>], iteration_bounds = array<i64: 1, 1>, scalar_prefetch = 0 : i64, scratch_operands = 0 : i64, tpu.core_type = #tpu.core_type<tc>, window_params = [{transform_indices = @transform_0, window_bounds = array<i64: 8, 256>}, {transform_indices = @transform_1, window_bounds = array<i64: 256, 128>}, {transform_indices = @transform_2, window_bounds = array<i64: 1, 128>}, {transform_indices = @transform_3, window_bounds = array<i64: 8, 128>}]} {
    %c0 = arith.constant 0 : index
    %c0_0 = arith.constant 0 : index
    %0 = vector.load %arg2[%c0, %c0_0] : memref<8x256xbf16, #tpu.memory_space<vmem>>, vector<8x256xbf16>
    %c0_1 = arith.constant 0 : index
    %c0_2 = arith.constant 0 : index
    %1 = vector.load %arg3[%c0_1, %c0_2] : memref<256x128xbf16, #tpu.memory_space<vmem>>, vector<256x128xbf16>
    %cst = arith.constant dense<0.000000e+00> : vector<8x128xf32>
    %2 = tpu.matmul %0, %1, %cst {dimension_numbers = #tpu.dot_dimension_numbers<[1], [0], [0], [1], [0, 0, 1, 1], [], []>} : vector<8x256xbf16>, vector<256x128xbf16>, vector<8x128xf32> -> vector<8x128xf32>
    %c0_3 = arith.constant 0 : index
    %c0_4 = arith.constant 0 : index
    %3 = vector.load %arg4[%c0_3, %c0_4] : memref<1x128xf32, #tpu.memory_space<vmem>>, vector<1x128xf32>
    %4 = vector.broadcast %3 : vector<1x128xf32> to vector<8x128xf32>
    %5 = arith.addf %2, %4 : vector<8x128xf32>
    %cst_5 = arith.constant 0.000000e+00 : f32
    %6 = vector.broadcast %cst_5 : f32 to vector<8x128xf32>
    %7 = arith.maximumf %5, %6 : vector<8x128xf32>
    %8 = arith.truncf %7 : vector<8x128xf32> to vector<8x128xbf16>
    %c0_6 = arith.constant 0 : index
    %c0_7 = arith.constant 0 : index
    %9 = vector.load %arg5[%c0_6, %c0_7] : memref<8x128xbf16, #tpu.memory_space<vmem>>, vector<8x128xbf16>
    tpu.vector_store %arg5[%c0_6, %c0_7], %8 {strides = array<i32>} : memref<8x128xbf16, #tpu.memory_space<vmem>>, vector<8x128xbf16>,
    return
  }
  func.func @transform_0(%arg0: i32, %arg1: i32) -> (i32, i32) {
    %c0_i32 = arith.constant 0 : i32
    %c0_i32_0 = arith.constant 0 : i32
    return %arg0, %c0_i32 : i32, i32
  }
  func.func @transform_1(%arg0: i32, %arg1: i32) -> (i32, i32) {
    %c0_i32 = arith.constant 0 : i32
    %c0_i32_0 = arith.constant 0 : i32
    return %c0_i32, %arg1 : i32, i32
  }
  func.func @transform_2(%arg0: i32, %arg1: i32) -> (i32, i32) {
    %c0_i32 = arith.constant 0 : i32
    %c0_i32_0 = arith.constant 0 : i32
    return %c0_i32, %arg1 : i32, i32
  }
  func.func @transform_3(%arg0: i32, %arg1: i32) -> (i32, i32) {
    %c0_i32 = arith.constant 0 : i32
    return %arg0, %arg1 : i32, i32
  }
}

module attributes {stable_mosaic.version = 11 : i64} {
  func.func @_mm_kernel(%arg0: i32, %arg1: i32, %arg2: memref<8x64xbf16, #tpu.memory_space<vmem>>, %arg3: memref<64x128xbf16, #tpu.memory_space<vmem>>, %arg4: memref<1x128xf32, #tpu.memory_space<vmem>>, %arg5: memref<8x128xbf16, #tpu.memory_space<vmem>>) attributes {dimension_semantics = [#tpu.dimension_semantics<parallel>, #tpu.dimension_semantics<parallel>], iteration_bounds = array<i64: 1, 1>, scalar_prefetch = 0 : i64, scratch_operands = 0 : i64, tpu.core_type = #tpu.core_type<tc>, window_params = [{transform_indices = @transform_0, window_bounds = array<i64: 8, 64>}, {transform_indices = @transform_1, window_bounds = array<i64: 64, 128>}, {transform_indices = @transform_2, window_bounds = array<i64: 1, 128>}, {transform_indices = @transform_3, window_bounds = array<i64: 8, 128>}]} {
    %c0 = arith.constant 0 : index
    %c0_0 = arith.constant 0 : index
    %0 = vector.load %arg2[%c0, %c0_0] : memref<8x64xbf16, #tpu.memory_space<vmem>>, vector<8x64xbf16>
    %c0_1 = arith.constant 0 : index
    %c0_2 = arith.constant 0 : index
    %1 = vector.load %arg3[%c0_1, %c0_2] : memref<64x128xbf16, #tpu.memory_space<vmem>>, vector<64x128xbf16>
    %cst = arith.constant dense<0.000000e+00> : vector<8x128xf32>
    %2 = tpu.matmul %0, %1, %cst {dimension_numbers = #tpu.dot_dimension_numbers<[1], [0], [0], [1], [0, 0, 1, 1], [], []>} : vector<8x64xbf16>, vector<64x128xbf16>, vector<8x128xf32> -> vector<8x128xf32>
    %c0_3 = arith.constant 0 : index
    %c0_4 = arith.constant 0 : index
    %3 = vector.load %arg4[%c0_3, %c0_4] : memref<1x128xf32, #tpu.memory_space<vmem>>, vector<1x128xf32>
    %4 = vector.broadcast %3 : vector<1x128xf32> to vector<8x128xf32>
    %5 = arith.addf %2, %4 : vector<8x128xf32>
    %cst_5 = arith.constant 0.000000e+00 : f32
    %6 = vector.broadcast %cst_5 : f32 to vector<8x128xf32>
    %7 = arith.maximumf %5, %6 : vector<8x128xf32>
    %8 = arith.truncf %7 : vector<8x128xf32> to vector<8x128xbf16>
    %c0_6 = arith.constant 0 : index
    %c0_7 = arith.constant 0 : index
    %9 = vector.load %arg5[%c0_6, %c0_7] : memref<8x128xbf16, #tpu.memory_space<vmem>>, vector<8x128xbf16>
    tpu.vector_store %arg5[%c0_6, %c0_7], %8 {strides = array<i32>} : memref<8x128xbf16, #tpu.memory_space<vmem>>, vector<8x128xbf16>,
    return
  }
  func.func @transform_0(%arg0: i32, %arg1: i32) -> (i32, i32) {
    %c0_i32 = arith.constant 0 : i32
    %c0_i32_0 = arith.constant 0 : i32
    return %arg0, %c0_i32 : i32, i32
  }
  func.func @transform_1(%arg0: i32, %arg1: i32) -> (i32, i32) {
    %c0_i32 = arith.constant 0 : i32
    %c0_i32_0 = arith.constant 0 : i32
    return %c0_i32, %arg1 : i32, i32
  }
  func.func @transform_2(%arg0: i32, %arg1: i32) -> (i32, i32) {
    %c0_i32 = arith.constant 0 : i32
    %c0_i32_0 = arith.constant 0 : i32
    return %c0_i32, %arg1 : i32, i32
  }
  func.func @transform_3(%arg0: i32, %arg1: i32) -> (i32, i32) {
    %c0_i32 = arith.constant 0 : i32
    return %arg0, %arg1 : i32, i32
  }
}

module attributes {stable_mosaic.version = 11 : i64} {
  func.func @_mm_kernel(%arg0: i32, %arg1: i32, %arg2: memref<8x160xbf16, #tpu.memory_space<vmem>>, %arg3: memref<160x128xbf16, #tpu.memory_space<vmem>>, %arg4: memref<1x128xf32, #tpu.memory_space<vmem>>, %arg5: memref<8x128xbf16, #tpu.memory_space<vmem>>) attributes {dimension_semantics = [#tpu.dimension_semantics<parallel>, #tpu.dimension_semantics<parallel>], iteration_bounds = array<i64: 1, 1>, scalar_prefetch = 0 : i64, scratch_operands = 0 : i64, tpu.core_type = #tpu.core_type<tc>, window_params = [{transform_indices = @transform_0, window_bounds = array<i64: 8, 160>}, {transform_indices = @transform_1, window_bounds = array<i64: 160, 128>}, {transform_indices = @transform_2, window_bounds = array<i64: 1, 128>}, {transform_indices = @transform_3, window_bounds = array<i64: 8, 128>}]} {
    %c0 = arith.constant 0 : index
    %c0_0 = arith.constant 0 : index
    %0 = vector.load %arg2[%c0, %c0_0] : memref<8x160xbf16, #tpu.memory_space<vmem>>, vector<8x160xbf16>
    %c0_1 = arith.constant 0 : index
    %c0_2 = arith.constant 0 : index
    %1 = vector.load %arg3[%c0_1, %c0_2] : memref<160x128xbf16, #tpu.memory_space<vmem>>, vector<160x128xbf16>
    %cst = arith.constant dense<0.000000e+00> : vector<8x128xf32>
    %2 = tpu.matmul %0, %1, %cst {dimension_numbers = #tpu.dot_dimension_numbers<[1], [0], [0], [1], [0, 0, 1, 1], [], []>} : vector<8x160xbf16>, vector<160x128xbf16>, vector<8x128xf32> -> vector<8x128xf32>
    %c0_3 = arith.constant 0 : index
    %c0_4 = arith.constant 0 : index
    %3 = vector.load %arg4[%c0_3, %c0_4] : memref<1x128xf32, #tpu.memory_space<vmem>>, vector<1x128xf32>
    %4 = vector.broadcast %3 : vector<1x128xf32> to vector<8x128xf32>
    %5 = arith.addf %2, %4 : vector<8x128xf32>
    %cst_5 = arith.constant 0.000000e+00 : f32
    %6 = vector.broadcast %cst_5 : f32 to vector<8x128xf32>
    %7 = arith.maximumf %5, %6 : vector<8x128xf32>
    %8 = arith.truncf %7 : vector<8x128xf32> to vector<8x128xbf16>
    %c0_6 = arith.constant 0 : index
    %c0_7 = arith.constant 0 : index
    %9 = vector.load %arg5[%c0_6, %c0_7] : memref<8x128xbf16, #tpu.memory_space<vmem>>, vector<8x128xbf16>
    tpu.vector_store %arg5[%c0_6, %c0_7], %8 {strides = array<i32>} : memref<8x128xbf16, #tpu.memory_space<vmem>>, vector<8x128xbf16>,
    return
  }
  func.func @transform_0(%arg0: i32, %arg1: i32) -> (i32, i32) {
    %c0_i32 = arith.constant 0 : i32
    %c0_i32_0 = arith.constant 0 : i32
    return %arg0, %c0_i32 : i32, i32
  }
  func.func @transform_1(%arg0: i32, %arg1: i32) -> (i32, i32) {
    %c0_i32 = arith.constant 0 : i32
    %c0_i32_0 = arith.constant 0 : i32
    return %c0_i32, %arg1 : i32, i32
  }
  func.func @transform_2(%arg0: i32, %arg1: i32) -> (i32, i32) {
    %c0_i32 = arith.constant 0 : i32
    %c0_i32_0 = arith.constant 0 : i32
    return %c0_i32, %arg1 : i32, i32
  }
  func.func @transform_3(%arg0: i32, %arg1: i32) -> (i32, i32) {
    %c0_i32 = arith.constant 0 : i32
    return %arg0, %arg1 : i32, i32
  }
}

module attributes {stable_mosaic.version = 11 : i64} {
  func.func @_mm_kernel(%arg0: i32, %arg1: i32, %arg2: memref<64x16xbf16, #tpu.memory_space<vmem>>, %arg3: memref<16x128xbf16, #tpu.memory_space<vmem>>, %arg4: memref<1x128xf32, #tpu.memory_space<vmem>>, %arg5: memref<64x128xbf16, #tpu.memory_space<vmem>>) attributes {dimension_semantics = [#tpu.dimension_semantics<parallel>, #tpu.dimension_semantics<parallel>], iteration_bounds = array<i64: 1, 1>, scalar_prefetch = 0 : i64, scratch_operands = 0 : i64, tpu.core_type = #tpu.core_type<tc>, window_params = [{transform_indices = @transform_0, window_bounds = array<i64: 64, 16>}, {transform_indices = @transform_1, window_bounds = array<i64: 16, 128>}, {transform_indices = @transform_2, window_bounds = array<i64: 1, 128>}, {transform_indices = @transform_3, window_bounds = array<i64: 64, 128>}]} {
    %c0 = arith.constant 0 : index
    %c0_0 = arith.constant 0 : index
    %0 = vector.load %arg2[%c0, %c0_0] : memref<64x16xbf16, #tpu.memory_space<vmem>>, vector<64x16xbf16>
    %c0_1 = arith.constant 0 : index
    %c0_2 = arith.constant 0 : index
    %1 = vector.load %arg3[%c0_1, %c0_2] : memref<16x128xbf16, #tpu.memory_space<vmem>>, vector<16x128xbf16>
    %cst = arith.constant dense<0.000000e+00> : vector<64x128xf32>
    %2 = tpu.matmul %0, %1, %cst {dimension_numbers = #tpu.dot_dimension_numbers<[1], [0], [0], [1], [0, 0, 1, 1], [], []>} : vector<64x16xbf16>, vector<16x128xbf16>, vector<64x128xf32> -> vector<64x128xf32>
    %c0_3 = arith.constant 0 : index
    %c0_4 = arith.constant 0 : index
    %3 = vector.load %arg4[%c0_3, %c0_4] : memref<1x128xf32, #tpu.memory_space<vmem>>, vector<1x128xf32>
    %4 = vector.broadcast %3 : vector<1x128xf32> to vector<64x128xf32>
    %5 = arith.addf %2, %4 : vector<64x128xf32>
    %6 = arith.truncf %5 : vector<64x128xf32> to vector<64x128xbf16>
    %c0_5 = arith.constant 0 : index
    %c0_6 = arith.constant 0 : index
    %7 = vector.load %arg5[%c0_5, %c0_6] : memref<64x128xbf16, #tpu.memory_space<vmem>>, vector<64x128xbf16>
    tpu.vector_store %arg5[%c0_5, %c0_6], %6 {strides = array<i32>} : memref<64x128xbf16, #tpu.memory_space<vmem>>, vector<64x128xbf16>,
    return
  }
  func.func @transform_0(%arg0: i32, %arg1: i32) -> (i32, i32) {
    %c0_i32 = arith.constant 0 : i32
    %c0_i32_0 = arith.constant 0 : i32
    return %arg0, %c0_i32 : i32, i32
  }
  func.func @transform_1(%arg0: i32, %arg1: i32) -> (i32, i32) {
    %c0_i32 = arith.constant 0 : i32
    %c0_i32_0 = arith.constant 0 : i32
    return %c0_i32, %arg1 : i32, i32
  }
  func.func @transform_2(%arg0: i32, %arg1: i32) -> (i32, i32) {
    %c0_i32 = arith.constant 0 : i32
    %c0_i32_0 = arith.constant 0 : i32
    return %c0_i32, %arg1 : i32, i32
  }
  func.func @transform_3(%arg0: i32, %arg1: i32) -> (i32, i32) {
    %c0_i32 = arith.constant 0 : i32
    return %arg0, %arg1 : i32, i32
  }
}

module attributes {stable_mosaic.version = 11 : i64} {
  func.func @_mm_kernel(%arg0: i32, %arg1: i32, %arg2: memref<128x16xbf16, #tpu.memory_space<vmem>>, %arg3: memref<16x128xbf16, #tpu.memory_space<vmem>>, %arg4: memref<1x128xf32, #tpu.memory_space<vmem>>, %arg5: memref<128x128xbf16, #tpu.memory_space<vmem>>) attributes {dimension_semantics = [#tpu.dimension_semantics<parallel>, #tpu.dimension_semantics<parallel>], iteration_bounds = array<i64: 1, 1>, scalar_prefetch = 0 : i64, scratch_operands = 0 : i64, tpu.core_type = #tpu.core_type<tc>, window_params = [{transform_indices = @transform_0, window_bounds = array<i64: 128, 16>}, {transform_indices = @transform_1, window_bounds = array<i64: 16, 128>}, {transform_indices = @transform_2, window_bounds = array<i64: 1, 128>}, {transform_indices = @transform_3, window_bounds = array<i64: 128, 128>}]} {
    %c0 = arith.constant 0 : index
    %c0_0 = arith.constant 0 : index
    %0 = vector.load %arg2[%c0, %c0_0] : memref<128x16xbf16, #tpu.memory_space<vmem>>, vector<128x16xbf16>
    %c0_1 = arith.constant 0 : index
    %c0_2 = arith.constant 0 : index
    %1 = vector.load %arg3[%c0_1, %c0_2] : memref<16x128xbf16, #tpu.memory_space<vmem>>, vector<16x128xbf16>
    %cst = arith.constant dense<0.000000e+00> : vector<128x128xf32>
    %2 = tpu.matmul %0, %1, %cst {dimension_numbers = #tpu.dot_dimension_numbers<[1], [0], [0], [1], [0, 0, 1, 1], [], []>} : vector<128x16xbf16>, vector<16x128xbf16>, vector<128x128xf32> -> vector<128x128xf32>
    %c0_3 = arith.constant 0 : index
    %c0_4 = arith.constant 0 : index
    %3 = vector.load %arg4[%c0_3, %c0_4] : memref<1x128xf32, #tpu.memory_space<vmem>>, vector<1x128xf32>
    %4 = vector.broadcast %3 : vector<1x128xf32> to vector<128x128xf32>
    %5 = arith.addf %2, %4 : vector<128x128xf32>
    %cst_5 = arith.constant 0.000000e+00 : f32
    %6 = vector.broadcast %cst_5 : f32 to vector<128x128xf32>
    %7 = arith.maximumf %5, %6 : vector<128x128xf32>
    %8 = arith.truncf %7 : vector<128x128xf32> to vector<128x128xbf16>
    %c0_6 = arith.constant 0 : index
    %c0_7 = arith.constant 0 : index
    %9 = vector.load %arg5[%c0_6, %c0_7] : memref<128x128xbf16, #tpu.memory_space<vmem>>, vector<128x128xbf16>
    tpu.vector_store %arg5[%c0_6, %c0_7], %8 {strides = array<i32>} : memref<128x128xbf16, #tpu.memory_space<vmem>>, vector<128x128xbf16>,
    return
  }
  func.func @transform_0(%arg0: i32, %arg1: i32) -> (i32, i32) {
    %c0_i32 = arith.constant 0 : i32
    %c0_i32_0 = arith.constant 0 : i32
    return %arg0, %c0_i32 : i32, i32
  }
  func.func @transform_1(%arg0: i32, %arg1: i32) -> (i32, i32) {
    %c0_i32 = arith.constant 0 : i32
    %c0_i32_0 = arith.constant 0 : i32
    return %c0_i32, %arg1 : i32, i32
  }
  func.func @transform_2(%arg0: i32, %arg1: i32) -> (i32, i32) {
    %c0_i32 = arith.constant 0 : i32
    %c0_i32_0 = arith.constant 0 : i32
    return %c0_i32, %arg1 : i32, i32
  }
  func.func @transform_3(%arg0: i32, %arg1: i32) -> (i32, i32) {
    %c0_i32 = arith.constant 0 : i32
    return %arg0, %arg1 : i32, i32
  }
}

module attributes {stable_mosaic.version = 11 : i64} {
  func.func @_mm_kernel(%arg0: i32, %arg1: i32, %arg2: memref<128x368xbf16, #tpu.memory_space<vmem>>, %arg3: memref<368x128xbf16, #tpu.memory_space<vmem>>, %arg4: memref<1x128xf32, #tpu.memory_space<vmem>>, %arg5: memref<128x128xbf16, #tpu.memory_space<vmem>>) attributes {dimension_semantics = [#tpu.dimension_semantics<parallel>, #tpu.dimension_semantics<parallel>], iteration_bounds = array<i64: 1, 1>, scalar_prefetch = 0 : i64, scratch_operands = 0 : i64, tpu.core_type = #tpu.core_type<tc>, window_params = [{transform_indices = @transform_0, window_bounds = array<i64: 128, 368>}, {transform_indices = @transform_1, window_bounds = array<i64: 368, 128>}, {transform_indices = @transform_2, window_bounds = array<i64: 1, 128>}, {transform_indices = @transform_3, window_bounds = array<i64: 128, 128>}]} {
    %c0 = arith.constant 0 : index
    %c0_0 = arith.constant 0 : index
    %0 = vector.load %arg2[%c0, %c0_0] : memref<128x368xbf16, #tpu.memory_space<vmem>>, vector<128x368xbf16>
    %c0_1 = arith.constant 0 : index
    %c0_2 = arith.constant 0 : index
    %1 = vector.load %arg3[%c0_1, %c0_2] : memref<368x128xbf16, #tpu.memory_space<vmem>>, vector<368x128xbf16>
    %cst = arith.constant dense<0.000000e+00> : vector<128x128xf32>
    %2 = tpu.matmul %0, %1, %cst {dimension_numbers = #tpu.dot_dimension_numbers<[1], [0], [0], [1], [0, 0, 1, 1], [], []>} : vector<128x368xbf16>, vector<368x128xbf16>, vector<128x128xf32> -> vector<128x128xf32>
    %c0_3 = arith.constant 0 : index
    %c0_4 = arith.constant 0 : index
    %3 = vector.load %arg4[%c0_3, %c0_4] : memref<1x128xf32, #tpu.memory_space<vmem>>, vector<1x128xf32>
    %4 = vector.broadcast %3 : vector<1x128xf32> to vector<128x128xf32>
    %5 = arith.addf %2, %4 : vector<128x128xf32>
    %cst_5 = arith.constant 0.000000e+00 : f32
    %6 = vector.broadcast %cst_5 : f32 to vector<128x128xf32>
    %7 = arith.maximumf %5, %6 : vector<128x128xf32>
    %8 = arith.truncf %7 : vector<128x128xf32> to vector<128x128xbf16>
    %c0_6 = arith.constant 0 : index
    %c0_7 = arith.constant 0 : index
    %9 = vector.load %arg5[%c0_6, %c0_7] : memref<128x128xbf16, #tpu.memory_space<vmem>>, vector<128x128xbf16>
    tpu.vector_store %arg5[%c0_6, %c0_7], %8 {strides = array<i32>} : memref<128x128xbf16, #tpu.memory_space<vmem>>, vector<128x128xbf16>,
    return
  }
  func.func @transform_0(%arg0: i32, %arg1: i32) -> (i32, i32) {
    %c0_i32 = arith.constant 0 : i32
    %c0_i32_0 = arith.constant 0 : i32
    return %arg0, %c0_i32 : i32, i32
  }
  func.func @transform_1(%arg0: i32, %arg1: i32) -> (i32, i32) {
    %c0_i32 = arith.constant 0 : i32
    %c0_i32_0 = arith.constant 0 : i32
    return %c0_i32, %arg1 : i32, i32
  }
  func.func @transform_2(%arg0: i32, %arg1: i32) -> (i32, i32) {
    %c0_i32 = arith.constant 0 : i32
    %c0_i32_0 = arith.constant 0 : i32
    return %c0_i32, %arg1 : i32, i32
  }
  func.func @transform_3(%arg0: i32, %arg1: i32) -> (i32, i32) {
    %c0_i32 = arith.constant 0 : i32
    return %arg0, %arg1 : i32, i32
  }
}

module attributes {stable_mosaic.version = 11 : i64} {
  func.func @_mm_kernel(%arg0: i32, %arg1: i32, %arg2: memref<128x288xbf16, #tpu.memory_space<vmem>>, %arg3: memref<288x128xbf16, #tpu.memory_space<vmem>>, %arg4: memref<1x128xf32, #tpu.memory_space<vmem>>, %arg5: memref<128x128xbf16, #tpu.memory_space<vmem>>) attributes {dimension_semantics = [#tpu.dimension_semantics<parallel>, #tpu.dimension_semantics<parallel>], iteration_bounds = array<i64: 1, 1>, scalar_prefetch = 0 : i64, scratch_operands = 0 : i64, tpu.core_type = #tpu.core_type<tc>, window_params = [{transform_indices = @transform_0, window_bounds = array<i64: 128, 288>}, {transform_indices = @transform_1, window_bounds = array<i64: 288, 128>}, {transform_indices = @transform_2, window_bounds = array<i64: 1, 128>}, {transform_indices = @transform_3, window_bounds = array<i64: 128, 128>}]} {
    %c0 = arith.constant 0 : index
    %c0_0 = arith.constant 0 : index
    %0 = vector.load %arg2[%c0, %c0_0] : memref<128x288xbf16, #tpu.memory_space<vmem>>, vector<128x288xbf16>
    %c0_1 = arith.constant 0 : index
    %c0_2 = arith.constant 0 : index
    %1 = vector.load %arg3[%c0_1, %c0_2] : memref<288x128xbf16, #tpu.memory_space<vmem>>, vector<288x128xbf16>
    %cst = arith.constant dense<0.000000e+00> : vector<128x128xf32>
    %2 = tpu.matmul %0, %1, %cst {dimension_numbers = #tpu.dot_dimension_numbers<[1], [0], [0], [1], [0, 0, 1, 1], [], []>} : vector<128x288xbf16>, vector<288x128xbf16>, vector<128x128xf32> -> vector<128x128xf32>
    %c0_3 = arith.constant 0 : index
    %c0_4 = arith.constant 0 : index
    %3 = vector.load %arg4[%c0_3, %c0_4] : memref<1x128xf32, #tpu.memory_space<vmem>>, vector<1x128xf32>
    %4 = vector.broadcast %3 : vector<1x128xf32> to vector<128x128xf32>
    %5 = arith.addf %2, %4 : vector<128x128xf32>
    %cst_5 = arith.constant 0.000000e+00 : f32
    %6 = vector.broadcast %cst_5 : f32 to vector<128x128xf32>
    %7 = arith.maximumf %5, %6 : vector<128x128xf32>
    %8 = arith.truncf %7 : vector<128x128xf32> to vector<128x128xbf16>
    %c0_6 = arith.constant 0 : index
    %c0_7 = arith.constant 0 : index
    %9 = vector.load %arg5[%c0_6, %c0_7] : memref<128x128xbf16, #tpu.memory_space<vmem>>, vector<128x128xbf16>
    tpu.vector_store %arg5[%c0_6, %c0_7], %8 {strides = array<i32>} : memref<128x128xbf16, #tpu.memory_space<vmem>>, vector<128x128xbf16>,
    return
  }
  func.func @transform_0(%arg0: i32, %arg1: i32) -> (i32, i32) {
    %c0_i32 = arith.constant 0 : i32
    %c0_i32_0 = arith.constant 0 : i32
    return %arg0, %c0_i32 : i32, i32
  }
  func.func @transform_1(%arg0: i32, %arg1: i32) -> (i32, i32) {
    %c0_i32 = arith.constant 0 : i32
    %c0_i32_0 = arith.constant 0 : i32
    return %c0_i32, %arg1 : i32, i32
  }
  func.func @transform_2(%arg0: i32, %arg1: i32) -> (i32, i32) {
    %c0_i32 = arith.constant 0 : i32
    %c0_i32_0 = arith.constant 0 : i32
    return %c0_i32, %arg1 : i32, i32
  }
  func.func @transform_3(%arg0: i32, %arg1: i32) -> (i32, i32) {
    %c0_i32 = arith.constant 0 : i32
    return %arg0, %arg1 : i32, i32
  }
}

module attributes {stable_mosaic.version = 11 : i64} {
  func.func @_mm_kernel(%arg0: i32, %arg1: i32, %arg2: memref<128x32xbf16, #tpu.memory_space<vmem>>, %arg3: memref<32x128xbf16, #tpu.memory_space<vmem>>, %arg4: memref<1x128xf32, #tpu.memory_space<vmem>>, %arg5: memref<128x128xbf16, #tpu.memory_space<vmem>>) attributes {dimension_semantics = [#tpu.dimension_semantics<parallel>, #tpu.dimension_semantics<parallel>], iteration_bounds = array<i64: 1, 1>, scalar_prefetch = 0 : i64, scratch_operands = 0 : i64, tpu.core_type = #tpu.core_type<tc>, window_params = [{transform_indices = @transform_0, window_bounds = array<i64: 128, 32>}, {transform_indices = @transform_1, window_bounds = array<i64: 32, 128>}, {transform_indices = @transform_2, window_bounds = array<i64: 1, 128>}, {transform_indices = @transform_3, window_bounds = array<i64: 128, 128>}]} {
    %c0 = arith.constant 0 : index
    %c0_0 = arith.constant 0 : index
    %0 = vector.load %arg2[%c0, %c0_0] : memref<128x32xbf16, #tpu.memory_space<vmem>>, vector<128x32xbf16>
    %c0_1 = arith.constant 0 : index
    %c0_2 = arith.constant 0 : index
    %1 = vector.load %arg3[%c0_1, %c0_2] : memref<32x128xbf16, #tpu.memory_space<vmem>>, vector<32x128xbf16>
    %cst = arith.constant dense<0.000000e+00> : vector<128x128xf32>
    %2 = tpu.matmul %0, %1, %cst {dimension_numbers = #tpu.dot_dimension_numbers<[1], [0], [0], [1], [0, 0, 1, 1], [], []>} : vector<128x32xbf16>, vector<32x128xbf16>, vector<128x128xf32> -> vector<128x128xf32>
    %c0_3 = arith.constant 0 : index
    %c0_4 = arith.constant 0 : index
    %3 = vector.load %arg4[%c0_3, %c0_4] : memref<1x128xf32, #tpu.memory_space<vmem>>, vector<1x128xf32>
    %4 = vector.broadcast %3 : vector<1x128xf32> to vector<128x128xf32>
    %5 = arith.addf %2, %4 : vector<128x128xf32>
    %6 = arith.truncf %5 : vector<128x128xf32> to vector<128x128xbf16>
    %c0_5 = arith.constant 0 : index
    %c0_6 = arith.constant 0 : index
    %7 = vector.load %arg5[%c0_5, %c0_6] : memref<128x128xbf16, #tpu.memory_space<vmem>>, vector<128x128xbf16>
    tpu.vector_store %arg5[%c0_5, %c0_6], %6 {strides = array<i32>} : memref<128x128xbf16, #tpu.memory_space<vmem>>, vector<128x128xbf16>,
    return
  }
  func.func @transform_0(%arg0: i32, %arg1: i32) -> (i32, i32) {
    %c0_i32 = arith.constant 0 : i32
    %c0_i32_0 = arith.constant 0 : i32
    return %arg0, %c0_i32 : i32, i32
  }
  func.func @transform_1(%arg0: i32, %arg1: i32) -> (i32, i32) {
    %c0_i32 = arith.constant 0 : i32
    %c0_i32_0 = arith.constant 0 : i32
    return %c0_i32, %arg1 : i32, i32
  }
  func.func @transform_2(%arg0: i32, %arg1: i32) -> (i32, i32) {
    %c0_i32 = arith.constant 0 : i32
    %c0_i32_0 = arith.constant 0 : i32
    return %c0_i32, %arg1 : i32, i32
  }
  func.func @transform_3(%arg0: i32, %arg1: i32) -> (i32, i32) {
    %c0_i32 = arith.constant 0 : i32
    return %arg0, %arg1 : i32, i32
  }
}

module attributes {stable_mosaic.version = 11 : i64} {
  func.func @_resize_heads_kernel(%arg0: memref<16x64xbf16, #tpu.memory_space<vmem>>, %arg1: memref<64x1024xbf16, #tpu.memory_space<vmem>>, %arg2: memref<16x1024xf32, #tpu.memory_space<vmem>>, %arg3: memref<16x1024xf32, #tpu.memory_space<vmem>>, %arg4: memref<16x1024xf32, #tpu.memory_space<vmem>>) attributes {dimension_semantics = [], scalar_prefetch = 0 : i64, scratch_operands = 0 : i64, tpu.core_type = #tpu.core_type<tc>} {
    %c0 = arith.constant 0 : index
    %c0_0 = arith.constant 0 : index
    %0 = vector.load %arg0[%c0, %c0_0] : memref<16x64xbf16, #tpu.memory_space<vmem>>, vector<16x64xbf16>
    %c0_1 = arith.constant 0 : index
    %c0_2 = arith.constant 0 : index
    %1 = vector.load %arg1[%c0_1, %c0_2] : memref<64x1024xbf16, #tpu.memory_space<vmem>>, vector<64x1024xbf16>
    %cst = arith.constant dense<0.000000e+00> : vector<16x1024xf32>
    %2 = tpu.matmul %0, %1, %cst {dimension_numbers = #tpu.dot_dimension_numbers<[1], [0], [0], [1], [0, 0, 1, 1], [], []>} : vector<16x64xbf16>, vector<64x1024xbf16>, vector<16x1024xf32> -> vector<16x1024xf32>
    %c0_3 = arith.constant 0 : index
    %c0_4 = arith.constant 0 : index
    %3 = vector.load %arg2[%c0_3, %c0_4] : memref<16x1024xf32, #tpu.memory_space<vmem>>, vector<16x1024xf32>
    tpu.vector_store %arg2[%c0_3, %c0_4], %2 {strides = array<i32>} : memref<16x1024xf32, #tpu.memory_space<vmem>>, vector<16x1024xf32>,
    %4 = math.tanh %2 : vector<16x1024xf32>
    %c0_5 = arith.constant 0 : index
    %c0_6 = arith.constant 0 : index
    %5 = vector.load %arg3[%c0_5, %c0_6] : memref<16x1024xf32, #tpu.memory_space<vmem>>, vector<16x1024xf32>
    tpu.vector_store %arg3[%c0_5, %c0_6], %4 {strides = array<i32>} : memref<16x1024xf32, #tpu.memory_space<vmem>>, vector<16x1024xf32>,
    %cst_7 = arith.constant 5.000000e-01 : f32
    %6 = vector.broadcast %cst_7 : f32 to vector<16x1024xf32>
    %7 = arith.mulf %6, %2 : vector<16x1024xf32>
    %8 = math.tanh %7 : vector<16x1024xf32>
    %cst_8 = arith.constant 1.000000e+00 : f32
    %9 = vector.broadcast %cst_8 : f32 to vector<16x1024xf32>
    %10 = arith.addf %8, %9 : vector<16x1024xf32>
    %cst_9 = arith.constant 5.000000e-01 : f32
    %11 = vector.broadcast %cst_9 : f32 to vector<16x1024xf32>
    %12 = arith.mulf %11, %10 : vector<16x1024xf32>
    %c0_10 = arith.constant 0 : index
    %c0_11 = arith.constant 0 : index
    %13 = vector.load %arg4[%c0_10, %c0_11] : memref<16x1024xf32, #tpu.memory_space<vmem>>, vector<16x1024xf32>
    tpu.vector_store %arg4[%c0_10, %c0_11], %12 {strides = array<i32>} : memref<16x1024xf32, #tpu.memory_space<vmem>>, vector<16x1024xf32>,
    return
  }
}

</mosaic_0001>

<llo_original>
// kernel: deeplab_forward.17
$region0: #{deeplab_forward.17}
  #allocation0 [shape = 'u32[]', space=smem, size = 0x4, offset = 0x4, fixed_abs, tag = 'smem constant byte address 0x4 - core index']
  #allocation1 [shape = 'u32[144,128]{1,0:T(1,128)}', space=vmem, size = 0x12000, scoped, tag = 'internal scratch']
  %s0 = inlined_call_operand.vmem [shape: bf16[512,16], index: 0, kind: input, shape index: {}]
  %s1 = inlined_call_operand.vmem [shape: bf16[16,128], index: 1, kind: input, shape index: {}]
  %s2 = inlined_call_operand.vmem [shape: f32[1,128], index: 2, kind: input, shape index: {}]
  %s3 = inlined_call_operand.vmem [shape: bf16[512,128], index: 3, kind: output, shape index: {}]
  %s4 = sld [smem:[#allocation0]]
  $region45: #{deeplab_forward.17} parent=0
    _
  %s6 = ssub.s32 1, %s4
  %s7 = scalar_select 0, %s6, %s4
  loop: start=0, step=1, limit=6
  $region2: #{deeplab_forward.17} parent=0 // loop_pre_header
    _
  $region3: #{deeplab_forward.17} parent=0 // loop_header
    %s9 = sphi 0, %s13
    %p10 = scmp.ge.s32.totalorder %s9, 6
    %s16 = sphi 0, %s28
    %s17 = sphi 0, %s24
    %s18 = sphi 0, %s16
    %s19 = sphi 0, %s17
    %s20 = sphi 0, %s18
    %s21 = sphi 0, %s19
    %s31 = sphi 0, %s33
    %s34 = sphi 0, %s31
    %s35 = sphi 0, %s34
    %s51 = sphi 0, %s35
    %s57 = sphi 0, %s59
    %s60 = sphi 0, %s57
    %s61 = sphi 0, %s60
    %s77 = sphi 0, %s61
    %s83 = sphi 0, %s85
    %s86 = sphi 0, %s83
    %s87 = sphi 0, %s86
    %s103 = sphi 0, %s87
    %s111 = sphi 0, %s113
    %s114 = sphi 0, %s111
    %s115 = sphi 0, %s114
    %s131 = sphi 0, %s115
  $region4: #{deeplab_forward.17} parent=0 // loop_header_branch
    %12 = sbr.rel (%p10) target = $region8
  $region5: #{deeplab_forward.17} parent=0 // loop_body
    %s14 = ssub.s32 %s9, 1
    %s15 = ssub.s32 %s9, 2
    %s22 = sadd.s32 1, %s17
    %p23 = scmp.ge.s32.totalorder %s22, 1
    %s24 = scalar_select %p23, 0, %s22
    %s25 = sadd.s32 1, %s16
    %s26 = scalar_select %p23, %s25, %s16
    %p27 = scmp.ge.s32.totalorder %s26, 4
    %s28 = scalar_select %p27, 0, %s26
    %s29 = ssub.s32 %s16, %s28
    %p30 = scmp.eq.s32.totalorder %s29, 0
    %s32 = sadd.s32 %s31, 1
    %s33 = scalar_select %p30, %s31, %s32
    %p36 = pneg %p30
    %p37 = scmp.eq.s32.totalorder %s9, 3
    %p38 = por %p36, %p37
    %p39 = scmp.ne.s32.totalorder %s31, %s34
    %p40 = scmp.eq.s32.totalorder %s9, 0
    %p41 = por %p39, %p40
    %p42 = scmp.ne.s32.totalorder %s31, %s34
    %p43 = scmp.eq.s32.totalorder %s14, 3
    %p44 = por %p42, %p43
    %p45 = scmp.ne.s32.totalorder %s34, %s35
    %p46 = scmp.eq.s32.totalorder %s14, 0
    %p47 = por %p45, %p46
    %p48 = scmp.ne.s32.totalorder %s34, %s35
    %p49 = scmp.eq.s32.totalorder %s15, 3
    %p50 = por %p48, %p49
    %p52 = scmp.ne.s32.totalorder %s35, %s51
    %p53 = scmp.eq.s32.totalorder %s15, 0
    %p54 = por %p52, %p53
    %s55 = ssub.s32 %s17, %s24
    %p56 = scmp.eq.s32.totalorder %s55, 0
    %s58 = sadd.s32 %s57, 1
    %s59 = scalar_select %p56, %s57, %s58
    %p62 = pneg %p56
    %p63 = scmp.eq.s32.totalorder %s9, 3
    %p64 = por %p62, %p63
    %p65 = scmp.ne.s32.totalorder %s57, %s60
    %p66 = scmp.eq.s32.totalorder %s9, 0
    %p67 = por %p65, %p66
    %p68 = scmp.ne.s32.totalorder %s57, %s60
    %p69 = scmp.eq.s32.totalorder %s14, 3
    %p70 = por %p68, %p69
    %p71 = scmp.ne.s32.totalorder %s60, %s61
    %p72 = scmp.eq.s32.totalorder %s14, 0
    %p73 = por %p71, %p72
    %p74 = scmp.ne.s32.totalorder %s60, %s61
    %p75 = scmp.eq.s32.totalorder %s15, 3
    %p76 = por %p74, %p75
    %p78 = scmp.ne.s32.totalorder %s61, %s77
    %p79 = scmp.eq.s32.totalorder %s15, 0
    %p80 = por %p78, %p79
    %s81 = ssub.s32 %s17, %s24
    %p82 = scmp.eq.s32.totalorder %s81, 0
    %s84 = sadd.s32 %s83, 1
    %s85 = scalar_select %p82, %s83, %s84
    %p88 = pneg %p82
    %p89 = scmp.eq.s32.totalorder %s9, 3
    %p90 = por %p88, %p89
    %p91 = scmp.ne.s32.totalorder %s83, %s86
    %p92 = scmp.eq.s32.totalorder %s9, 0
    %p93 = por %p91, %p92
    %p94 = scmp.ne.s32.totalorder %s83, %s86
    %p95 = scmp.eq.s32.totalorder %s14, 3
    %p96 = por %p94, %p95
    %p97 = scmp.ne.s32.totalorder %s86, %s87
    %p98 = scmp.eq.s32.totalorder %s14, 0
    %p99 = por %p97, %p98
    %p100 = scmp.ne.s32.totalorder %s86, %s87
    %p101 = scmp.eq.s32.totalorder %s15, 3
    %p102 = por %p100, %p101
    %p104 = scmp.ne.s32.totalorder %s87, %s103
    %p105 = scmp.eq.s32.totalorder %s15, 0
    %p106 = por %p104, %p105
    %s107 = ssub.s32 %s16, %s28
    %s108 = ssub.s32 %s17, %s24
    %s109 = sor.u32 %s107, %s108
    %p110 = scmp.eq.s32.totalorder %s109, 0
    %s112 = sadd.s32 %s111, 1
    %s113 = scalar_select %p110, %s111, %s112
    %p116 = pneg %p110
    %p117 = scmp.eq.s32.totalorder %s9, 3
    %p118 = por %p116, %p117
    %p119 = scmp.ne.s32.totalorder %s111, %s114
    %p120 = scmp.eq.s32.totalorder %s9, 0
    %p121 = por %p119, %p120
    %p122 = scmp.ne.s32.totalorder %s111, %s114
    %p123 = scmp.eq.s32.totalorder %s14, 3
    %p124 = por %p122, %p123
    %p125 = scmp.ne.s32.totalorder %s114, %s115
    %p126 = scmp.eq.s32.totalorder %s14, 0
    %p127 = por %p125, %p126
    %p128 = scmp.ne.s32.totalorder %s114, %s115
    %p129 = scmp.eq.s32.totalorder %s15, 3
    %p130 = por %p128, %p129
    %p132 = scmp.ne.s32.totalorder %s115, %s131
    %p133 = scmp.eq.s32.totalorder %s15, 0
    %p134 = por %p132, %p133
    %p135 = scmp.le.s32.totalorder 1, %s9
    %p136 = scmp.lt.s32.totalorder %s9, 5
    %p137 = pnand %p135, %p136
    %p138 = pneg %p137
    // Predicated region
    $region9: #{deeplab_forward.17} parent=5 // pred_check
      _
    $region10: #{deeplab_forward.17} parent=5 // pred_check_branch
      %140 = sbr.rel (%p137) target = $region12
    $region11: #{deeplab_forward.17} parent=5 // pred_region
      %s141 = ssub.s32 %s9, 1
      // Predicated region
      $region13: #{deeplab_forward.17} parent=11 // pred_check
        %p142 = pneg %p73
      $region14: #{deeplab_forward.17} parent=11 // pred_check_branch
        %144 = sbr.rel (%p142) target = $region16
      $region15: #{deeplab_forward.17} parent=11 // pred_region
        %p145 = scmp.lt.s32.totalorder %s19, 0
        %s146 = scalar_select %p145, %s19, 0
        %s147 = smul.addr %s146, 4
        %s148 = scalar_lea.vmem %s1, %s147
      $region16: #{deeplab_forward.17} parent=11 // pred_fallthru
        _
      // Predicated region
      $region17: #{deeplab_forward.17} parent=11 // pred_check
        %p149 = pneg %p99
      $region18: #{deeplab_forward.17} parent=11 // pred_check_branch
        %151 = sbr.rel (%p149) target = $region20
      $region19: #{deeplab_forward.17} parent=11 // pred_region
        %p152 = scmp.lt.s32.totalorder %s19, 0
        %s153 = scalar_select %p152, %s19, 0
        %s154 = scalar_lea.vmem %s2, %s153
      $region20: #{deeplab_forward.17} parent=11 // pred_fallthru
        _
    $region12: #{deeplab_forward.17} parent=5 // pred_fallthru
      _
    %p155 = scmp.lt.s32.totalorder %s9, 4
    // Predicated region
    $region21: #{deeplab_forward.17} parent=5 // pred_check
      %p156 = pneg %p155
    $region22: #{deeplab_forward.17} parent=5 // pred_check_branch
      %158 = sbr.rel (%p156) target = $region24
    $region23: #{deeplab_forward.17} parent=5 // pred_region
      // Predicated region
      $region25: #{deeplab_forward.17} parent=23 // pred_check
        %p159 = pneg %p41
      $region26: #{deeplab_forward.17} parent=23 // pred_check_branch
        %161 = sbr.rel (%p159) target = $region28
      $region27: #{deeplab_forward.17} parent=23 // pred_region
        %s162 = smul.u32 16, %s16
        %p163 = scmp.lt.s32.totalorder %s162, 63
        %s164 = scalar_select %p163, %s162, 63
        %s165 = smul.addr %s164, 4
        %s166 = scalar_lea.vmem %s0, %s165
        %s167 = smul.u32 16, %s16
      $region28: #{deeplab_forward.17} parent=23 // pred_fallthru
        _
    $region24: #{deeplab_forward.17} parent=5 // pred_fallthru
      _
    %p168 = scmp.le.s32.totalorder 1, %s9
    %p169 = scmp.lt.s32.totalorder %s9, 5
    %p170 = pnand %p168, %p169
    %p171 = pneg %p170
    // Predicated region
    $region29: #{deeplab_forward.17} parent=5 // pred_check
      _
    $region30: #{deeplab_forward.17} parent=5 // pred_check_branch
      %173 = sbr.rel (%p170) target = $region32
    $region31: #{deeplab_forward.17} parent=5 // pred_region
      %s174 = ssub.s32 %s9, 1
      %s175 = smul.u32 16, %s18
      %p176 = scmp.lt.s32.totalorder %s175, 63
      %s177 = scalar_select %p176, %s175, 63
      %s178 = smul.addr %s177, 4
      %s179 = scalar_lea.vmem %s0, %s178
      %p180 = pneg %p47
      %p181 = pneg %p44
      %p182 = scmp.lt.s32.totalorder %s19, 0
      %s183 = scalar_select %p182, %s19, 0
      %s184 = smul.addr %s183, 4
      %s185 = scalar_lea.vmem %s1, %s184
      %p186 = pneg %p73
      %p187 = pneg %p70
      %p188 = scmp.lt.s32.totalorder %s19, 0
      %s189 = scalar_select %p188, %s19, 0
      %s190 = scalar_lea.vmem %s2, %s189
      %p191 = pneg %p99
      %p192 = pneg %p96
      %p193 = pneg %p127
      %p194 = pneg %p124
      %s195 = smul.u32 16, %s18
      %p196 = scmp.lt.s32.totalorder %s195, 63
      %s197 = scalar_select %p196, %s195, 63
      %p198 = scmp.lt.s32.totalorder %s19, 0
      %s199 = scalar_select %p198, %s19, 0
      %s200 = sadd.s32 %s199, %s197
      %s201 = smul.addr %s200, 4
      %s202 = scalar_lea.vmem %s3, %s201
      %s203 = smul.u32 16, %s18
      %p204 = scmp.lt.s32.totalorder %s203, 63
      %s205 = scalar_select %p204, %s203, 63
      %s206 = smul.addr %s205, 4
      %s207 = scalar_lea.vmem %s0, %s206
      %s208 = smul.u32 16, %s18
      %p209 = scmp.lt.s32.totalorder %s19, 0
      %s210 = scalar_select %p209, %s19, 0
      %s211 = smul.addr %s210, 4
      %s212 = scalar_lea.vmem %s1, %s211
      %p213 = scmp.lt.s32.totalorder %s19, 0
      %s214 = scalar_select %p213, %s19, 0
      %s215 = scalar_lea.vmem %s2, %s214
      %s216 = smul.u32 16, %s18
      %p217 = scmp.lt.s32.totalorder %s216, 63
      %s218 = scalar_select %p217, %s216, 63
      %p219 = scmp.lt.s32.totalorder %s19, 0
      %s220 = scalar_select %p219, %s19, 0
      %s221 = sadd.s32 %s220, %s218
      %s222 = smul.addr %s221, 4
      %s223 = scalar_lea.vmem %s3, %s222
      %s224 = smul.u32 16, %s18
      %v226 = vld [vmem:[%s207] sm:$0xf]
      %v227 = vld [vmem:[%s207 + $0x4] sm:$0xf]
      %v228 = vld [vmem:[%s207 + $0x8] sm:$0xf]
      %v229 = vld [vmem:[%s207 + $0xc] sm:$0xf]
      %v230 = vld [vmem:[%s207 + $0x10] sm:$0xf]
      %v231 = vld [vmem:[%s207 + $0x14] sm:$0xf]
      %v232 = vld [vmem:[%s207 + $0x18] sm:$0xf]
      %v233 = vld [vmem:[%s207 + $0x1c] sm:$0xf]
      %v234 = vld [vmem:[%s207 + $0x20] sm:$0xf]
      %v235 = vld [vmem:[%s207 + $0x24] sm:$0xf]
      %v236 = vld [vmem:[%s207 + $0x28] sm:$0xf]
      %v237 = vld [vmem:[%s207 + $0x2c] sm:$0xf]
      %v238 = vld [vmem:[%s207 + $0x30] sm:$0xf]
      %v239 = vld [vmem:[%s207 + $0x34] sm:$0xf]
      %v240 = vld [vmem:[%s207 + $0x38] sm:$0xf]
      %v241 = vld [vmem:[%s207 + $0x3c] sm:$0xf]
      %v242 = vld [vmem:[%s212] sm:$0xf]
      %v243 = vld [vmem:[%s212 + $0x4] sm:$0xf]
      %v244 = vld [vmem:[%s215] sm:$0x1]
      %v246 = vlaneseq
      %v247 = vshrl.u32 %v246, 7
      %v248 = vsub.s32 0, %v247
      %v249 = vrot.slane %v244, %v248
      %v267 = vunpack.c.l.b16 %v226
      %v268 = vunpack.c.l.b16 %v227
      %v269 = vunpack.c.l.b16 %v228
      %v270 = vunpack.c.l.b16 %v229
      %v271 = vunpack.c.l.b16 %v230
      %v272 = vunpack.c.l.b16 %v231
      %v273 = vunpack.c.l.b16 %v232
      %v274 = vunpack.c.l.b16 %v233
      %v275 = vunpack.c.l.b16 %v234
      %v276 = vunpack.c.l.b16 %v235
      %v277 = vunpack.c.l.b16 %v236
      %v278 = vunpack.c.l.b16 %v237
      %v279 = vunpack.c.l.b16 %v238
      %v280 = vunpack.c.l.b16 %v239
      %v281 = vunpack.c.l.b16 %v240
      %v282 = vunpack.c.l.b16 %v241
      %v283 = vpack.c.b16 %v268, %v267
      %v284 = vpack.c.b16 %v270, %v269
      %v285 = vpack.c.b16 %v272, %v271
      %v286 = vpack.c.b16 %v274, %v273
      %v287 = vpack.c.b16 %v276, %v275
      %v288 = vpack.c.b16 %v278, %v277
      %v289 = vpack.c.b16 %v280, %v279
      %v290 = vpack.c.b16 %v282, %v281
      %v293 = vunpack.c.l.b16 %v242
      %v294 = vunpack.c.l.b16 %v243
      %v295 = vpack.c.b16 %v294, %v293
      %vm297 = vcmask 130048
      %v299 = vsel %vm297, %v283, 0
      %v302 = vsel %vm297, %v284, 0
      %v305 = vsel %vm297, %v285, 0
      %v308 = vsel %vm297, %v286, 0
      %v311 = vsel %vm297, %v287, 0
      %v314 = vsel %vm297, %v288, 0
      %v317 = vsel %vm297, %v289, 0
      %v320 = vsel %vm297, %v290, 0
      %322 = vmatprep.subr.bf16.mxu0 0
      %323 = vmatpush1.bf16.msra.mxu0 0
      %324 = vmatprep.subr.bf16.mxu0 0
      %325 = vmatpush1.bf16.msra.mxu0 0
      %326 = vmatprep.subr.bf16.mxu0 0
      %327 = vmatpush1.bf16.msra.mxu0 0
      %328 = vmatprep.subr.bf16.mxu0 0
      %329 = vmatpush1.bf16.msra.mxu0 0
      %330 = vmatprep.subr.bf16.mxu0 0
      %331 = vmatpush1.bf16.msra.mxu0 0
      %332 = vmatprep.subr.bf16.mxu0 0
      %333 = vmatpush1.bf16.msra.mxu0 0
      %334 = vmatprep.subr.bf16.mxu0 0
      %335 = vmatpush1.bf16.msra.mxu0 0
      %336 = vmatprep.subr.bf16.mxu0 0
      %337 = vmatpush1.bf16.msra.mxu0 %v295
      %338 = vmatprep.subr.bf16.mxu0 0
      %339 = vmatpush2.bf16.msra.mxu0 0
      %340 = vmatprep.subr.bf16.mxu0 0
      %341 = vmatpush2.bf16.msra.mxu0 0
      %342 = vmatprep.subr.bf16.mxu0 0
      %343 = vmatpush2.bf16.msra.mxu0 0
      %344 = vmatprep.subr.bf16.mxu0 0
      %345 = vmatpush2.bf16.msra.mxu0 0
      %346 = vmatprep.subr.bf16.mxu0 0
      %347 = vmatpush2.bf16.msra.mxu0 0
      %348 = vmatprep.subr.bf16.mxu0 0
      %349 = vmatpush2.bf16.msra.mxu0 0
      %350 = vmatprep.subr.bf16.mxu0 0
      %351 = vmatpush2.bf16.msra.mxu0 0
      %352 = vmatprep.subr.bf16.mxu0 0
      %353 = vmatpush2.bf16.msra.mxu0 0
      %354 = vmatprep.mubr.bf16.mxu0 0
      %355 = vmatmul.mubr.bf16.gmra.mxu0 %v299
      %v356 = vpop.f32.mrf.mxu0
      %v357 = vadd.f32 %v249, %v356
      %v358 = vpop.f32.mrf.mxu0
      %v359 = vpop.f32.mrf.mxu0
      %v360 = vadd.f32 %v249, %v359
      %v361 = vpop.f32.mrf.mxu0
      %362 = vmatprep.mubr.bf16.mxu0 0
      %363 = vmatmul.mubr.bf16.gmra.mxu0 %v302
      %v364 = vpop.f32.mrf.mxu0
      %v365 = vadd.f32 %v249, %v364
      %v366 = vpop.f32.mrf.mxu0
      %v367 = vpop.f32.mrf.mxu0
      %v368 = vadd.f32 %v249, %v367
      %v369 = vpop.f32.mrf.mxu0
      %370 = vmatprep.mubr.bf16.mxu0 0
      %371 = vmatmul.mubr.bf16.gmra.mxu0 %v305
      %v372 = vpop.f32.mrf.mxu0
      %v373 = vadd.f32 %v249, %v372
      %v374 = vpop.f32.mrf.mxu0
      %v375 = vpop.f32.mrf.mxu0
      %v376 = vadd.f32 %v249, %v375
      %v377 = vpop.f32.mrf.mxu0
      %378 = vmatprep.mubr.bf16.mxu0 0
      %379 = vmatmul.mubr.bf16.gmra.mxu0 %v308
      %v380 = vpop.f32.mrf.mxu0
      %v381 = vadd.f32 %v249, %v380
      %v382 = vpop.f32.mrf.mxu0
      %v383 = vpop.f32.mrf.mxu0
      %v384 = vadd.f32 %v249, %v383
      %v385 = vpop.f32.mrf.mxu0
      %386 = vmatprep.mubr.bf16.mxu0 0
      %387 = vmatmul.mubr.bf16.gmra.mxu0 %v311
      %v388 = vpop.f32.mrf.mxu0
      %v389 = vadd.f32 %v249, %v388
      %v390 = vpop.f32.mrf.mxu0
      %v391 = vpop.f32.mrf.mxu0
      %v392 = vadd.f32 %v249, %v391
      %v393 = vpop.f32.mrf.mxu0
      %394 = vmatprep.mubr.bf16.mxu0 0
      %395 = vmatmul.mubr.bf16.gmra.mxu0 %v314
      %v396 = vpop.f32.mrf.mxu0
      %v397 = vadd.f32 %v249, %v396
      %v398 = vpop.f32.mrf.mxu0
      %v399 = vpop.f32.mrf.mxu0
      %v400 = vadd.f32 %v249, %v399
      %v401 = vpop.f32.mrf.mxu0
      %402 = vmatprep.mubr.bf16.mxu0 0
      %403 = vmatmul.mubr.bf16.gmra.mxu0 %v317
      %v404 = vpop.f32.mrf.mxu0
      %v405 = vadd.f32 %v249, %v404
      %v406 = vpop.f32.mrf.mxu0
      %v407 = vpop.f32.mrf.mxu0
      %v408 = vadd.f32 %v249, %v407
      %v409 = vpop.f32.mrf.mxu0
      %410 = vmatprep.mubr.bf16.mxu0 0
      %411 = vmatmul.mubr.bf16.gmra.mxu0 %v320
      %v412 = vpop.f32.mrf.mxu0
      %v413 = vadd.f32 %v249, %v412
      %v414 = vpop.f32.mrf.mxu0
      %v415 = vpop.f32.mrf.mxu0
      %v416 = vadd.f32 %v249, %v415
      %v417 = vpop.f32.mrf.mxu0
      %418 = vdwg.mxu0
      %v419 = vmax.f32 %v357, 0.0
      %v420 = vmax.f32 %v360, 0.0
      %v421 = vmax.f32 %v365, 0.0
      %v422 = vmax.f32 %v368, 0.0
      %v423 = vmax.f32 %v373, 0.0
      %v424 = vmax.f32 %v376, 0.0
      %v425 = vmax.f32 %v381, 0.0
      %v426 = vmax.f32 %v384, 0.0
      %v427 = vmax.f32 %v389, 0.0
      %v428 = vmax.f32 %v392, 0.0
      %v429 = vmax.f32 %v397, 0.0
      %v430 = vmax.f32 %v400, 0.0
      %v431 = vmax.f32 %v405, 0.0
      %v432 = vmax.f32 %v408, 0.0
      %v433 = vmax.f32 %v413, 0.0
      %v434 = vmax.f32 %v416, 0.0
      %v435 = vpack.c.bf16 %v420, %v419
      %v436 = vpack.c.bf16 %v422, %v421
      %v437 = vpack.c.bf16 %v424, %v423
      %v438 = vpack.c.bf16 %v426, %v425
      %v439 = vpack.c.bf16 %v428, %v427
      %v440 = vpack.c.bf16 %v430, %v429
      %v441 = vpack.c.bf16 %v432, %v431
      %v442 = vpack.c.bf16 %v434, %v433
      %v451 = vunpack.c.l.b16 %v435
      %v452 = vunpack.c.h.b16 %v435
      %v453 = vunpack.c.l.b16 %v436
      %v454 = vunpack.c.h.b16 %v436
      %v455 = vunpack.c.l.b16 %v437
      %v456 = vunpack.c.h.b16 %v437
      %v457 = vunpack.c.l.b16 %v438
      %v458 = vunpack.c.h.b16 %v438
      %v459 = vunpack.c.l.b16 %v439
      %v460 = vunpack.c.h.b16 %v439
      %v461 = vunpack.c.l.b16 %v440
      %v462 = vunpack.c.h.b16 %v440
      %v463 = vunpack.c.l.b16 %v441
      %v464 = vunpack.c.h.b16 %v441
      %v465 = vunpack.c.l.b16 %v442
      %v466 = vunpack.c.h.b16 %v442
      %v467 = vpack.c.b16 %v451, %v451
      %v468 = vpack.c.b16 %v452, %v452
      %v469 = vpack.c.b16 %v453, %v453
      %v470 = vpack.c.b16 %v454, %v454
      %v471 = vpack.c.b16 %v455, %v455
      %v472 = vpack.c.b16 %v456, %v456
      %v473 = vpack.c.b16 %v457, %v457
      %v474 = vpack.c.b16 %v458, %v458
      %v475 = vpack.c.b16 %v459, %v459
      %v476 = vpack.c.b16 %v460, %v460
      %v477 = vpack.c.b16 %v461, %v461
      %v478 = vpack.c.b16 %v462, %v462
      %v479 = vpack.c.b16 %v463, %v463
      %v480 = vpack.c.b16 %v464, %v464
      %v481 = vpack.c.b16 %v465, %v465
      %v482 = vpack.c.b16 %v466, %v466
      %499 = vst [vmem:[%s223] sm:$0xf] %v467
      %500 = vst [vmem:[%s223 + $0x4] sm:$0xf] %v468
      %501 = vst [vmem:[%s223 + $0x8] sm:$0xf] %v469
      %502 = vst [vmem:[%s223 + $0xc] sm:$0xf] %v470
      %503 = vst [vmem:[%s223 + $0x10] sm:$0xf] %v471
      %504 = vst [vmem:[%s223 + $0x14] sm:$0xf] %v472
      %505 = vst [vmem:[%s223 + $0x18] sm:$0xf] %v473
      %506 = vst [vmem:[%s223 + $0x1c] sm:$0xf] %v474
      %507 = vst [vmem:[%s223 + $0x20] sm:$0xf] %v475
      %508 = vst [vmem:[%s223 + $0x24] sm:$0xf] %v476
      %509 = vst [vmem:[%s223 + $0x28] sm:$0xf] %v477
      %510 = vst [vmem:[%s223 + $0x2c] sm:$0xf] %v478
      %511 = vst [vmem:[%s223 + $0x30] sm:$0xf] %v479
      %512 = vst [vmem:[%s223 + $0x34] sm:$0xf] %v480
      %513 = vst [vmem:[%s223 + $0x38] sm:$0xf] %v481
      %514 = vst [vmem:[%s223 + $0x3c] sm:$0xf] %v482
      %s515 = smul.u32 16, %s18
      %p516 = scmp.lt.s32.totalorder %s515, 63
      %s517 = scalar_select %p516, %s515, 63
      %p518 = scmp.lt.s32.totalorder %s19, 0
      %s519 = scalar_select %p518, %s19, 0
      %s520 = sadd.s32 %s519, %s517
      %s521 = smul.addr %s520, 4
      %s522 = scalar_lea.vmem %s3, %s521
      // Predicated region
      $region33: #{deeplab_forward.17} parent=31 // pred_check
        %p523 = pneg %p124
      $region34: #{deeplab_forward.17} parent=31 // pred_check_branch
        %525 = sbr.rel (%p523) target = $region36
      $region35: #{deeplab_forward.17} parent=31 // pred_region
        %s526 = smul.u32 16, %s18
      $region36: #{deeplab_forward.17} parent=31 // pred_fallthru
        _
    $region32: #{deeplab_forward.17} parent=5 // pred_fallthru
      _
    %p527 = scmp.le.s32.totalorder 2, %s9
    // Predicated region
    $region37: #{deeplab_forward.17} parent=5 // pred_check
      %p528 = pneg %p527
    $region38: #{deeplab_forward.17} parent=5 // pred_check_branch
      %530 = sbr.rel (%p528) target = $region40
    $region39: #{deeplab_forward.17} parent=5 // pred_region
      %s531 = ssub.s32 %s9, 2
      // Predicated region
      $region41: #{deeplab_forward.17} parent=39 // pred_check
        %p532 = pneg %p130
      $region42: #{deeplab_forward.17} parent=39 // pred_check_branch
        %534 = sbr.rel (%p532) target = $region44
      $region43: #{deeplab_forward.17} parent=39 // pred_region
        %s535 = smul.u32 16, %s20
        %p536 = scmp.lt.s32.totalorder %s535, 63
        %s537 = scalar_select %p536, %s535, 63
        %p538 = scmp.lt.s32.totalorder %s21, 0
        %s539 = scalar_select %p538, %s21, 0
        %s540 = sadd.s32 %s539, %s537
        %s541 = smul.addr %s540, 4
        %s542 = scalar_lea.vmem %s3, %s541
      $region44: #{deeplab_forward.17} parent=39 // pred_fallthru
        _
    $region40: #{deeplab_forward.17} parent=5 // pred_fallthru
      _
  $region6: #{deeplab_forward.17} parent=0 // loop_footer
    %s13 = sadd.s32 1, %s9
  $region7: #{deeplab_forward.17} parent=0 // loop_footer_branch
    %8 = sbr.rel target = $region3
  $region8: #{deeplab_forward.17} parent=0 // loop_exit
    _

// kernel: deeplab_forward.18
$region0: #{deeplab_forward.18}
  #allocation0 [shape = 'u32[]', space=smem, size = 0x4, offset = 0x4, fixed_abs, tag = 'smem constant byte address 0x4 - core index']
  #allocation1 [shape = 'u32[144,128]{1,0:T(1,128)}', space=vmem, size = 0x12000, scoped, tag = 'internal scratch']
  %s0 = inlined_call_operand.vmem [shape: bf16[128,80], index: 0, kind: input, shape index: {}]
  %s1 = inlined_call_operand.vmem [shape: bf16[80,128], index: 1, kind: input, shape index: {}]
  %s2 = inlined_call_operand.vmem [shape: f32[1,128], index: 2, kind: input, shape index: {}]
  %s3 = inlined_call_operand.vmem [shape: bf16[128,128], index: 3, kind: output, shape index: {}]
  %s4 = sld [smem:[#allocation0]]
  $region22: #{deeplab_forward.18} parent=0
    _
  %s6 = ssub.s32 1, %s4
  %s7 = scalar_select 0, %s6, %s4
  // Predicated region
  $region2: #{deeplab_forward.18} parent=0 // pred_check
    _
  $region3: #{deeplab_forward.18} parent=0 // pred_check_branch
    %9 = sbr.rel (0) target = $region5
  $region4: #{deeplab_forward.18} parent=0 // pred_region
    _
  $region5: #{deeplab_forward.18} parent=0 // pred_fallthru
    _
  // Predicated region
  $region6: #{deeplab_forward.18} parent=0 // pred_check
    _
  $region7: #{deeplab_forward.18} parent=0 // pred_check_branch
    %11 = sbr.rel (0) target = $region9
  $region8: #{deeplab_forward.18} parent=0 // pred_region
    _
  $region9: #{deeplab_forward.18} parent=0 // pred_fallthru
    _
  // Predicated region
  $region10: #{deeplab_forward.18} parent=0 // pred_check
    _
  $region11: #{deeplab_forward.18} parent=0 // pred_check_branch
    %13 = sbr.rel (0) target = $region13
  $region12: #{deeplab_forward.18} parent=0 // pred_region
    _
  $region13: #{deeplab_forward.18} parent=0 // pred_fallthru
    _
  %v15 = vld [vmem:[%s0] sm:$0xf]
  %v16 = vld [vmem:[%s0 + $0x4] sm:$0xf]
  %v17 = vld [vmem:[%s0 + $0x8] sm:$0xf]
  %v18 = vld [vmem:[%s0 + $0xc] sm:$0xf]
  %v19 = vld [vmem:[%s0 + $0x10] sm:$0xf]
  %v20 = vld [vmem:[%s0 + $0x14] sm:$0xf]
  %v21 = vld [vmem:[%s0 + $0x18] sm:$0xf]
  %v22 = vld [vmem:[%s0 + $0x1c] sm:$0xf]
  %v23 = vld [vmem:[%s0 + $0x20] sm:$0xf]
  %v24 = vld [vmem:[%s0 + $0x24] sm:$0xf]
  %v25 = vld [vmem:[%s0 + $0x28] sm:$0xf]
  %v26 = vld [vmem:[%s0 + $0x2c] sm:$0xf]
  %v27 = vld [vmem:[%s0 + $0x30] sm:$0xf]
  %v28 = vld [vmem:[%s0 + $0x34] sm:$0xf]
  %v29 = vld [vmem:[%s0 + $0x38] sm:$0xf]
  %v30 = vld [vmem:[%s0 + $0x3c] sm:$0xf]
  %v31 = vld [vmem:[%s1] sm:$0xf]
  %v32 = vld [vmem:[%s1 + $0x4] sm:$0xf]
  %v33 = vld [vmem:[%s1 + $0x8] sm:$0xf]
  %v34 = vld [vmem:[%s1 + $0xc] sm:$0xf]
  %v35 = vld [vmem:[%s1 + $0x10] sm:$0xf]
  %v36 = vld [vmem:[%s1 + $0x14] sm:$0xf]
  %v37 = vld [vmem:[%s1 + $0x18] sm:$0xf]
  %v38 = vld [vmem:[%s1 + $0x1c] sm:$0xf]
  %v39 = vld [vmem:[%s1 + $0x20] sm:$0xf]
  %v40 = vld [vmem:[%s1 + $0x24] sm:$0xf]
  %v41 = vld [vmem:[%s2] sm:$0x1]
  %v43 = vlaneseq
  %v44 = vshrl.u32 %v43, 7
  %v45 = vsub.s32 0, %v44
  %v46 = vrot.slane %v41, %v45
  %v64 = vunpack.c.l.b16 %v15
  %v65 = vunpack.c.l.b16 %v16
  %v66 = vunpack.c.l.b16 %v17
  %v67 = vunpack.c.l.b16 %v18
  %v68 = vunpack.c.l.b16 %v19
  %v69 = vunpack.c.l.b16 %v20
  %v70 = vunpack.c.l.b16 %v21
  %v71 = vunpack.c.l.b16 %v22
  %v72 = vunpack.c.l.b16 %v23
  %v73 = vunpack.c.l.b16 %v24
  %v74 = vunpack.c.l.b16 %v25
  %v75 = vunpack.c.l.b16 %v26
  %v76 = vunpack.c.l.b16 %v27
  %v77 = vunpack.c.l.b16 %v28
  %v78 = vunpack.c.l.b16 %v29
  %v79 = vunpack.c.l.b16 %v30
  %v80 = vpack.c.b16 %v65, %v64
  %v81 = vpack.c.b16 %v67, %v66
  %v82 = vpack.c.b16 %v69, %v68
  %v83 = vpack.c.b16 %v71, %v70
  %v84 = vpack.c.b16 %v73, %v72
  %v85 = vpack.c.b16 %v75, %v74
  %v86 = vpack.c.b16 %v77, %v76
  %v87 = vpack.c.b16 %v79, %v78
  %v98 = vunpack.c.l.b16 %v31
  %v99 = vunpack.c.l.b16 %v32
  %v100 = vunpack.c.l.b16 %v33
  %v101 = vunpack.c.l.b16 %v34
  %v102 = vunpack.c.l.b16 %v35
  %v103 = vunpack.c.l.b16 %v36
  %v104 = vunpack.c.l.b16 %v37
  %v105 = vunpack.c.l.b16 %v38
  %v106 = vunpack.c.l.b16 %v39
  %v107 = vunpack.c.l.b16 %v40
  %v108 = vpack.c.b16 %v99, %v98
  %v109 = vpack.c.b16 %v101, %v100
  %v110 = vpack.c.b16 %v103, %v102
  %v111 = vpack.c.b16 %v105, %v104
  %v112 = vpack.c.b16 %v107, %v106
  %vm118 = vcmask 654336
  %v120 = vsel %vm118, %v80, 0
  %v123 = vsel %vm118, %v81, 0
  %v126 = vsel %vm118, %v82, 0
  %v129 = vsel %vm118, %v83, 0
  %v132 = vsel %vm118, %v84, 0
  %v135 = vsel %vm118, %v85, 0
  %v138 = vsel %vm118, %v86, 0
  %v141 = vsel %vm118, %v87, 0
  %143 = vmatprep.subr.bf16.mxu0 0
  %144 = vmatpush1.bf16.msra.mxu0 0
  %145 = vmatprep.subr.bf16.mxu0 0
  %146 = vmatpush1.bf16.msra.mxu0 0
  %147 = vmatprep.subr.bf16.mxu0 0
  %148 = vmatpush1.bf16.msra.mxu0 0
  %149 = vmatprep.subr.bf16.mxu0 0
  %150 = vmatpush1.bf16.msra.mxu0 %v112
  %151 = vmatprep.subr.bf16.mxu0 0
  %152 = vmatpush1.bf16.msra.mxu0 %v111
  %153 = vmatprep.subr.bf16.mxu0 0
  %154 = vmatpush1.bf16.msra.mxu0 %v110
  %155 = vmatprep.subr.bf16.mxu0 0
  %156 = vmatpush1.bf16.msra.mxu0 %v109
  %157 = vmatprep.subr.bf16.mxu0 0
  %158 = vmatpush1.bf16.msra.mxu0 %v108
  %159 = vmatprep.subr.bf16.mxu0 0
  %160 = vmatpush2.bf16.msra.mxu0 0
  %161 = vmatprep.subr.bf16.mxu0 0
  %162 = vmatpush2.bf16.msra.mxu0 0
  %163 = vmatprep.subr.bf16.mxu0 0
  %164 = vmatpush2.bf16.msra.mxu0 0
  %165 = vmatprep.subr.bf16.mxu0 0
  %166 = vmatpush2.bf16.msra.mxu0 0
  %167 = vmatprep.subr.bf16.mxu0 0
  %168 = vmatpush2.bf16.msra.mxu0 0
  %169 = vmatprep.subr.bf16.mxu0 0
  %170 = vmatpush2.bf16.msra.mxu0 0
  %171 = vmatprep.subr.bf16.mxu0 0
  %172 = vmatpush2.bf16.msra.mxu0 0
  %173 = vmatprep.subr.bf16.mxu0 0
  %174 = vmatpush2.bf16.msra.mxu0 0
  %175 = vmatprep.mubr.bf16.mxu0 0
  %176 = vmatmul.mubr.bf16.gmra.mxu0 %v120
  %v177 = vpop.f32.mrf.mxu0
  %v178 = vadd.f32 %v46, %v177
  %v179 = vpop.f32.mrf.mxu0
  %v180 = vpop.f32.mrf.mxu0
  %v181 = vadd.f32 %v46, %v180
  %v182 = vpop.f32.mrf.mxu0
  %183 = vmatprep.mubr.bf16.mxu0 0
  %184 = vmatmul.mubr.bf16.gmra.mxu0 %v123
  %v185 = vpop.f32.mrf.mxu0
  %v186 = vadd.f32 %v46, %v185
  %v187 = vpop.f32.mrf.mxu0
  %v188 = vpop.f32.mrf.mxu0
  %v189 = vadd.f32 %v46, %v188
  %v190 = vpop.f32.mrf.mxu0
  %191 = vmatprep.mubr.bf16.mxu0 0
  %192 = vmatmul.mubr.bf16.gmra.mxu0 %v126
  %v193 = vpop.f32.mrf.mxu0
  %v194 = vadd.f32 %v46, %v193
  %v195 = vpop.f32.mrf.mxu0
  %v196 = vpop.f32.mrf.mxu0
  %v197 = vadd.f32 %v46, %v196
  %v198 = vpop.f32.mrf.mxu0
  %199 = vmatprep.mubr.bf16.mxu0 0
  %200 = vmatmul.mubr.bf16.gmra.mxu0 %v129
  %v201 = vpop.f32.mrf.mxu0
  %v202 = vadd.f32 %v46, %v201
  %v203 = vpop.f32.mrf.mxu0
  %v204 = vpop.f32.mrf.mxu0
  %v205 = vadd.f32 %v46, %v204
  %v206 = vpop.f32.mrf.mxu0
  %207 = vmatprep.mubr.bf16.mxu0 0
  %208 = vmatmul.mubr.bf16.gmra.mxu0 %v132
  %v209 = vpop.f32.mrf.mxu0
  %v210 = vadd.f32 %v46, %v209
  %v211 = vpop.f32.mrf.mxu0
  %v212 = vpop.f32.mrf.mxu0
  %v213 = vadd.f32 %v46, %v212
  %v214 = vpop.f32.mrf.mxu0
  %215 = vmatprep.mubr.bf16.mxu0 0
  %216 = vmatmul.mubr.bf16.gmra.mxu0 %v135
  %v217 = vpop.f32.mrf.mxu0
  %v218 = vadd.f32 %v46, %v217
  %v219 = vpop.f32.mrf.mxu0
  %v220 = vpop.f32.mrf.mxu0
  %v221 = vadd.f32 %v46, %v220
  %v222 = vpop.f32.mrf.mxu0
  %223 = vmatprep.mubr.bf16.mxu0 0
  %224 = vmatmul.mubr.bf16.gmra.mxu0 %v138
  %v225 = vpop.f32.mrf.mxu0
  %v226 = vadd.f32 %v46, %v225
  %v227 = vpop.f32.mrf.mxu0
  %v228 = vpop.f32.mrf.mxu0
  %v229 = vadd.f32 %v46, %v228
  %v230 = vpop.f32.mrf.mxu0
  %231 = vmatprep.mubr.bf16.mxu0 0
  %232 = vmatmul.mubr.bf16.gmra.mxu0 %v141
  %v233 = vpop.f32.mrf.mxu0
  %v234 = vadd.f32 %v46, %v233
  %v235 = vpop.f32.mrf.mxu0
  %v236 = vpop.f32.mrf.mxu0
  %v237 = vadd.f32 %v46, %v236
  %v238 = vpop.f32.mrf.mxu0
  %239 = vdwg.mxu0
  %v240 = vmax.f32 %v178, 0.0
  %v241 = vmax.f32 %v181, 0.0
  %v242 = vmax.f32 %v186, 0.0
  %v243 = vmax.f32 %v189, 0.0
  %v244 = vmax.f32 %v194, 0.0
  %v245 = vmax.f32 %v197, 0.0
  %v246 = vmax.f32 %v202, 0.0
  %v247 = vmax.f32 %v205, 0.0
  %v248 = vmax.f32 %v210, 0.0
  %v249 = vmax.f32 %v213, 0.0
  %v250 = vmax.f32 %v218, 0.0
  %v251 = vmax.f32 %v221, 0.0
  %v252 = vmax.f32 %v226, 0.0
  %v253 = vmax.f32 %v229, 0.0
  %v254 = vmax.f32 %v234, 0.0
  %v255 = vmax.f32 %v237, 0.0
  %v256 = vpack.c.bf16 %v241, %v240
  %v257 = vpack.c.bf16 %v243, %v242
  %v258 = vpack.c.bf16 %v245, %v244
  %v259 = vpack.c.bf16 %v247, %v246
  %v260 = vpack.c.bf16 %v249, %v248
  %v261 = vpack.c.bf16 %v251, %v250
  %v262 = vpack.c.bf16 %v253, %v252
  %v263 = vpack.c.bf16 %v255, %v254
  %v272 = vunpack.c.l.b16 %v256
  %v273 = vunpack.c.h.b16 %v256
  %v274 = vunpack.c.l.b16 %v257
  %v275 = vunpack.c.h.b16 %v257
  %v276 = vunpack.c.l.b16 %v258
  %v277 = vunpack.c.h.b16 %v258
  %v278 = vunpack.c.l.b16 %v259
  %v279 = vunpack.c.h.b16 %v259
  %v280 = vunpack.c.l.b16 %v260
  %v281 = vunpack.c.h.b16 %v260
  %v282 = vunpack.c.l.b16 %v261
  %v283 = vunpack.c.h.b16 %v261
  %v284 = vunpack.c.l.b16 %v262
  %v285 = vunpack.c.h.b16 %v262
  %v286 = vunpack.c.l.b16 %v263
  %v287 = vunpack.c.h.b16 %v263
  %v288 = vpack.c.b16 %v272, %v272
  %v289 = vpack.c.b16 %v273, %v273
  %v290 = vpack.c.b16 %v274, %v274
  %v291 = vpack.c.b16 %v275, %v275
  %v292 = vpack.c.b16 %v276, %v276
  %v293 = vpack.c.b16 %v277, %v277
  %v294 = vpack.c.b16 %v278, %v278
  %v295 = vpack.c.b16 %v279, %v279
  %v296 = vpack.c.b16 %v280, %v280
  %v297 = vpack.c.b16 %v281, %v281
  %v298 = vpack.c.b16 %v282, %v282
  %v299 = vpack.c.b16 %v283, %v283
  %v300 = vpack.c.b16 %v284, %v284
  %v301 = vpack.c.b16 %v285, %v285
  %v302 = vpack.c.b16 %v286, %v286
  %v303 = vpack.c.b16 %v287, %v287
  %320 = vst [vmem:[%s3] sm:$0xf] %v288
  %321 = vst [vmem:[%s3 + $0x4] sm:$0xf] %v289
  %322 = vst [vmem:[%s3 + $0x8] sm:$0xf] %v290
  %323 = vst [vmem:[%s3 + $0xc] sm:$0xf] %v291
  %324 = vst [vmem:[%s3 + $0x10] sm:$0xf] %v292
  %325 = vst [vmem:[%s3 + $0x14] sm:$0xf] %v293
  %326 = vst [vmem:[%s3 + $0x18] sm:$0xf] %v294
  %327 = vst [vmem:[%s3 + $0x1c] sm:$0xf] %v295
  %328 = vst [vmem:[%s3 + $0x20] sm:$0xf] %v296
  %329 = vst [vmem:[%s3 + $0x24] sm:$0xf] %v297
  %330 = vst [vmem:[%s3 + $0x28] sm:$0xf] %v298
  %331 = vst [vmem:[%s3 + $0x2c] sm:$0xf] %v299
  %332 = vst [vmem:[%s3 + $0x30] sm:$0xf] %v300
  %333 = vst [vmem:[%s3 + $0x34] sm:$0xf] %v301
  %334 = vst [vmem:[%s3 + $0x38] sm:$0xf] %v302
  %335 = vst [vmem:[%s3 + $0x3c] sm:$0xf] %v303
  // Predicated region
  $region14: #{deeplab_forward.18} parent=0 // pred_check
    _
  $region15: #{deeplab_forward.18} parent=0 // pred_check_branch
    %337 = sbr.rel (0) target = $region17
  $region16: #{deeplab_forward.18} parent=0 // pred_region
    _
  $region17: #{deeplab_forward.18} parent=0 // pred_fallthru
    _
  // Predicated region
  $region18: #{deeplab_forward.18} parent=0 // pred_check
    _
  $region19: #{deeplab_forward.18} parent=0 // pred_check_branch
    %339 = sbr.rel (0) target = $region21
  $region20: #{deeplab_forward.18} parent=0 // pred_region
    _
  $region21: #{deeplab_forward.18} parent=0 // pred_fallthru
    _

// kernel: deeplab_forward.19
$region0: #{deeplab_forward.19}
  #allocation0 [shape = 'u32[]', space=smem, size = 0x4, offset = 0x4, fixed_abs, tag = 'smem constant byte address 0x4 - core index']
  #allocation1 [shape = 'u32[144,128]{1,0:T(1,128)}', space=vmem, size = 0x12000, scoped, tag = 'internal scratch']
  %s0 = inlined_call_operand.vmem [shape: bf16[32,144], index: 0, kind: input, shape index: {}]
  %s1 = inlined_call_operand.vmem [shape: bf16[144,128], index: 1, kind: input, shape index: {}]
  %s2 = inlined_call_operand.vmem [shape: f32[1,128], index: 2, kind: input, shape index: {}]
  %s3 = inlined_call_operand.vmem [shape: bf16[32,128], index: 3, kind: output, shape index: {}]
  %s4 = sld [smem:[#allocation0]]
  $region22: #{deeplab_forward.19} parent=0
    _
  %s6 = ssub.s32 1, %s4
  %s7 = scalar_select 0, %s6, %s4
  // Predicated region
  $region2: #{deeplab_forward.19} parent=0 // pred_check
    _
  $region3: #{deeplab_forward.19} parent=0 // pred_check_branch
    %9 = sbr.rel (0) target = $region5
  $region4: #{deeplab_forward.19} parent=0 // pred_region
    _
  $region5: #{deeplab_forward.19} parent=0 // pred_fallthru
    _
  // Predicated region
  $region6: #{deeplab_forward.19} parent=0 // pred_check
    _
  $region7: #{deeplab_forward.19} parent=0 // pred_check_branch
    %11 = sbr.rel (0) target = $region9
  $region8: #{deeplab_forward.19} parent=0 // pred_region
    _
  $region9: #{deeplab_forward.19} parent=0 // pred_fallthru
    _
  // Predicated region
  $region10: #{deeplab_forward.19} parent=0 // pred_check
    _
  $region11: #{deeplab_forward.19} parent=0 // pred_check_branch
    %13 = sbr.rel (0) target = $region13
  $region12: #{deeplab_forward.19} parent=0 // pred_region
    _
  $region13: #{deeplab_forward.19} parent=0 // pred_fallthru
    _
  %v15 = vld [vmem:[%s0] sm:$0xff]
  %v16 = vld [vmem:[%s0 + $0x8] sm:$0xff]
  %v17 = vld [vmem:[%s0 + $0x10] sm:$0xff]
  %v18 = vld [vmem:[%s0 + $0x18] sm:$0xff]
  %v19 = vld [vmem:[%s1] sm:$0xf]
  %v20 = vld [vmem:[%s1 + $0x4] sm:$0xf]
  %v21 = vld [vmem:[%s1 + $0x8] sm:$0xf]
  %v22 = vld [vmem:[%s1 + $0xc] sm:$0xf]
  %v23 = vld [vmem:[%s1 + $0x10] sm:$0xf]
  %v24 = vld [vmem:[%s1 + $0x14] sm:$0xf]
  %v25 = vld [vmem:[%s1 + $0x18] sm:$0xf]
  %v26 = vld [vmem:[%s1 + $0x1c] sm:$0xf]
  %v27 = vld [vmem:[%s1 + $0x20] sm:$0xf]
  %v28 = vld [vmem:[%s1 + $0x24] sm:$0xf]
  %v29 = vld [vmem:[%s1 + $0x28] sm:$0xf]
  %v30 = vld [vmem:[%s1 + $0x2c] sm:$0xf]
  %v31 = vld [vmem:[%s1 + $0x30] sm:$0xf]
  %v32 = vld [vmem:[%s1 + $0x34] sm:$0xf]
  %v33 = vld [vmem:[%s1 + $0x38] sm:$0xf]
  %v34 = vld [vmem:[%s1 + $0x3c] sm:$0xf]
  %v35 = vld [vmem:[%s1 + $0x40] sm:$0xf]
  %v36 = vld [vmem:[%s1 + $0x44] sm:$0xf]
  %v37 = vld [vmem:[%s2] sm:$0x1]
  %v39 = vlaneseq
  %v40 = vshrl.u32 %v39, 7
  %v41 = vsub.s32 0, %v40
  %v42 = vrot.slane %v37, %v41
  %v48 = vunpack.c.l.b16 %v15
  %v49 = vunpack.c.h.b16 %v15
  %v50 = vunpack.c.l.b16 %v16
  %v51 = vunpack.c.h.b16 %v16
  %v52 = vunpack.c.l.b16 %v17
  %v53 = vunpack.c.h.b16 %v17
  %v54 = vunpack.c.l.b16 %v18
  %v55 = vunpack.c.h.b16 %v18
  %v56 = vpack.c.b16 %v50, %v48
  %v57 = vpack.c.b16 %v51, %v49
  %v58 = vpack.c.b16 %v54, %v52
  %v59 = vpack.c.b16 %v55, %v53
  %v80 = vunpack.c.l.b16 %v19
  %v81 = vunpack.c.l.b16 %v20
  %v82 = vunpack.c.l.b16 %v21
  %v83 = vunpack.c.l.b16 %v22
  %v84 = vunpack.c.l.b16 %v23
  %v85 = vunpack.c.l.b16 %v24
  %v86 = vunpack.c.l.b16 %v25
  %v87 = vunpack.c.l.b16 %v26
  %v88 = vunpack.c.l.b16 %v27
  %v89 = vunpack.c.l.b16 %v28
  %v90 = vunpack.c.l.b16 %v29
  %v91 = vunpack.c.l.b16 %v30
  %v92 = vunpack.c.l.b16 %v31
  %v93 = vunpack.c.l.b16 %v32
  %v94 = vunpack.c.l.b16 %v33
  %v95 = vunpack.c.l.b16 %v34
  %v96 = vunpack.c.l.b16 %v35
  %v97 = vunpack.c.l.b16 %v36
  %v98 = vpack.c.b16 %v81, %v80
  %v99 = vpack.c.b16 %v83, %v82
  %v100 = vpack.c.b16 %v85, %v84
  %v101 = vpack.c.b16 %v87, %v86
  %v102 = vpack.c.b16 %v89, %v88
  %v103 = vpack.c.b16 %v91, %v90
  %v104 = vpack.c.b16 %v93, %v92
  %v105 = vpack.c.b16 %v95, %v94
  %v106 = vpack.c.b16 %v97, %v96
  %vm116 = vcmask 130048
  %v118 = vsel %vm116, %v57, 0
  %v121 = vsel %vm116, %v59, 0
  %123 = vmatprep.subr.bf16.mxu0 0
  %124 = vmatpush1.bf16.msra.mxu0 %v105
  %125 = vmatprep.subr.bf16.mxu0 0
  %126 = vmatpush1.bf16.msra.mxu0 %v104
  %127 = vmatprep.subr.bf16.mxu0 0
  %128 = vmatpush1.bf16.msra.mxu0 %v103
  %129 = vmatprep.subr.bf16.mxu0 0
  %130 = vmatpush1.bf16.msra.mxu0 %v102
  %131 = vmatprep.subr.bf16.mxu0 0
  %132 = vmatpush1.bf16.msra.mxu0 %v101
  %133 = vmatprep.subr.bf16.mxu0 0
  %134 = vmatpush1.bf16.msra.mxu0 %v100
  %135 = vmatprep.subr.bf16.mxu0 0
  %136 = vmatpush1.bf16.msra.mxu0 %v99
  %137 = vmatprep.subr.bf16.mxu0 0
  %138 = vmatpush1.bf16.msra.mxu0 %v98
  %139 = vmatprep.subr.bf16.mxu0 0
  %140 = vmatpush2.bf16.msra.mxu0 0
  %141 = vmatprep.subr.bf16.mxu0 0
  %142 = vmatpush2.bf16.msra.mxu0 0
  %143 = vmatprep.subr.bf16.mxu0 0
  %144 = vmatpush2.bf16.msra.mxu0 0
  %145 = vmatprep.subr.bf16.mxu0 0
  %146 = vmatpush2.bf16.msra.mxu0 0
  %147 = vmatprep.subr.bf16.mxu0 0
  %148 = vmatpush2.bf16.msra.mxu0 0
  %149 = vmatprep.subr.bf16.mxu0 0
  %150 = vmatpush2.bf16.msra.mxu0 0
  %151 = vmatprep.subr.bf16.mxu0 0
  %152 = vmatpush2.bf16.msra.mxu0 0
  %153 = vmatprep.subr.bf16.mxu0 0
  %154 = vmatpush2.bf16.msra.mxu0 %v106
  %155 = vmatprep.mubr.bf16.mxu0 %v118
  %156 = vmatmul.mubr.bf16.gmra.mxu0 %v56
  %v157 = vpop.f32.mrf.mxu0
  %v158 = vadd.f32 %v42, %v157
  %v159 = vpop.f32.mrf.mxu0
  %v160 = vpop.f32.mrf.mxu0
  %v161 = vadd.f32 %v42, %v160
  %v162 = vpop.f32.mrf.mxu0
  %163 = vmatprep.mubr.bf16.mxu0 %v121
  %164 = vmatmul.mubr.bf16.gmra.mxu0 %v58
  %v165 = vpop.f32.mrf.mxu0
  %v166 = vadd.f32 %v42, %v165
  %v167 = vpop.f32.mrf.mxu0
  %v168 = vpop.f32.mrf.mxu0
  %v169 = vadd.f32 %v42, %v168
  %v170 = vpop.f32.mrf.mxu0
  %171 = vdwg.mxu0
  %v172 = vmax.f32 %v158, 0.0
  %v173 = vmax.f32 %v161, 0.0
  %v174 = vmax.f32 %v166, 0.0
  %v175 = vmax.f32 %v169, 0.0
  %v176 = vpack.c.bf16 %v173, %v172
  %v177 = vpack.c.bf16 %v175, %v174
  %v180 = vunpack.c.l.b16 %v176
  %v181 = vunpack.c.h.b16 %v176
  %v182 = vunpack.c.l.b16 %v177
  %v183 = vunpack.c.h.b16 %v177
  %v184 = vpack.c.b16 %v180, %v180
  %v185 = vpack.c.b16 %v181, %v181
  %v186 = vpack.c.b16 %v182, %v182
  %v187 = vpack.c.b16 %v183, %v183
  %192 = vst [vmem:[%s3] sm:$0xf] %v184
  %193 = vst [vmem:[%s3 + $0x4] sm:$0xf] %v185
  %194 = vst [vmem:[%s3 + $0x8] sm:$0xf] %v186
  %195 = vst [vmem:[%s3 + $0xc] sm:$0xf] %v187
  // Predicated region
  $region14: #{deeplab_forward.19} parent=0 // pred_check
    _
  $region15: #{deeplab_forward.19} parent=0 // pred_check_branch
    %197 = sbr.rel (0) target = $region17
  $region16: #{deeplab_forward.19} parent=0 // pred_region
    _
  $region17: #{deeplab_forward.19} parent=0 // pred_fallthru
    _
  // Predicated region
  $region18: #{deeplab_forward.19} parent=0 // pred_check
    _
  $region19: #{deeplab_forward.19} parent=0 // pred_check_branch
    %199 = sbr.rel (0) target = $region21
  $region20: #{deeplab_forward.19} parent=0 // pred_region
    _
  $region21: #{deeplab_forward.19} parent=0 // pred_fallthru
    _

// kernel: deeplab_forward.20
$region0: #{deeplab_forward.20}
  #allocation0 [shape = 'u32[]', space=smem, size = 0x4, offset = 0x4, fixed_abs, tag = 'smem constant byte address 0x4 - core index']
  #allocation1 [shape = 'u32[144,128]{1,0:T(1,128)}', space=vmem, size = 0x12000, scoped, tag = 'internal scratch']
  %s0 = inlined_call_operand.vmem [shape: bf16[8,288], index: 0, kind: input, shape index: {}]
  %s1 = inlined_call_operand.vmem [shape: bf16[288,128], index: 1, kind: input, shape index: {}]
  %s2 = inlined_call_operand.vmem [shape: f32[1,128], index: 2, kind: input, shape index: {}]
  %s3 = inlined_call_operand.vmem [shape: bf16[8,128], index: 3, kind: output, shape index: {}]
  %s4 = sld [smem:[#allocation0]]
  $region22: #{deeplab_forward.20} parent=0
    _
  %s6 = ssub.s32 1, %s4
  %s7 = scalar_select 0, %s6, %s4
  // Predicated region
  $region2: #{deeplab_forward.20} parent=0 // pred_check
    _
  $region3: #{deeplab_forward.20} parent=0 // pred_check_branch
    %9 = sbr.rel (0) target = $region5
  $region4: #{deeplab_forward.20} parent=0 // pred_region
    _
  $region5: #{deeplab_forward.20} parent=0 // pred_fallthru
    _
  // Predicated region
  $region6: #{deeplab_forward.20} parent=0 // pred_check
    _
  $region7: #{deeplab_forward.20} parent=0 // pred_check_branch
    %11 = sbr.rel (0) target = $region9
  $region8: #{deeplab_forward.20} parent=0 // pred_region
    _
  $region9: #{deeplab_forward.20} parent=0 // pred_fallthru
    _
  // Predicated region
  $region10: #{deeplab_forward.20} parent=0 // pred_check
    _
  $region11: #{deeplab_forward.20} parent=0 // pred_check_branch
    %13 = sbr.rel (0) target = $region13
  $region12: #{deeplab_forward.20} parent=0 // pred_region
    _
  $region13: #{deeplab_forward.20} parent=0 // pred_fallthru
    _
  %v15 = vld [vmem:[%s0] sm:$0xff]
  %v16 = vld [vmem:[%s0 + $0x8] sm:$0xf]
  %v17 = vld [vmem:[%s1] sm:$0xf]
  %v18 = vld [vmem:[%s1 + $0x4] sm:$0xf]
  %v19 = vld [vmem:[%s1 + $0x8] sm:$0xf]
  %v20 = vld [vmem:[%s1 + $0xc] sm:$0xf]
  %v21 = vld [vmem:[%s1 + $0x10] sm:$0xf]
  %v22 = vld [vmem:[%s1 + $0x14] sm:$0xf]
  %v23 = vld [vmem:[%s1 + $0x18] sm:$0xf]
  %v24 = vld [vmem:[%s1 + $0x1c] sm:$0xf]
  %v25 = vld [vmem:[%s1 + $0x20] sm:$0xf]
  %v26 = vld [vmem:[%s1 + $0x24] sm:$0xf]
  %v27 = vld [vmem:[%s1 + $0x28] sm:$0xf]
  %v28 = vld [vmem:[%s1 + $0x2c] sm:$0xf]
  %v29 = vld [vmem:[%s1 + $0x30] sm:$0xf]
  %v30 = vld [vmem:[%s1 + $0x34] sm:$0xf]
  %v31 = vld [vmem:[%s1 + $0x38] sm:$0xf]
  %v32 = vld [vmem:[%s1 + $0x3c] sm:$0xf]
  %v33 = vld [vmem:[%s1 + $0x40] sm:$0xf]
  %v34 = vld [vmem:[%s1 + $0x44] sm:$0xf]
  %v35 = vld [vmem:[%s1 + $0x48] sm:$0xf]
  %v36 = vld [vmem:[%s1 + $0x4c] sm:$0xf]
  %v37 = vld [vmem:[%s1 + $0x50] sm:$0xf]
  %v38 = vld [vmem:[%s1 + $0x54] sm:$0xf]
  %v39 = vld [vmem:[%s1 + $0x58] sm:$0xf]
  %v40 = vld [vmem:[%s1 + $0x5c] sm:$0xf]
  %v41 = vld [vmem:[%s1 + $0x60] sm:$0xf]
  %v42 = vld [vmem:[%s1 + $0x64] sm:$0xf]
  %v43 = vld [vmem:[%s1 + $0x68] sm:$0xf]
  %v44 = vld [vmem:[%s1 + $0x6c] sm:$0xf]
  %v45 = vld [vmem:[%s1 + $0x70] sm:$0xf]
  %v46 = vld [vmem:[%s1 + $0x74] sm:$0xf]
  %v47 = vld [vmem:[%s1 + $0x78] sm:$0xf]
  %v48 = vld [vmem:[%s1 + $0x7c] sm:$0xf]
  %v49 = vld [vmem:[%s1 + $0x80] sm:$0xf]
  %v50 = vld [vmem:[%s1 + $0x84] sm:$0xf]
  %v51 = vld [vmem:[%s1 + $0x88] sm:$0xf]
  %v52 = vld [vmem:[%s1 + $0x8c] sm:$0xf]
  %v53 = vld [vmem:[%s2] sm:$0x1]
  %v55 = vlaneseq
  %v56 = vshrl.u32 %v55, 7
  %v57 = vsub.s32 0, %v56
  %v58 = vrot.slane %v53, %v57
  %v62 = vunpack.c.l.b16 %v15
  %v63 = vunpack.c.h.b16 %v15
  %v64 = vunpack.c.l.b16 %v16
  %v65 = vpack.c.b16 %v62, %v62
  %v66 = vpack.c.b16 %v63, %v63
  %v67 = vpack.c.b16 %v64, %v64
  %v106 = vunpack.c.l.b16 %v17
  %v107 = vunpack.c.l.b16 %v18
  %v108 = vunpack.c.l.b16 %v19
  %v109 = vunpack.c.l.b16 %v20
  %v110 = vunpack.c.l.b16 %v21
  %v111 = vunpack.c.l.b16 %v22
  %v112 = vunpack.c.l.b16 %v23
  %v113 = vunpack.c.l.b16 %v24
  %v114 = vunpack.c.l.b16 %v25
  %v115 = vunpack.c.l.b16 %v26
  %v116 = vunpack.c.l.b16 %v27
  %v117 = vunpack.c.l.b16 %v28
  %v118 = vunpack.c.l.b16 %v29
  %v119 = vunpack.c.l.b16 %v30
  %v120 = vunpack.c.l.b16 %v31
  %v121 = vunpack.c.l.b16 %v32
  %v122 = vunpack.c.l.b16 %v33
  %v123 = vunpack.c.l.b16 %v34
  %v124 = vunpack.c.l.b16 %v35
  %v125 = vunpack.c.l.b16 %v36
  %v126 = vunpack.c.l.b16 %v37
  %v127 = vunpack.c.l.b16 %v38
  %v128 = vunpack.c.l.b16 %v39
  %v129 = vunpack.c.l.b16 %v40
  %v130 = vunpack.c.l.b16 %v41
  %v131 = vunpack.c.l.b16 %v42
  %v132 = vunpack.c.l.b16 %v43
  %v133 = vunpack.c.l.b16 %v44
  %v134 = vunpack.c.l.b16 %v45
  %v135 = vunpack.c.l.b16 %v46
  %v136 = vunpack.c.l.b16 %v47
  %v137 = vunpack.c.l.b16 %v48
  %v138 = vunpack.c.l.b16 %v49
  %v139 = vunpack.c.l.b16 %v50
  %v140 = vunpack.c.l.b16 %v51
  %v141 = vunpack.c.l.b16 %v52
  %v142 = vpack.c.b16 %v107, %v106
  %v143 = vpack.c.b16 %v109, %v108
  %v144 = vpack.c.b16 %v111, %v110
  %v145 = vpack.c.b16 %v113, %v112
  %v146 = vpack.c.b16 %v115, %v114
  %v147 = vpack.c.b16 %v117, %v116
  %v148 = vpack.c.b16 %v119, %v118
  %v149 = vpack.c.b16 %v121, %v120
  %v150 = vpack.c.b16 %v123, %v122
  %v151 = vpack.c.b16 %v125, %v124
  %v152 = vpack.c.b16 %v127, %v126
  %v153 = vpack.c.b16 %v129, %v128
  %v154 = vpack.c.b16 %v131, %v130
  %v155 = vpack.c.b16 %v133, %v132
  %v156 = vpack.c.b16 %v135, %v134
  %v157 = vpack.c.b16 %v137, %v136
  %v158 = vpack.c.b16 %v139, %v138
  %v159 = vpack.c.b16 %v141, %v140
  %vm178 = vcmask 261120
  %v180 = vsel %vm178, %v67, 0
  %182 = vmatprep.subr.bf16.mxu0 0
  %183 = vmatpush1.bf16.msra.mxu0 %v149
  %184 = vmatprep.subr.bf16.mxu0 0
  %185 = vmatpush1.bf16.msra.mxu0 %v148
  %186 = vmatprep.subr.bf16.mxu0 0
  %187 = vmatpush1.bf16.msra.mxu0 %v147
  %188 = vmatprep.subr.bf16.mxu0 0
  %189 = vmatpush1.bf16.msra.mxu0 %v146
  %190 = vmatprep.subr.bf16.mxu0 0
  %191 = vmatpush1.bf16.msra.mxu0 %v145
  %192 = vmatprep.subr.bf16.mxu0 0
  %193 = vmatpush1.bf16.msra.mxu0 %v144
  %194 = vmatprep.subr.bf16.mxu0 0
  %195 = vmatpush1.bf16.msra.mxu0 %v143
  %196 = vmatprep.subr.bf16.mxu0 0
  %197 = vmatpush1.bf16.msra.mxu0 %v142
  %198 = vmatprep.subr.bf16.mxu0 0
  %199 = vmatpush2.bf16.msra.mxu0 %v157
  %200 = vmatprep.subr.bf16.mxu0 0
  %201 = vmatpush2.bf16.msra.mxu0 %v156
  %202 = vmatprep.subr.bf16.mxu0 0
  %203 = vmatpush2.bf16.msra.mxu0 %v155
  %204 = vmatprep.subr.bf16.mxu0 0
  %205 = vmatpush2.bf16.msra.mxu0 %v154
  %206 = vmatprep.subr.bf16.mxu0 0
  %207 = vmatpush2.bf16.msra.mxu0 %v153
  %208 = vmatprep.subr.bf16.mxu0 0
  %209 = vmatpush2.bf16.msra.mxu0 %v152
  %210 = vmatprep.subr.bf16.mxu0 0
  %211 = vmatpush2.bf16.msra.mxu0 %v151
  %212 = vmatprep.subr.bf16.mxu0 0
  %213 = vmatpush2.bf16.msra.mxu0 %v150
  %214 = vmatprep.mubr.bf16.mxu0 %v66
  %215 = vmatmul.mubr.bf16.gmra.mxu0 %v65
  %v216 = vpop.f32.mrf.mxu0
  %v217 = vadd.f32 %v58, %v216
  %v218 = vpop.f32.mrf.mxu0
  %v219 = vpop.f32.mrf.mxu0
  %v220 = vpop.f32.mrf.mxu0
  %221 = vdwg.mxu0
  %222 = vmatprep.subr.bf16.mxu0 0
  %223 = vmatpush1.bf16.msra.mxu0 0
  %224 = vmatprep.subr.bf16.mxu0 0
  %225 = vmatpush1.bf16.msra.mxu0 0
  %226 = vmatprep.subr.bf16.mxu0 0
  %227 = vmatpush1.bf16.msra.mxu0 0
  %228 = vmatprep.subr.bf16.mxu0 0
  %229 = vmatpush1.bf16.msra.mxu0 0
  %230 = vmatprep.subr.bf16.mxu0 0
  %231 = vmatpush1.bf16.msra.mxu0 0
  %232 = vmatprep.subr.bf16.mxu0 0
  %233 = vmatpush1.bf16.msra.mxu0 0
  %234 = vmatprep.subr.bf16.mxu0 0
  %235 = vmatpush1.bf16.msra.mxu0 %v159
  %236 = vmatprep.subr.bf16.mxu0 0
  %237 = vmatpush1.bf16.msra.mxu0 %v158
  %238 = vmatprep.subr.bf16.mxu0 0
  %239 = vmatpush2.bf16.msra.mxu0 0
  %240 = vmatprep.subr.bf16.mxu0 0
  %241 = vmatpush2.bf16.msra.mxu0 0
  %242 = vmatprep.subr.bf16.mxu0 0
  %243 = vmatpush2.bf16.msra.mxu0 0
  %244 = vmatprep.subr.bf16.mxu0 0
  %245 = vmatpush2.bf16.msra.mxu0 0
  %246 = vmatprep.subr.bf16.mxu0 0
  %247 = vmatpush2.bf16.msra.mxu0 0
  %248 = vmatprep.subr.bf16.mxu0 0
  %249 = vmatpush2.bf16.msra.mxu0 0
  %250 = vmatprep.subr.bf16.mxu0 0
  %251 = vmatpush2.bf16.msra.mxu0 0
  %252 = vmatprep.subr.bf16.mxu0 0
  %253 = vmatpush2.bf16.msra.mxu0 0
  %254 = vmatprep.mubr.bf16.mxu0 0
  %255 = vmatmul.mubr.bf16.gmra.mxu0 %v180
  %v256 = vpop.f32.mrf.mxu0
  %v257 = vadd.f32 %v217, %v256
  %v258 = vpop.f32.mrf.mxu0
  %v259 = vpop.f32.mrf.mxu0
  %v260 = vpop.f32.mrf.mxu0
  %261 = vdwg.mxu0
  %v262 = vmax.f32 %v257, 0.0
  %v263 = vpack.c.bf16 %v262, %v262
  %264 = vst [vmem:[%s3] sm:$0xf] %v263
  // Predicated region
  $region14: #{deeplab_forward.20} parent=0 // pred_check
    _
  $region15: #{deeplab_forward.20} parent=0 // pred_check_branch
    %266 = sbr.rel (0) target = $region17
  $region16: #{deeplab_forward.20} parent=0 // pred_region
    _
  $region17: #{deeplab_forward.20} parent=0 // pred_fallthru
    _
  // Predicated region
  $region18: #{deeplab_forward.20} parent=0 // pred_check
    _
  $region19: #{deeplab_forward.20} parent=0 // pred_check_branch
    %268 = sbr.rel (0) target = $region21
  $region20: #{deeplab_forward.20} parent=0 // pred_region
    _
  $region21: #{deeplab_forward.20} parent=0 // pred_fallthru
    _

// kernel: deeplab_forward.23
$region0: #{deeplab_forward.23}
  #allocation0 [shape = 'u32[]', space=smem, size = 0x4, offset = 0x4, fixed_abs, tag = 'smem constant byte address 0x4 - core index']
  #allocation1 [shape = 'u32[144,128]{1,0:T(1,128)}', space=vmem, size = 0x12000, scoped, tag = 'internal scratch']
  %s0 = inlined_call_operand.vmem [shape: bf16[8,576], index: 0, kind: input, shape index: {}]
  %s1 = inlined_call_operand.vmem [shape: bf16[576,128], index: 1, kind: input, shape index: {}]
  %s2 = inlined_call_operand.vmem [shape: f32[1,128], index: 2, kind: input, shape index: {}]
  %s3 = inlined_call_operand.vmem [shape: bf16[8,128], index: 3, kind: output, shape index: {}]
  %s4 = sld [smem:[#allocation0]]
  $region22: #{deeplab_forward.23} parent=0
    _
  %s6 = ssub.s32 1, %s4
  %s7 = scalar_select 0, %s6, %s4
  // Predicated region
  $region2: #{deeplab_forward.23} parent=0 // pred_check
    _
  $region3: #{deeplab_forward.23} parent=0 // pred_check_branch
    %9 = sbr.rel (0) target = $region5
  $region4: #{deeplab_forward.23} parent=0 // pred_region
    _
  $region5: #{deeplab_forward.23} parent=0 // pred_fallthru
    _
  // Predicated region
  $region6: #{deeplab_forward.23} parent=0 // pred_check
    _
  $region7: #{deeplab_forward.23} parent=0 // pred_check_branch
    %11 = sbr.rel (0) target = $region9
  $region8: #{deeplab_forward.23} parent=0 // pred_region
    _
  $region9: #{deeplab_forward.23} parent=0 // pred_fallthru
    _
  // Predicated region
  $region10: #{deeplab_forward.23} parent=0 // pred_check
    _
  $region11: #{deeplab_forward.23} parent=0 // pred_check_branch
    %13 = sbr.rel (0) target = $region13
  $region12: #{deeplab_forward.23} parent=0 // pred_region
    _
  $region13: #{deeplab_forward.23} parent=0 // pred_fallthru
    _
  %v15 = vld [vmem:[%s0] sm:$0xff]
  %v16 = vld [vmem:[%s0 + $0x8] sm:$0xff]
  %v17 = vld [vmem:[%s0 + $0x10] sm:$0xf]
  %v18 = vld [vmem:[%s1] sm:$0xf]
  %v19 = vld [vmem:[%s1 + $0x4] sm:$0xf]
  %v20 = vld [vmem:[%s1 + $0x8] sm:$0xf]
  %v21 = vld [vmem:[%s1 + $0xc] sm:$0xf]
  %v22 = vld [vmem:[%s1 + $0x10] sm:$0xf]
  %v23 = vld [vmem:[%s1 + $0x14] sm:$0xf]
  %v24 = vld [vmem:[%s1 + $0x18] sm:$0xf]
  %v25 = vld [vmem:[%s1 + $0x1c] sm:$0xf]
  %v26 = vld [vmem:[%s1 + $0x20] sm:$0xf]
  %v27 = vld [vmem:[%s1 + $0x24] sm:$0xf]
  %v28 = vld [vmem:[%s1 + $0x28] sm:$0xf]
  %v29 = vld [vmem:[%s1 + $0x2c] sm:$0xf]
  %v30 = vld [vmem:[%s1 + $0x30] sm:$0xf]
  %v31 = vld [vmem:[%s1 + $0x34] sm:$0xf]
  %v32 = vld [vmem:[%s1 + $0x38] sm:$0xf]
  %v33 = vld [vmem:[%s1 + $0x3c] sm:$0xf]
  %v34 = vld [vmem:[%s1 + $0x40] sm:$0xf]
  %v35 = vld [vmem:[%s1 + $0x44] sm:$0xf]
  %v36 = vld [vmem:[%s1 + $0x48] sm:$0xf]
  %v37 = vld [vmem:[%s1 + $0x4c] sm:$0xf]
  %v38 = vld [vmem:[%s1 + $0x50] sm:$0xf]
  %v39 = vld [vmem:[%s1 + $0x54] sm:$0xf]
  %v40 = vld [vmem:[%s1 + $0x58] sm:$0xf]
  %v41 = vld [vmem:[%s1 + $0x5c] sm:$0xf]
  %v42 = vld [vmem:[%s1 + $0x60] sm:$0xf]
  %v43 = vld [vmem:[%s1 + $0x64] sm:$0xf]
  %v44 = vld [vmem:[%s1 + $0x68] sm:$0xf]
  %v45 = vld [vmem:[%s1 + $0x6c] sm:$0xf]
  %v46 = vld [vmem:[%s1 + $0x70] sm:$0xf]
  %v47 = vld [vmem:[%s1 + $0x74] sm:$0xf]
  %v48 = vld [vmem:[%s1 + $0x78] sm:$0xf]
  %v49 = vld [vmem:[%s1 + $0x7c] sm:$0xf]
  %v50 = vld [vmem:[%s1 + $0x80] sm:$0xf]
  %v51 = vld [vmem:[%s1 + $0x84] sm:$0xf]
  %v52 = vld [vmem:[%s1 + $0x88] sm:$0xf]
  %v53 = vld [vmem:[%s1 + $0x8c] sm:$0xf]
  %v54 = vld [vmem:[%s1 + $0x90] sm:$0xf]
  %v55 = vld [vmem:[%s1 + $0x94] sm:$0xf]
  %v56 = vld [vmem:[%s1 + $0x98] sm:$0xf]
  %v57 = vld [vmem:[%s1 + $0x9c] sm:$0xf]
  %v58 = vld [vmem:[%s1 + $0xa0] sm:$0xf]
  %v59 = vld [vmem:[%s1 + $0xa4] sm:$0xf]
  %v60 = vld [vmem:[%s1 + $0xa8] sm:$0xf]
  %v61 = vld [vmem:[%s1 + $0xac] sm:$0xf]
  %v62 = vld [vmem:[%s1 + $0xb0] sm:$0xf]
  %v63 = vld [vmem:[%s1 + $0xb4] sm:$0xf]
  %v64 = vld [vmem:[%s1 + $0xb8] sm:$0xf]
  %v65 = vld [vmem:[%s1 + $0xbc] sm:$0xf]
  %v66 = vld [vmem:[%s1 + $0xc0] sm:$0xf]
  %v67 = vld [vmem:[%s1 + $0xc4] sm:$0xf]
  %v68 = vld [vmem:[%s1 + $0xc8] sm:$0xf]
  %v69 = vld [vmem:[%s1 + $0xcc] sm:$0xf]
  %v70 = vld [vmem:[%s1 + $0xd0] sm:$0xf]
  %v71 = vld [vmem:[%s1 + $0xd4] sm:$0xf]
  %v72 = vld [vmem:[%s1 + $0xd8] sm:$0xf]
  %v73 = vld [vmem:[%s1 + $0xdc] sm:$0xf]
  %v74 = vld [vmem:[%s1 + $0xe0] sm:$0xf]
  %v75 = vld [vmem:[%s1 + $0xe4] sm:$0xf]
  %v76 = vld [vmem:[%s1 + $0xe8] sm:$0xf]
  %v77 = vld [vmem:[%s1 + $0xec] sm:$0xf]
  %v78 = vld [vmem:[%s1 + $0xf0] sm:$0xf]
  %v79 = vld [vmem:[%s1 + $0xf4] sm:$0xf]
  %v80 = vld [vmem:[%s1 + $0xf8] sm:$0xf]
  %v81 = vld [vmem:[%s1 + $0xfc] sm:$0xf]
  %v82 = vld [vmem:[%s1 + $0x100] sm:$0xf]
  %v83 = vld [vmem:[%s1 + $0x104] sm:$0xf]
  %v84 = vld [vmem:[%s1 + $0x108] sm:$0xf]
  %v85 = vld [vmem:[%s1 + $0x10c] sm:$0xf]
  %v86 = vld [vmem:[%s1 + $0x110] sm:$0xf]
  %v87 = vld [vmem:[%s1 + $0x114] sm:$0xf]
  %v88 = vld [vmem:[%s1 + $0x118] sm:$0xf]
  %v89 = vld [vmem:[%s1 + $0x11c] sm:$0xf]
  %v90 = vld [vmem:[%s2] sm:$0x1]
  %v92 = vlaneseq
  %v93 = vshrl.u32 %v92, 7
  %v94 = vsub.s32 0, %v93
  %v95 = vrot.slane %v90, %v94
  %v100 = vunpack.c.l.b16 %v15
  %v101 = vunpack.c.h.b16 %v15
  %v102 = vunpack.c.l.b16 %v16
  %v103 = vunpack.c.h.b16 %v16
  %v104 = vunpack.c.l.b16 %v17
  %v105 = vpack.c.b16 %v100, %v100
  %v106 = vpack.c.b16 %v101, %v101
  %v107 = vpack.c.b16 %v102, %v102
  %v108 = vpack.c.b16 %v103, %v103
  %v109 = vpack.c.b16 %v104, %v104
  %v186 = vunpack.c.l.b16 %v18
  %v187 = vunpack.c.l.b16 %v19
  %v188 = vunpack.c.l.b16 %v20
  %v189 = vunpack.c.l.b16 %v21
  %v190 = vunpack.c.l.b16 %v22
  %v191 = vunpack.c.l.b16 %v23
  %v192 = vunpack.c.l.b16 %v24
  %v193 = vunpack.c.l.b16 %v25
  %v194 = vunpack.c.l.b16 %v26
  %v195 = vunpack.c.l.b16 %v27
  %v196 = vunpack.c.l.b16 %v28
  %v197 = vunpack.c.l.b16 %v29
  %v198 = vunpack.c.l.b16 %v30
  %v199 = vunpack.c.l.b16 %v31
  %v200 = vunpack.c.l.b16 %v32
  %v201 = vunpack.c.l.b16 %v33
  %v202 = vunpack.c.l.b16 %v34
  %v203 = vunpack.c.l.b16 %v35
  %v204 = vunpack.c.l.b16 %v36
  %v205 = vunpack.c.l.b16 %v37
  %v206 = vunpack.c.l.b16 %v38
  %v207 = vunpack.c.l.b16 %v39
  %v208 = vunpack.c.l.b16 %v40
  %v209 = vunpack.c.l.b16 %v41
  %v210 = vunpack.c.l.b16 %v42
  %v211 = vunpack.c.l.b16 %v43
  %v212 = vunpack.c.l.b16 %v44
  %v213 = vunpack.c.l.b16 %v45
  %v214 = vunpack.c.l.b16 %v46
  %v215 = vunpack.c.l.b16 %v47
  %v216 = vunpack.c.l.b16 %v48
  %v217 = vunpack.c.l.b16 %v49
  %v218 = vunpack.c.l.b16 %v50
  %v219 = vunpack.c.l.b16 %v51
  %v220 = vunpack.c.l.b16 %v52
  %v221 = vunpack.c.l.b16 %v53
  %v222 = vunpack.c.l.b16 %v54
  %v223 = vunpack.c.l.b16 %v55
  %v224 = vunpack.c.l.b16 %v56
  %v225 = vunpack.c.l.b16 %v57
  %v226 = vunpack.c.l.b16 %v58
  %v227 = vunpack.c.l.b16 %v59
  %v228 = vunpack.c.l.b16 %v60
  %v229 = vunpack.c.l.b16 %v61
  %v230 = vunpack.c.l.b16 %v62
  %v231 = vunpack.c.l.b16 %v63
  %v232 = vunpack.c.l.b16 %v64
  %v233 = vunpack.c.l.b16 %v65
  %v234 = vunpack.c.l.b16 %v66
  %v235 = vunpack.c.l.b16 %v67
  %v236 = vunpack.c.l.b16 %v68
  %v237 = vunpack.c.l.b16 %v69
  %v238 = vunpack.c.l.b16 %v70
  %v239 = vunpack.c.l.b16 %v71
  %v240 = vunpack.c.l.b16 %v72
  %v241 = vunpack.c.l.b16 %v73
  %v242 = vunpack.c.l.b16 %v74
  %v243 = vunpack.c.l.b16 %v75
  %v244 = vunpack.c.l.b16 %v76
  %v245 = vunpack.c.l.b16 %v77
  %v246 = vunpack.c.l.b16 %v78
  %v247 = vunpack.c.l.b16 %v79
  %v248 = vunpack.c.l.b16 %v80
  %v249 = vunpack.c.l.b16 %v81
  %v250 = vunpack.c.l.b16 %v82
  %v251 = vunpack.c.l.b16 %v83
  %v252 = vunpack.c.l.b16 %v84
  %v253 = vunpack.c.l.b16 %v85
  %v254 = vunpack.c.l.b16 %v86
  %v255 = vunpack.c.l.b16 %v87
  %v256 = vunpack.c.l.b16 %v88
  %v257 = vunpack.c.l.b16 %v89
  %v258 = vpack.c.b16 %v187, %v186
  %v259 = vpack.c.b16 %v189, %v188
  %v260 = vpack.c.b16 %v191, %v190
  %v261 = vpack.c.b16 %v193, %v192
  %v262 = vpack.c.b16 %v195, %v194
  %v263 = vpack.c.b16 %v197, %v196
  %v264 = vpack.c.b16 %v199, %v198
  %v265 = vpack.c.b16 %v201, %v200
  %v266 = vpack.c.b16 %v203, %v202
  %v267 = vpack.c.b16 %v205, %v204
  %v268 = vpack.c.b16 %v207, %v206
  %v269 = vpack.c.b16 %v209, %v208
  %v270 = vpack.c.b16 %v211, %v210
  %v271 = vpack.c.b16 %v213, %v212
  %v272 = vpack.c.b16 %v215, %v214
  %v273 = vpack.c.b16 %v217, %v216
  %v274 = vpack.c.b16 %v219, %v218
  %v275 = vpack.c.b16 %v221, %v220
  %v276 = vpack.c.b16 %v223, %v222
  %v277 = vpack.c.b16 %v225, %v224
  %v278 = vpack.c.b16 %v227, %v226
  %v279 = vpack.c.b16 %v229, %v228
  %v280 = vpack.c.b16 %v231, %v230
  %v281 = vpack.c.b16 %v233, %v232
  %v282 = vpack.c.b16 %v235, %v234
  %v283 = vpack.c.b16 %v237, %v236
  %v284 = vpack.c.b16 %v239, %v238
  %v285 = vpack.c.b16 %v241, %v240
  %v286 = vpack.c.b16 %v243, %v242
  %v287 = vpack.c.b16 %v245, %v244
  %v288 = vpack.c.b16 %v247, %v246
  %v289 = vpack.c.b16 %v249, %v248
  %v290 = vpack.c.b16 %v251, %v250
  %v291 = vpack.c.b16 %v253, %v252
  %v292 = vpack.c.b16 %v255, %v254
  %v293 = vpack.c.b16 %v257, %v256
  %vm330 = vcmask 523264
  %v332 = vsel %vm330, %v109, 0
  %334 = vmatprep.subr.bf16.mxu0 0
  %335 = vmatpush1.bf16.msra.mxu0 %v265
  %336 = vmatprep.subr.bf16.mxu0 0
  %337 = vmatpush1.bf16.msra.mxu0 %v264
  %338 = vmatprep.subr.bf16.mxu0 0
  %339 = vmatpush1.bf16.msra.mxu0 %v263
  %340 = vmatprep.subr.bf16.mxu0 0
  %341 = vmatpush1.bf16.msra.mxu0 %v262
  %342 = vmatprep.subr.bf16.mxu0 0
  %343 = vmatpush1.bf16.msra.mxu0 %v261
  %344 = vmatprep.subr.bf16.mxu0 0
  %345 = vmatpush1.bf16.msra.mxu0 %v260
  %346 = vmatprep.subr.bf16.mxu0 0
  %347 = vmatpush1.bf16.msra.mxu0 %v259
  %348 = vmatprep.subr.bf16.mxu0 0
  %349 = vmatpush1.bf16.msra.mxu0 %v258
  %350 = vmatprep.subr.bf16.mxu0 0
  %351 = vmatpush2.bf16.msra.mxu0 %v273
  %352 = vmatprep.subr.bf16.mxu0 0
  %353 = vmatpush2.bf16.msra.mxu0 %v272
  %354 = vmatprep.subr.bf16.mxu0 0
  %355 = vmatpush2.bf16.msra.mxu0 %v271
  %356 = vmatprep.subr.bf16.mxu0 0
  %357 = vmatpush2.bf16.msra.mxu0 %v270
  %358 = vmatprep.subr.bf16.mxu0 0
  %359 = vmatpush2.bf16.msra.mxu0 %v269
  %360 = vmatprep.subr.bf16.mxu0 0
  %361 = vmatpush2.bf16.msra.mxu0 %v268
  %362 = vmatprep.subr.bf16.mxu0 0
  %363 = vmatpush2.bf16.msra.mxu0 %v267
  %364 = vmatprep.subr.bf16.mxu0 0
  %365 = vmatpush2.bf16.msra.mxu0 %v266
  %366 = vmatprep.mubr.bf16.mxu0 %v106
  %367 = vmatmul.mubr.bf16.gmra.mxu0 %v105
  %v368 = vpop.f32.mrf.mxu0
  %v369 = vadd.f32 %v95, %v368
  %v370 = vpop.f32.mrf.mxu0
  %v371 = vpop.f32.mrf.mxu0
  %v372 = vpop.f32.mrf.mxu0
  %373 = vdwg.mxu0
  %374 = vmatprep.subr.bf16.mxu0 0
  %375 = vmatpush1.bf16.msra.mxu0 %v281
  %376 = vmatprep.subr.bf16.mxu0 0
  %377 = vmatpush1.bf16.msra.mxu0 %v280
  %378 = vmatprep.subr.bf16.mxu0 0
  %379 = vmatpush1.bf16.msra.mxu0 %v279
  %380 = vmatprep.subr.bf16.mxu0 0
  %381 = vmatpush1.bf16.msra.mxu0 %v278
  %382 = vmatprep.subr.bf16.mxu0 0
  %383 = vmatpush1.bf16.msra.mxu0 %v277
  %384 = vmatprep.subr.bf16.mxu0 0
  %385 = vmatpush1.bf16.msra.mxu0 %v276
  %386 = vmatprep.subr.bf16.mxu0 0
  %387 = vmatpush1.bf16.msra.mxu0 %v275
  %388 = vmatprep.subr.bf16.mxu0 0
  %389 = vmatpush1.bf16.msra.mxu0 %v274
  %390 = vmatprep.subr.bf16.mxu0 0
  %391 = vmatpush2.bf16.msra.mxu0 %v289
  %392 = vmatprep.subr.bf16.mxu0 0
  %393 = vmatpush2.bf16.msra.mxu0 %v288
  %394 = vmatprep.subr.bf16.mxu0 0
  %395 = vmatpush2.bf16.msra.mxu0 %v287
  %396 = vmatprep.subr.bf16.mxu0 0
  %397 = vmatpush2.bf16.msra.mxu0 %v286
  %398 = vmatprep.subr.bf16.mxu0 0
  %399 = vmatpush2.bf16.msra.mxu0 %v285
  %400 = vmatprep.subr.bf16.mxu0 0
  %401 = vmatpush2.bf16.msra.mxu0 %v284
  %402 = vmatprep.subr.bf16.mxu0 0
  %403 = vmatpush2.bf16.msra.mxu0 %v283
  %404 = vmatprep.subr.bf16.mxu0 0
  %405 = vmatpush2.bf16.msra.mxu0 %v282
  %406 = vmatprep.mubr.bf16.mxu0 %v108
  %407 = vmatmul.mubr.bf16.gmra.mxu0 %v107
  %v408 = vpop.f32.mrf.mxu0
  %v409 = vadd.f32 %v369, %v408
  %v410 = vpop.f32.mrf.mxu0
  %v411 = vpop.f32.mrf.mxu0
  %v412 = vpop.f32.mrf.mxu0
  %413 = vdwg.mxu0
  %414 = vmatprep.subr.bf16.mxu0 0
  %415 = vmatpush1.bf16.msra.mxu0 0
  %416 = vmatprep.subr.bf16.mxu0 0
  %417 = vmatpush1.bf16.msra.mxu0 0
  %418 = vmatprep.subr.bf16.mxu0 0
  %419 = vmatpush1.bf16.msra.mxu0 0
  %420 = vmatprep.subr.bf16.mxu0 0
  %421 = vmatpush1.bf16.msra.mxu0 0
  %422 = vmatprep.subr.bf16.mxu0 0
  %423 = vmatpush1.bf16.msra.mxu0 %v293
  %424 = vmatprep.subr.bf16.mxu0 0
  %425 = vmatpush1.bf16.msra.mxu0 %v292
  %426 = vmatprep.subr.bf16.mxu0 0
  %427 = vmatpush1.bf16.msra.mxu0 %v291
  %428 = vmatprep.subr.bf16.mxu0 0
  %429 = vmatpush1.bf16.msra.mxu0 %v290
  %430 = vmatprep.subr.bf16.mxu0 0
  %431 = vmatpush2.bf16.msra.mxu0 0
  %432 = vmatprep.subr.bf16.mxu0 0
  %433 = vmatpush2.bf16.msra.mxu0 0
  %434 = vmatprep.subr.bf16.mxu0 0
  %435 = vmatpush2.bf16.msra.mxu0 0
  %436 = vmatprep.subr.bf16.mxu0 0
  %437 = vmatpush2.bf16.msra.mxu0 0
  %438 = vmatprep.subr.bf16.mxu0 0
  %439 = vmatpush2.bf16.msra.mxu0 0
  %440 = vmatprep.subr.bf16.mxu0 0
  %441 = vmatpush2.bf16.msra.mxu0 0
  %442 = vmatprep.subr.bf16.mxu0 0
  %443 = vmatpush2.bf16.msra.mxu0 0
  %444 = vmatprep.subr.bf16.mxu0 0
  %445 = vmatpush2.bf16.msra.mxu0 0
  %446 = vmatprep.mubr.bf16.mxu0 0
  %447 = vmatmul.mubr.bf16.gmra.mxu0 %v332
  %v448 = vpop.f32.mrf.mxu0
  %v449 = vadd.f32 %v409, %v448
  %v450 = vpop.f32.mrf.mxu0
  %v451 = vpop.f32.mrf.mxu0
  %v452 = vpop.f32.mrf.mxu0
  %453 = vdwg.mxu0
  %v454 = vmax.f32 %v449, 0.0
  %v455 = vpack.c.bf16 %v454, %v454
  %456 = vst [vmem:[%s3] sm:$0xf] %v455
  // Predicated region
  $region14: #{deeplab_forward.23} parent=0 // pred_check
    _
  $region15: #{deeplab_forward.23} parent=0 // pred_check_branch
    %458 = sbr.rel (0) target = $region17
  $region16: #{deeplab_forward.23} parent=0 // pred_region
    _
  $region17: #{deeplab_forward.23} parent=0 // pred_fallthru
    _
  // Predicated region
  $region18: #{deeplab_forward.23} parent=0 // pred_check
    _
  $region19: #{deeplab_forward.23} parent=0 // pred_check_branch
    %460 = sbr.rel (0) target = $region21
  $region20: #{deeplab_forward.23} parent=0 // pred_region
    _
  $region21: #{deeplab_forward.23} parent=0 // pred_fallthru
    _

// kernel: deeplab_forward.26
$region0: #{deeplab_forward.26}
  #allocation0 [shape = 'u32[]', space=smem, size = 0x4, offset = 0x4, fixed_abs, tag = 'smem constant byte address 0x4 - core index']
  #allocation1 [shape = 'u32[144,128]{1,0:T(1,128)}', space=vmem, size = 0x12000, scoped, tag = 'internal scratch']
  %s0 = inlined_call_operand.vmem [shape: bf16[8,256], index: 0, kind: input, shape index: {}]
  %s1 = inlined_call_operand.vmem [shape: bf16[256,128], index: 1, kind: input, shape index: {}]
  %s2 = inlined_call_operand.vmem [shape: f32[1,128], index: 2, kind: input, shape index: {}]
  %s3 = inlined_call_operand.vmem [shape: bf16[8,128], index: 3, kind: output, shape index: {}]
  %s4 = sld [smem:[#allocation0]]
  $region22: #{deeplab_forward.26} parent=0
    _
  %s6 = ssub.s32 1, %s4
  %s7 = scalar_select 0, %s6, %s4
  // Predicated region
  $region2: #{deeplab_forward.26} parent=0 // pred_check
    _
  $region3: #{deeplab_forward.26} parent=0 // pred_check_branch
    %9 = sbr.rel (0) target = $region5
  $region4: #{deeplab_forward.26} parent=0 // pred_region
    _
  $region5: #{deeplab_forward.26} parent=0 // pred_fallthru
    _
  // Predicated region
  $region6: #{deeplab_forward.26} parent=0 // pred_check
    _
  $region7: #{deeplab_forward.26} parent=0 // pred_check_branch
    %11 = sbr.rel (0) target = $region9
  $region8: #{deeplab_forward.26} parent=0 // pred_region
    _
  $region9: #{deeplab_forward.26} parent=0 // pred_fallthru
    _
  // Predicated region
  $region10: #{deeplab_forward.26} parent=0 // pred_check
    _
  $region11: #{deeplab_forward.26} parent=0 // pred_check_branch
    %13 = sbr.rel (0) target = $region13
  $region12: #{deeplab_forward.26} parent=0 // pred_region
    _
  $region13: #{deeplab_forward.26} parent=0 // pred_fallthru
    _
  %v15 = vld [vmem:[%s0] sm:$0xff]
  %v16 = vld [vmem:[%s1] sm:$0xf]
  %v17 = vld [vmem:[%s1 + $0x4] sm:$0xf]
  %v18 = vld [vmem:[%s1 + $0x8] sm:$0xf]
  %v19 = vld [vmem:[%s1 + $0xc] sm:$0xf]
  %v20 = vld [vmem:[%s1 + $0x10] sm:$0xf]
  %v21 = vld [vmem:[%s1 + $0x14] sm:$0xf]
  %v22 = vld [vmem:[%s1 + $0x18] sm:$0xf]
  %v23 = vld [vmem:[%s1 + $0x1c] sm:$0xf]
  %v24 = vld [vmem:[%s1 + $0x20] sm:$0xf]
  %v25 = vld [vmem:[%s1 + $0x24] sm:$0xf]
  %v26 = vld [vmem:[%s1 + $0x28] sm:$0xf]
  %v27 = vld [vmem:[%s1 + $0x2c] sm:$0xf]
  %v28 = vld [vmem:[%s1 + $0x30] sm:$0xf]
  %v29 = vld [vmem:[%s1 + $0x34] sm:$0xf]
  %v30 = vld [vmem:[%s1 + $0x38] sm:$0xf]
  %v31 = vld [vmem:[%s1 + $0x3c] sm:$0xf]
  %v32 = vld [vmem:[%s1 + $0x40] sm:$0xf]
  %v33 = vld [vmem:[%s1 + $0x44] sm:$0xf]
  %v34 = vld [vmem:[%s1 + $0x48] sm:$0xf]
  %v35 = vld [vmem:[%s1 + $0x4c] sm:$0xf]
  %v36 = vld [vmem:[%s1 + $0x50] sm:$0xf]
  %v37 = vld [vmem:[%s1 + $0x54] sm:$0xf]
  %v38 = vld [vmem:[%s1 + $0x58] sm:$0xf]
  %v39 = vld [vmem:[%s1 + $0x5c] sm:$0xf]
  %v40 = vld [vmem:[%s1 + $0x60] sm:$0xf]
  %v41 = vld [vmem:[%s1 + $0x64] sm:$0xf]
  %v42 = vld [vmem:[%s1 + $0x68] sm:$0xf]
  %v43 = vld [vmem:[%s1 + $0x6c] sm:$0xf]
  %v44 = vld [vmem:[%s1 + $0x70] sm:$0xf]
  %v45 = vld [vmem:[%s1 + $0x74] sm:$0xf]
  %v46 = vld [vmem:[%s1 + $0x78] sm:$0xf]
  %v47 = vld [vmem:[%s1 + $0x7c] sm:$0xf]
  %v48 = vld [vmem:[%s2] sm:$0x1]
  %v50 = vlaneseq
  %v51 = vshrl.u32 %v50, 7
  %v52 = vsub.s32 0, %v51
  %v53 = vrot.slane %v48, %v52
  %v56 = vunpack.c.l.b16 %v15
  %v57 = vunpack.c.h.b16 %v15
  %v58 = vpack.c.b16 %v56, %v56
  %v59 = vpack.c.b16 %v57, %v57
  %v94 = vunpack.c.l.b16 %v16
  %v95 = vunpack.c.l.b16 %v17
  %v96 = vunpack.c.l.b16 %v18
  %v97 = vunpack.c.l.b16 %v19
  %v98 = vunpack.c.l.b16 %v20
  %v99 = vunpack.c.l.b16 %v21
  %v100 = vunpack.c.l.b16 %v22
  %v101 = vunpack.c.l.b16 %v23
  %v102 = vunpack.c.l.b16 %v24
  %v103 = vunpack.c.l.b16 %v25
  %v104 = vunpack.c.l.b16 %v26
  %v105 = vunpack.c.l.b16 %v27
  %v106 = vunpack.c.l.b16 %v28
  %v107 = vunpack.c.l.b16 %v29
  %v108 = vunpack.c.l.b16 %v30
  %v109 = vunpack.c.l.b16 %v31
  %v110 = vunpack.c.l.b16 %v32
  %v111 = vunpack.c.l.b16 %v33
  %v112 = vunpack.c.l.b16 %v34
  %v113 = vunpack.c.l.b16 %v35
  %v114 = vunpack.c.l.b16 %v36
  %v115 = vunpack.c.l.b16 %v37
  %v116 = vunpack.c.l.b16 %v38
  %v117 = vunpack.c.l.b16 %v39
  %v118 = vunpack.c.l.b16 %v40
  %v119 = vunpack.c.l.b16 %v41
  %v120 = vunpack.c.l.b16 %v42
  %v121 = vunpack.c.l.b16 %v43
  %v122 = vunpack.c.l.b16 %v44
  %v123 = vunpack.c.l.b16 %v45
  %v124 = vunpack.c.l.b16 %v46
  %v125 = vunpack.c.l.b16 %v47
  %v126 = vpack.c.b16 %v95, %v94
  %v127 = vpack.c.b16 %v97, %v96
  %v128 = vpack.c.b16 %v99, %v98
  %v129 = vpack.c.b16 %v101, %v100
  %v130 = vpack.c.b16 %v103, %v102
  %v131 = vpack.c.b16 %v105, %v104
  %v132 = vpack.c.b16 %v107, %v106
  %v133 = vpack.c.b16 %v109, %v108
  %v134 = vpack.c.b16 %v111, %v110
  %v135 = vpack.c.b16 %v113, %v112
  %v136 = vpack.c.b16 %v115, %v114
  %v137 = vpack.c.b16 %v117, %v116
  %v138 = vpack.c.b16 %v119, %v118
  %v139 = vpack.c.b16 %v121, %v120
  %v140 = vpack.c.b16 %v123, %v122
  %v141 = vpack.c.b16 %v125, %v124
  %158 = vmatprep.subr.bf16.mxu0 0
  %159 = vmatpush1.bf16.msra.mxu0 %v133
  %160 = vmatprep.subr.bf16.mxu0 0
  %161 = vmatpush1.bf16.msra.mxu0 %v132
  %162 = vmatprep.subr.bf16.mxu0 0
  %163 = vmatpush1.bf16.msra.mxu0 %v131
  %164 = vmatprep.subr.bf16.mxu0 0
  %165 = vmatpush1.bf16.msra.mxu0 %v130
  %166 = vmatprep.subr.bf16.mxu0 0
  %167 = vmatpush1.bf16.msra.mxu0 %v129
  %168 = vmatprep.subr.bf16.mxu0 0
  %169 = vmatpush1.bf16.msra.mxu0 %v128
  %170 = vmatprep.subr.bf16.mxu0 0
  %171 = vmatpush1.bf16.msra.mxu0 %v127
  %172 = vmatprep.subr.bf16.mxu0 0
  %173 = vmatpush1.bf16.msra.mxu0 %v126
  %174 = vmatprep.subr.bf16.mxu0 0
  %175 = vmatpush2.bf16.msra.mxu0 %v141
  %176 = vmatprep.subr.bf16.mxu0 0
  %177 = vmatpush2.bf16.msra.mxu0 %v140
  %178 = vmatprep.subr.bf16.mxu0 0
  %179 = vmatpush2.bf16.msra.mxu0 %v139
  %180 = vmatprep.subr.bf16.mxu0 0
  %181 = vmatpush2.bf16.msra.mxu0 %v138
  %182 = vmatprep.subr.bf16.mxu0 0
  %183 = vmatpush2.bf16.msra.mxu0 %v137
  %184 = vmatprep.subr.bf16.mxu0 0
  %185 = vmatpush2.bf16.msra.mxu0 %v136
  %186 = vmatprep.subr.bf16.mxu0 0
  %187 = vmatpush2.bf16.msra.mxu0 %v135
  %188 = vmatprep.subr.bf16.mxu0 0
  %189 = vmatpush2.bf16.msra.mxu0 %v134
  %190 = vmatprep.mubr.bf16.mxu0 %v59
  %191 = vmatmul.mubr.bf16.gmra.mxu0 %v58
  %v192 = vpop.f32.mrf.mxu0
  %v193 = vadd.f32 %v53, %v192
  %v194 = vpop.f32.mrf.mxu0
  %v195 = vpop.f32.mrf.mxu0
  %v196 = vpop.f32.mrf.mxu0
  %197 = vdwg.mxu0
  %v198 = vmax.f32 %v193, 0.0
  %v199 = vpack.c.bf16 %v198, %v198
  %200 = vst [vmem:[%s3] sm:$0xf] %v199
  // Predicated region
  $region14: #{deeplab_forward.26} parent=0 // pred_check
    _
  $region15: #{deeplab_forward.26} parent=0 // pred_check_branch
    %202 = sbr.rel (0) target = $region17
  $region16: #{deeplab_forward.26} parent=0 // pred_region
    _
  $region17: #{deeplab_forward.26} parent=0 // pred_fallthru
    _
  // Predicated region
  $region18: #{deeplab_forward.26} parent=0 // pred_check
    _
  $region19: #{deeplab_forward.26} parent=0 // pred_check_branch
    %204 = sbr.rel (0) target = $region21
  $region20: #{deeplab_forward.26} parent=0 // pred_region
    _
  $region21: #{deeplab_forward.26} parent=0 // pred_fallthru
    _

// kernel: deeplab_forward.22
$region0: #{deeplab_forward.22}
  #allocation0 [shape = 'u32[]', space=smem, size = 0x4, offset = 0x4, fixed_abs, tag = 'smem constant byte address 0x4 - core index']
  #allocation1 [shape = 'u32[144,128]{1,0:T(1,128)}', space=vmem, size = 0x12000, scoped, tag = 'internal scratch']
  %s0 = inlined_call_operand.vmem [shape: bf16[8,64], index: 0, kind: input, shape index: {}]
  %s1 = inlined_call_operand.vmem [shape: bf16[64,128], index: 1, kind: input, shape index: {}]
  %s2 = inlined_call_operand.vmem [shape: f32[1,128], index: 2, kind: input, shape index: {}]
  %s3 = inlined_call_operand.vmem [shape: bf16[8,128], index: 3, kind: output, shape index: {}]
  %s4 = sld [smem:[#allocation0]]
  $region22: #{deeplab_forward.22} parent=0
    _
  %s6 = ssub.s32 1, %s4
  %s7 = scalar_select 0, %s6, %s4
  // Predicated region
  $region2: #{deeplab_forward.22} parent=0 // pred_check
    _
  $region3: #{deeplab_forward.22} parent=0 // pred_check_branch
    %9 = sbr.rel (0) target = $region5
  $region4: #{deeplab_forward.22} parent=0 // pred_region
    _
  $region5: #{deeplab_forward.22} parent=0 // pred_fallthru
    _
  // Predicated region
  $region6: #{deeplab_forward.22} parent=0 // pred_check
    _
  $region7: #{deeplab_forward.22} parent=0 // pred_check_branch
    %11 = sbr.rel (0) target = $region9
  $region8: #{deeplab_forward.22} parent=0 // pred_region
    _
  $region9: #{deeplab_forward.22} parent=0 // pred_fallthru
    _
  // Predicated region
  $region10: #{deeplab_forward.22} parent=0 // pred_check
    _
  $region11: #{deeplab_forward.22} parent=0 // pred_check_branch
    %13 = sbr.rel (0) target = $region13
  $region12: #{deeplab_forward.22} parent=0 // pred_region
    _
  $region13: #{deeplab_forward.22} parent=0 // pred_fallthru
    _
  %v15 = vld [vmem:[%s0] sm:$0xf]
  %v16 = vld [vmem:[%s1] sm:$0xf]
  %v17 = vld [vmem:[%s1 + $0x4] sm:$0xf]
  %v18 = vld [vmem:[%s1 + $0x8] sm:$0xf]
  %v19 = vld [vmem:[%s1 + $0xc] sm:$0xf]
  %v20 = vld [vmem:[%s1 + $0x10] sm:$0xf]
  %v21 = vld [vmem:[%s1 + $0x14] sm:$0xf]
  %v22 = vld [vmem:[%s1 + $0x18] sm:$0xf]
  %v23 = vld [vmem:[%s1 + $0x1c] sm:$0xf]
  %v24 = vld [vmem:[%s2] sm:$0x1]
  %v26 = vlaneseq
  %v27 = vshrl.u32 %v26, 7
  %v28 = vsub.s32 0, %v27
  %v29 = vrot.slane %v24, %v28
  %v39 = vunpack.c.l.b16 %v16
  %v40 = vunpack.c.l.b16 %v17
  %v41 = vunpack.c.l.b16 %v18
  %v42 = vunpack.c.l.b16 %v19
  %v43 = vunpack.c.l.b16 %v20
  %v44 = vunpack.c.l.b16 %v21
  %v45 = vunpack.c.l.b16 %v22
  %v46 = vunpack.c.l.b16 %v23
  %v47 = vpack.c.b16 %v40, %v39
  %v48 = vpack.c.b16 %v42, %v41
  %v49 = vpack.c.b16 %v44, %v43
  %v50 = vpack.c.b16 %v46, %v45
  %vm55 = vcmask 523264
  %v57 = vsel %vm55, %v15, 0
  %59 = vmatprep.subr.bf16.mxu0 0
  %60 = vmatpush1.bf16.msra.mxu0 0
  %61 = vmatprep.subr.bf16.mxu0 0
  %62 = vmatpush1.bf16.msra.mxu0 0
  %63 = vmatprep.subr.bf16.mxu0 0
  %64 = vmatpush1.bf16.msra.mxu0 0
  %65 = vmatprep.subr.bf16.mxu0 0
  %66 = vmatpush1.bf16.msra.mxu0 0
  %67 = vmatprep.subr.bf16.mxu0 0
  %68 = vmatpush1.bf16.msra.mxu0 %v50
  %69 = vmatprep.subr.bf16.mxu0 0
  %70 = vmatpush1.bf16.msra.mxu0 %v49
  %71 = vmatprep.subr.bf16.mxu0 0
  %72 = vmatpush1.bf16.msra.mxu0 %v48
  %73 = vmatprep.subr.bf16.mxu0 0
  %74 = vmatpush1.bf16.msra.mxu0 %v47
  %75 = vmatprep.subr.bf16.mxu0 0
  %76 = vmatpush2.bf16.msra.mxu0 0
  %77 = vmatprep.subr.bf16.mxu0 0
  %78 = vmatpush2.bf16.msra.mxu0 0
  %79 = vmatprep.subr.bf16.mxu0 0
  %80 = vmatpush2.bf16.msra.mxu0 0
  %81 = vmatprep.subr.bf16.mxu0 0
  %82 = vmatpush2.bf16.msra.mxu0 0
  %83 = vmatprep.subr.bf16.mxu0 0
  %84 = vmatpush2.bf16.msra.mxu0 0
  %85 = vmatprep.subr.bf16.mxu0 0
  %86 = vmatpush2.bf16.msra.mxu0 0
  %87 = vmatprep.subr.bf16.mxu0 0
  %88 = vmatpush2.bf16.msra.mxu0 0
  %89 = vmatprep.subr.bf16.mxu0 0
  %90 = vmatpush2.bf16.msra.mxu0 0
  %91 = vmatprep.mubr.bf16.mxu0 0
  %92 = vmatmul.mubr.bf16.gmra.mxu0 %v57
  %v93 = vpop.f32.mrf.mxu0
  %v94 = vadd.f32 %v29, %v93
  %v95 = vpop.f32.mrf.mxu0
  %v96 = vpop.f32.mrf.mxu0
  %v97 = vpop.f32.mrf.mxu0
  %98 = vdwg.mxu0
  %v99 = vmax.f32 %v94, 0.0
  %v100 = vpack.c.bf16 %v99, %v99
  %101 = vst [vmem:[%s3] sm:$0xf] %v100
  // Predicated region
  $region14: #{deeplab_forward.22} parent=0 // pred_check
    _
  $region15: #{deeplab_forward.22} parent=0 // pred_check_branch
    %103 = sbr.rel (0) target = $region17
  $region16: #{deeplab_forward.22} parent=0 // pred_region
    _
  $region17: #{deeplab_forward.22} parent=0 // pred_fallthru
    _
  // Predicated region
  $region18: #{deeplab_forward.22} parent=0 // pred_check
    _
  $region19: #{deeplab_forward.22} parent=0 // pred_check_branch
    %105 = sbr.rel (0) target = $region21
  $region20: #{deeplab_forward.22} parent=0 // pred_region
    _
  $region21: #{deeplab_forward.22} parent=0 // pred_fallthru
    _

// kernel: deeplab_forward.27
$region0: #{deeplab_forward.27}
  #allocation0 [shape = 'u32[]', space=smem, size = 0x4, offset = 0x4, fixed_abs, tag = 'smem constant byte address 0x4 - core index']
  #allocation1 [shape = 'u32[144,128]{1,0:T(1,128)}', space=vmem, size = 0x12000, scoped, tag = 'internal scratch']
  %s0 = inlined_call_operand.vmem [shape: bf16[8,160], index: 0, kind: input, shape index: {}]
  %s1 = inlined_call_operand.vmem [shape: bf16[160,128], index: 1, kind: input, shape index: {}]
  %s2 = inlined_call_operand.vmem [shape: f32[1,128], index: 2, kind: input, shape index: {}]
  %s3 = inlined_call_operand.vmem [shape: bf16[8,128], index: 3, kind: output, shape index: {}]
  %s4 = sld [smem:[#allocation0]]
  $region22: #{deeplab_forward.27} parent=0
    _
  %s6 = ssub.s32 1, %s4
  %s7 = scalar_select 0, %s6, %s4
  // Predicated region
  $region2: #{deeplab_forward.27} parent=0 // pred_check
    _
  $region3: #{deeplab_forward.27} parent=0 // pred_check_branch
    %9 = sbr.rel (0) target = $region5
  $region4: #{deeplab_forward.27} parent=0 // pred_region
    _
  $region5: #{deeplab_forward.27} parent=0 // pred_fallthru
    _
  // Predicated region
  $region6: #{deeplab_forward.27} parent=0 // pred_check
    _
  $region7: #{deeplab_forward.27} parent=0 // pred_check_branch
    %11 = sbr.rel (0) target = $region9
  $region8: #{deeplab_forward.27} parent=0 // pred_region
    _
  $region9: #{deeplab_forward.27} parent=0 // pred_fallthru
    _
  // Predicated region
  $region10: #{deeplab_forward.27} parent=0 // pred_check
    _
  $region11: #{deeplab_forward.27} parent=0 // pred_check_branch
    %13 = sbr.rel (0) target = $region13
  $region12: #{deeplab_forward.27} parent=0 // pred_region
    _
  $region13: #{deeplab_forward.27} parent=0 // pred_fallthru
    _
  %v15 = vld [vmem:[%s0] sm:$0xff]
  %v16 = vld [vmem:[%s1] sm:$0xf]
  %v17 = vld [vmem:[%s1 + $0x4] sm:$0xf]
  %v18 = vld [vmem:[%s1 + $0x8] sm:$0xf]
  %v19 = vld [vmem:[%s1 + $0xc] sm:$0xf]
  %v20 = vld [vmem:[%s1 + $0x10] sm:$0xf]
  %v21 = vld [vmem:[%s1 + $0x14] sm:$0xf]
  %v22 = vld [vmem:[%s1 + $0x18] sm:$0xf]
  %v23 = vld [vmem:[%s1 + $0x1c] sm:$0xf]
  %v24 = vld [vmem:[%s1 + $0x20] sm:$0xf]
  %v25 = vld [vmem:[%s1 + $0x24] sm:$0xf]
  %v26 = vld [vmem:[%s1 + $0x28] sm:$0xf]
  %v27 = vld [vmem:[%s1 + $0x2c] sm:$0xf]
  %v28 = vld [vmem:[%s1 + $0x30] sm:$0xf]
  %v29 = vld [vmem:[%s1 + $0x34] sm:$0xf]
  %v30 = vld [vmem:[%s1 + $0x38] sm:$0xf]
  %v31 = vld [vmem:[%s1 + $0x3c] sm:$0xf]
  %v32 = vld [vmem:[%s1 + $0x40] sm:$0xf]
  %v33 = vld [vmem:[%s1 + $0x44] sm:$0xf]
  %v34 = vld [vmem:[%s1 + $0x48] sm:$0xf]
  %v35 = vld [vmem:[%s1 + $0x4c] sm:$0xf]
  %v36 = vld [vmem:[%s2] sm:$0x1]
  %v38 = vlaneseq
  %v39 = vshrl.u32 %v38, 7
  %v40 = vsub.s32 0, %v39
  %v41 = vrot.slane %v36, %v40
  %v44 = vunpack.c.l.b16 %v15
  %v45 = vunpack.c.h.b16 %v15
  %v46 = vpack.c.b16 %v44, %v44
  %v47 = vpack.c.b16 %v45, %v45
  %v69 = vunpack.c.l.b16 %v16
  %v70 = vunpack.c.l.b16 %v17
  %v71 = vunpack.c.l.b16 %v18
  %v72 = vunpack.c.l.b16 %v19
  %v73 = vunpack.c.l.b16 %v20
  %v74 = vunpack.c.l.b16 %v21
  %v75 = vunpack.c.l.b16 %v22
  %v76 = vunpack.c.l.b16 %v23
  %v77 = vunpack.c.l.b16 %v24
  %v78 = vunpack.c.l.b16 %v25
  %v79 = vunpack.c.l.b16 %v26
  %v80 = vunpack.c.l.b16 %v27
  %v81 = vunpack.c.l.b16 %v28
  %v82 = vunpack.c.l.b16 %v29
  %v83 = vunpack.c.l.b16 %v30
  %v84 = vunpack.c.l.b16 %v31
  %v85 = vunpack.c.l.b16 %v32
  %v86 = vunpack.c.l.b16 %v33
  %v87 = vunpack.c.l.b16 %v34
  %v88 = vunpack.c.l.b16 %v35
  %v89 = vpack.c.b16 %v70, %v69
  %v90 = vpack.c.b16 %v72, %v71
  %v91 = vpack.c.b16 %v74, %v73
  %v92 = vpack.c.b16 %v76, %v75
  %v93 = vpack.c.b16 %v78, %v77
  %v94 = vpack.c.b16 %v80, %v79
  %v95 = vpack.c.b16 %v82, %v81
  %v96 = vpack.c.b16 %v84, %v83
  %v97 = vpack.c.b16 %v86, %v85
  %v98 = vpack.c.b16 %v88, %v87
  %vm109 = vcmask 261120
  %v111 = vsel %vm109, %v47, 0
  %113 = vmatprep.subr.bf16.mxu0 0
  %114 = vmatpush1.bf16.msra.mxu0 %v96
  %115 = vmatprep.subr.bf16.mxu0 0
  %116 = vmatpush1.bf16.msra.mxu0 %v95
  %117 = vmatprep.subr.bf16.mxu0 0
  %118 = vmatpush1.bf16.msra.mxu0 %v94
  %119 = vmatprep.subr.bf16.mxu0 0
  %120 = vmatpush1.bf16.msra.mxu0 %v93
  %121 = vmatprep.subr.bf16.mxu0 0
  %122 = vmatpush1.bf16.msra.mxu0 %v92
  %123 = vmatprep.subr.bf16.mxu0 0
  %124 = vmatpush1.bf16.msra.mxu0 %v91
  %125 = vmatprep.subr.bf16.mxu0 0
  %126 = vmatpush1.bf16.msra.mxu0 %v90
  %127 = vmatprep.subr.bf16.mxu0 0
  %128 = vmatpush1.bf16.msra.mxu0 %v89
  %129 = vmatprep.subr.bf16.mxu0 0
  %130 = vmatpush2.bf16.msra.mxu0 0
  %131 = vmatprep.subr.bf16.mxu0 0
  %132 = vmatpush2.bf16.msra.mxu0 0
  %133 = vmatprep.subr.bf16.mxu0 0
  %134 = vmatpush2.bf16.msra.mxu0 0
  %135 = vmatprep.subr.bf16.mxu0 0
  %136 = vmatpush2.bf16.msra.mxu0 0
  %137 = vmatprep.subr.bf16.mxu0 0
  %138 = vmatpush2.bf16.msra.mxu0 0
  %139 = vmatprep.subr.bf16.mxu0 0
  %140 = vmatpush2.bf16.msra.mxu0 0
  %141 = vmatprep.subr.bf16.mxu0 0
  %142 = vmatpush2.bf16.msra.mxu0 %v98
  %143 = vmatprep.subr.bf16.mxu0 0
  %144 = vmatpush2.bf16.msra.mxu0 %v97
  %145 = vmatprep.mubr.bf16.mxu0 %v111
  %146 = vmatmul.mubr.bf16.gmra.mxu0 %v46
  %v147 = vpop.f32.mrf.mxu0
  %v148 = vadd.f32 %v41, %v147
  %v149 = vpop.f32.mrf.mxu0
  %v150 = vpop.f32.mrf.mxu0
  %v151 = vpop.f32.mrf.mxu0
  %152 = vdwg.mxu0
  %v153 = vmax.f32 %v148, 0.0
  %v154 = vpack.c.bf16 %v153, %v153
  %155 = vst [vmem:[%s3] sm:$0xf] %v154
  // Predicated region
  $region14: #{deeplab_forward.27} parent=0 // pred_check
    _
  $region15: #{deeplab_forward.27} parent=0 // pred_check_branch
    %157 = sbr.rel (0) target = $region17
  $region16: #{deeplab_forward.27} parent=0 // pred_region
    _
  $region17: #{deeplab_forward.27} parent=0 // pred_fallthru
    _
  // Predicated region
  $region18: #{deeplab_forward.27} parent=0 // pred_check
    _
  $region19: #{deeplab_forward.27} parent=0 // pred_check_branch
    %159 = sbr.rel (0) target = $region21
  $region20: #{deeplab_forward.27} parent=0 // pred_region
    _
  $region21: #{deeplab_forward.27} parent=0 // pred_fallthru
    _

// kernel: deeplab_forward.29
$region0: #{deeplab_forward.29}
  #allocation0 [shape = 'u32[]', space=smem, size = 0x4, offset = 0x4, fixed_abs, tag = 'smem constant byte address 0x4 - core index']
  #allocation1 [shape = 'u32[144,128]{1,0:T(1,128)}', space=vmem, size = 0x12000, scoped, tag = 'internal scratch']
  %s0 = inlined_call_operand.vmem [shape: bf16[64,16], index: 0, kind: input, shape index: {}]
  %s1 = inlined_call_operand.vmem [shape: bf16[16,128], index: 1, kind: input, shape index: {}]
  %s2 = inlined_call_operand.vmem [shape: f32[1,128], index: 2, kind: input, shape index: {}]
  %s3 = inlined_call_operand.vmem [shape: bf16[64,128], index: 3, kind: output, shape index: {}]
  %s4 = sld [smem:[#allocation0]]
  $region22: #{deeplab_forward.29} parent=0
    _
  %s6 = ssub.s32 1, %s4
  %s7 = scalar_select 0, %s6, %s4
  // Predicated region
  $region2: #{deeplab_forward.29} parent=0 // pred_check
    _
  $region3: #{deeplab_forward.29} parent=0 // pred_check_branch
    %9 = sbr.rel (0) target = $region5
  $region4: #{deeplab_forward.29} parent=0 // pred_region
    _
  $region5: #{deeplab_forward.29} parent=0 // pred_fallthru
    _
  // Predicated region
  $region6: #{deeplab_forward.29} parent=0 // pred_check
    _
  $region7: #{deeplab_forward.29} parent=0 // pred_check_branch
    %11 = sbr.rel (0) target = $region9
  $region8: #{deeplab_forward.29} parent=0 // pred_region
    _
  $region9: #{deeplab_forward.29} parent=0 // pred_fallthru
    _
  // Predicated region
  $region10: #{deeplab_forward.29} parent=0 // pred_check
    _
  $region11: #{deeplab_forward.29} parent=0 // pred_check_branch
    %13 = sbr.rel (0) target = $region13
  $region12: #{deeplab_forward.29} parent=0 // pred_region
    _
  $region13: #{deeplab_forward.29} parent=0 // pred_fallthru
    _
  %v15 = vld [vmem:[%s0] sm:$0xf]
  %v16 = vld [vmem:[%s0 + $0x4] sm:$0xf]
  %v17 = vld [vmem:[%s0 + $0x8] sm:$0xf]
  %v18 = vld [vmem:[%s0 + $0xc] sm:$0xf]
  %v19 = vld [vmem:[%s0 + $0x10] sm:$0xf]
  %v20 = vld [vmem:[%s0 + $0x14] sm:$0xf]
  %v21 = vld [vmem:[%s0 + $0x18] sm:$0xf]
  %v22 = vld [vmem:[%s0 + $0x1c] sm:$0xf]
  %v23 = vld [vmem:[%s1] sm:$0xf]
  %v24 = vld [vmem:[%s1 + $0x4] sm:$0xf]
  %v25 = vld [vmem:[%s2] sm:$0x1]
  %v27 = vlaneseq
  %v28 = vshrl.u32 %v27, 7
  %v29 = vsub.s32 0, %v28
  %v30 = vrot.slane %v25, %v29
  %v40 = vunpack.c.l.b16 %v15
  %v41 = vunpack.c.l.b16 %v16
  %v42 = vunpack.c.l.b16 %v17
  %v43 = vunpack.c.l.b16 %v18
  %v44 = vunpack.c.l.b16 %v19
  %v45 = vunpack.c.l.b16 %v20
  %v46 = vunpack.c.l.b16 %v21
  %v47 = vunpack.c.l.b16 %v22
  %v48 = vpack.c.b16 %v41, %v40
  %v49 = vpack.c.b16 %v43, %v42
  %v50 = vpack.c.b16 %v45, %v44
  %v51 = vpack.c.b16 %v47, %v46
  %v54 = vunpack.c.l.b16 %v23
  %v55 = vunpack.c.l.b16 %v24
  %v56 = vpack.c.b16 %v55, %v54
  %vm58 = vcmask 130048
  %v60 = vsel %vm58, %v48, 0
  %v63 = vsel %vm58, %v49, 0
  %v66 = vsel %vm58, %v50, 0
  %v69 = vsel %vm58, %v51, 0
  %71 = vmatprep.subr.bf16.mxu0 0
  %72 = vmatpush1.bf16.msra.mxu0 0
  %73 = vmatprep.subr.bf16.mxu0 0
  %74 = vmatpush1.bf16.msra.mxu0 0
  %75 = vmatprep.subr.bf16.mxu0 0
  %76 = vmatpush1.bf16.msra.mxu0 0
  %77 = vmatprep.subr.bf16.mxu0 0
  %78 = vmatpush1.bf16.msra.mxu0 0
  %79 = vmatprep.subr.bf16.mxu0 0
  %80 = vmatpush1.bf16.msra.mxu0 0
  %81 = vmatprep.subr.bf16.mxu0 0
  %82 = vmatpush1.bf16.msra.mxu0 0
  %83 = vmatprep.subr.bf16.mxu0 0
  %84 = vmatpush1.bf16.msra.mxu0 0
  %85 = vmatprep.subr.bf16.mxu0 0
  %86 = vmatpush1.bf16.msra.mxu0 %v56
  %87 = vmatprep.subr.bf16.mxu0 0
  %88 = vmatpush2.bf16.msra.mxu0 0
  %89 = vmatprep.subr.bf16.mxu0 0
  %90 = vmatpush2.bf16.msra.mxu0 0
  %91 = vmatprep.subr.bf16.mxu0 0
  %92 = vmatpush2.bf16.msra.mxu0 0
  %93 = vmatprep.subr.bf16.mxu0 0
  %94 = vmatpush2.bf16.msra.mxu0 0
  %95 = vmatprep.subr.bf16.mxu0 0
  %96 = vmatpush2.bf16.msra.mxu0 0
  %97 = vmatprep.subr.bf16.mxu0 0
  %98 = vmatpush2.bf16.msra.mxu0 0
  %99 = vmatprep.subr.bf16.mxu0 0
  %100 = vmatpush2.bf16.msra.mxu0 0
  %101 = vmatprep.subr.bf16.mxu0 0
  %102 = vmatpush2.bf16.msra.mxu0 0
  %103 = vmatprep.mubr.bf16.mxu0 0
  %104 = vmatmul.mubr.bf16.gmra.mxu0 %v60
  %v105 = vpop.f32.mrf.mxu0
  %v106 = vadd.f32 %v30, %v105
  %v107 = vpop.f32.mrf.mxu0
  %v108 = vpop.f32.mrf.mxu0
  %v109 = vadd.f32 %v30, %v108
  %v110 = vpop.f32.mrf.mxu0
  %111 = vmatprep.mubr.bf16.mxu0 0
  %112 = vmatmul.mubr.bf16.gmra.mxu0 %v63
  %v113 = vpop.f32.mrf.mxu0
  %v114 = vadd.f32 %v30, %v113
  %v115 = vpop.f32.mrf.mxu0
  %v116 = vpop.f32.mrf.mxu0
  %v117 = vadd.f32 %v30, %v116
  %v118 = vpop.f32.mrf.mxu0
  %119 = vmatprep.mubr.bf16.mxu0 0
  %120 = vmatmul.mubr.bf16.gmra.mxu0 %v66
  %v121 = vpop.f32.mrf.mxu0
  %v122 = vadd.f32 %v30, %v121
  %v123 = vpop.f32.mrf.mxu0
  %v124 = vpop.f32.mrf.mxu0
  %v125 = vadd.f32 %v30, %v124
  %v126 = vpop.f32.mrf.mxu0
  %127 = vmatprep.mubr.bf16.mxu0 0
  %128 = vmatmul.mubr.bf16.gmra.mxu0 %v69
  %v129 = vpop.f32.mrf.mxu0
  %v130 = vadd.f32 %v30, %v129
  %v131 = vpop.f32.mrf.mxu0
  %v132 = vpop.f32.mrf.mxu0
  %v133 = vadd.f32 %v30, %v132
  %v134 = vpop.f32.mrf.mxu0
  %135 = vdwg.mxu0
  %v136 = vpack.c.bf16 %v109, %v106
  %v137 = vpack.c.bf16 %v117, %v114
  %v138 = vpack.c.bf16 %v125, %v122
  %v139 = vpack.c.bf16 %v133, %v130
  %v144 = vunpack.c.l.b16 %v136
  %v145 = vunpack.c.h.b16 %v136
  %v146 = vunpack.c.l.b16 %v137
  %v147 = vunpack.c.h.b16 %v137
  %v148 = vunpack.c.l.b16 %v138
  %v149 = vunpack.c.h.b16 %v138
  %v150 = vunpack.c.l.b16 %v139
  %v151 = vunpack.c.h.b16 %v139
  %v152 = vpack.c.b16 %v144, %v144
  %v153 = vpack.c.b16 %v145, %v145
  %v154 = vpack.c.b16 %v146, %v146
  %v155 = vpack.c.b16 %v147, %v147
  %v156 = vpack.c.b16 %v148, %v148
  %v157 = vpack.c.b16 %v149, %v149
  %v158 = vpack.c.b16 %v150, %v150
  %v159 = vpack.c.b16 %v151, %v151
  %168 = vst [vmem:[%s3] sm:$0xf] %v152
  %169 = vst [vmem:[%s3 + $0x4] sm:$0xf] %v153
  %170 = vst [vmem:[%s3 + $0x8] sm:$0xf] %v154
  %171 = vst [vmem:[%s3 + $0xc] sm:$0xf] %v155
  %172 = vst [vmem:[%s3 + $0x10] sm:$0xf] %v156
  %173 = vst [vmem:[%s3 + $0x14] sm:$0xf] %v157
  %174 = vst [vmem:[%s3 + $0x18] sm:$0xf] %v158
  %175 = vst [vmem:[%s3 + $0x1c] sm:$0xf] %v159
  // Predicated region
  $region14: #{deeplab_forward.29} parent=0 // pred_check
    _
  $region15: #{deeplab_forward.29} parent=0 // pred_check_branch
    %177 = sbr.rel (0) target = $region17
  $region16: #{deeplab_forward.29} parent=0 // pred_region
    _
  $region17: #{deeplab_forward.29} parent=0 // pred_fallthru
    _
  // Predicated region
  $region18: #{deeplab_forward.29} parent=0 // pred_check
    _
  $region19: #{deeplab_forward.29} parent=0 // pred_check_branch
    %179 = sbr.rel (0) target = $region21
  $region20: #{deeplab_forward.29} parent=0 // pred_region
    _
  $region21: #{deeplab_forward.29} parent=0 // pred_fallthru
    _

// kernel: deeplab_forward.28
$region0: #{deeplab_forward.28}
  #allocation0 [shape = 'u32[]', space=smem, size = 0x4, offset = 0x4, fixed_abs, tag = 'smem constant byte address 0x4 - core index']
  #allocation1 [shape = 'u32[144,128]{1,0:T(1,128)}', space=vmem, size = 0x12000, scoped, tag = 'internal scratch']
  %s0 = inlined_call_operand.vmem [shape: bf16[128,16], index: 0, kind: input, shape index: {}]
  %s1 = inlined_call_operand.vmem [shape: bf16[16,128], index: 1, kind: input, shape index: {}]
  %s2 = inlined_call_operand.vmem [shape: f32[1,128], index: 2, kind: input, shape index: {}]
  %s3 = inlined_call_operand.vmem [shape: bf16[128,128], index: 3, kind: output, shape index: {}]
  %s4 = sld [smem:[#allocation0]]
  $region22: #{deeplab_forward.28} parent=0
    _
  %s6 = ssub.s32 1, %s4
  %s7 = scalar_select 0, %s6, %s4
  // Predicated region
  $region2: #{deeplab_forward.28} parent=0 // pred_check
    _
  $region3: #{deeplab_forward.28} parent=0 // pred_check_branch
    %9 = sbr.rel (0) target = $region5
  $region4: #{deeplab_forward.28} parent=0 // pred_region
    _
  $region5: #{deeplab_forward.28} parent=0 // pred_fallthru
    _
  // Predicated region
  $region6: #{deeplab_forward.28} parent=0 // pred_check
    _
  $region7: #{deeplab_forward.28} parent=0 // pred_check_branch
    %11 = sbr.rel (0) target = $region9
  $region8: #{deeplab_forward.28} parent=0 // pred_region
    _
  $region9: #{deeplab_forward.28} parent=0 // pred_fallthru
    _
  // Predicated region
  $region10: #{deeplab_forward.28} parent=0 // pred_check
    _
  $region11: #{deeplab_forward.28} parent=0 // pred_check_branch
    %13 = sbr.rel (0) target = $region13
  $region12: #{deeplab_forward.28} parent=0 // pred_region
    _
  $region13: #{deeplab_forward.28} parent=0 // pred_fallthru
    _
  %v15 = vld [vmem:[%s0] sm:$0xf]
  %v16 = vld [vmem:[%s0 + $0x4] sm:$0xf]
  %v17 = vld [vmem:[%s0 + $0x8] sm:$0xf]
  %v18 = vld [vmem:[%s0 + $0xc] sm:$0xf]
  %v19 = vld [vmem:[%s0 + $0x10] sm:$0xf]
  %v20 = vld [vmem:[%s0 + $0x14] sm:$0xf]
  %v21 = vld [vmem:[%s0 + $0x18] sm:$0xf]
  %v22 = vld [vmem:[%s0 + $0x1c] sm:$0xf]
  %v23 = vld [vmem:[%s0 + $0x20] sm:$0xf]
  %v24 = vld [vmem:[%s0 + $0x24] sm:$0xf]
  %v25 = vld [vmem:[%s0 + $0x28] sm:$0xf]
  %v26 = vld [vmem:[%s0 + $0x2c] sm:$0xf]
  %v27 = vld [vmem:[%s0 + $0x30] sm:$0xf]
  %v28 = vld [vmem:[%s0 + $0x34] sm:$0xf]
  %v29 = vld [vmem:[%s0 + $0x38] sm:$0xf]
  %v30 = vld [vmem:[%s0 + $0x3c] sm:$0xf]
  %v31 = vld [vmem:[%s1] sm:$0xf]
  %v32 = vld [vmem:[%s1 + $0x4] sm:$0xf]
  %v33 = vld [vmem:[%s2] sm:$0x1]
  %v35 = vlaneseq
  %v36 = vshrl.u32 %v35, 7
  %v37 = vsub.s32 0, %v36
  %v38 = vrot.slane %v33, %v37
  %v56 = vunpack.c.l.b16 %v15
  %v57 = vunpack.c.l.b16 %v16
  %v58 = vunpack.c.l.b16 %v17
  %v59 = vunpack.c.l.b16 %v18
  %v60 = vunpack.c.l.b16 %v19
  %v61 = vunpack.c.l.b16 %v20
  %v62 = vunpack.c.l.b16 %v21
  %v63 = vunpack.c.l.b16 %v22
  %v64 = vunpack.c.l.b16 %v23
  %v65 = vunpack.c.l.b16 %v24
  %v66 = vunpack.c.l.b16 %v25
  %v67 = vunpack.c.l.b16 %v26
  %v68 = vunpack.c.l.b16 %v27
  %v69 = vunpack.c.l.b16 %v28
  %v70 = vunpack.c.l.b16 %v29
  %v71 = vunpack.c.l.b16 %v30
  %v72 = vpack.c.b16 %v57, %v56
  %v73 = vpack.c.b16 %v59, %v58
  %v74 = vpack.c.b16 %v61, %v60
  %v75 = vpack.c.b16 %v63, %v62
  %v76 = vpack.c.b16 %v65, %v64
  %v77 = vpack.c.b16 %v67, %v66
  %v78 = vpack.c.b16 %v69, %v68
  %v79 = vpack.c.b16 %v71, %v70
  %v82 = vunpack.c.l.b16 %v31
  %v83 = vunpack.c.l.b16 %v32
  %v84 = vpack.c.b16 %v83, %v82
  %vm86 = vcmask 130048
  %v88 = vsel %vm86, %v72, 0
  %v91 = vsel %vm86, %v73, 0
  %v94 = vsel %vm86, %v74, 0
  %v97 = vsel %vm86, %v75, 0
  %v100 = vsel %vm86, %v76, 0
  %v103 = vsel %vm86, %v77, 0
  %v106 = vsel %vm86, %v78, 0
  %v109 = vsel %vm86, %v79, 0
  %111 = vmatprep.subr.bf16.mxu0 0
  %112 = vmatpush1.bf16.msra.mxu0 0
  %113 = vmatprep.subr.bf16.mxu0 0
  %114 = vmatpush1.bf16.msra.mxu0 0
  %115 = vmatprep.subr.bf16.mxu0 0
  %116 = vmatpush1.bf16.msra.mxu0 0
  %117 = vmatprep.subr.bf16.mxu0 0
  %118 = vmatpush1.bf16.msra.mxu0 0
  %119 = vmatprep.subr.bf16.mxu0 0
  %120 = vmatpush1.bf16.msra.mxu0 0
  %121 = vmatprep.subr.bf16.mxu0 0
  %122 = vmatpush1.bf16.msra.mxu0 0
  %123 = vmatprep.subr.bf16.mxu0 0
  %124 = vmatpush1.bf16.msra.mxu0 0
  %125 = vmatprep.subr.bf16.mxu0 0
  %126 = vmatpush1.bf16.msra.mxu0 %v84
  %127 = vmatprep.subr.bf16.mxu0 0
  %128 = vmatpush2.bf16.msra.mxu0 0
  %129 = vmatprep.subr.bf16.mxu0 0
  %130 = vmatpush2.bf16.msra.mxu0 0
  %131 = vmatprep.subr.bf16.mxu0 0
  %132 = vmatpush2.bf16.msra.mxu0 0
  %133 = vmatprep.subr.bf16.mxu0 0
  %134 = vmatpush2.bf16.msra.mxu0 0
  %135 = vmatprep.subr.bf16.mxu0 0
  %136 = vmatpush2.bf16.msra.mxu0 0
  %137 = vmatprep.subr.bf16.mxu0 0
  %138 = vmatpush2.bf16.msra.mxu0 0
  %139 = vmatprep.subr.bf16.mxu0 0
  %140 = vmatpush2.bf16.msra.mxu0 0
  %141 = vmatprep.subr.bf16.mxu0 0
  %142 = vmatpush2.bf16.msra.mxu0 0
  %143 = vmatprep.mubr.bf16.mxu0 0
  %144 = vmatmul.mubr.bf16.gmra.mxu0 %v88
  %v145 = vpop.f32.mrf.mxu0
  %v146 = vadd.f32 %v38, %v145
  %v147 = vpop.f32.mrf.mxu0
  %v148 = vpop.f32.mrf.mxu0
  %v149 = vadd.f32 %v38, %v148
  %v150 = vpop.f32.mrf.mxu0
  %151 = vmatprep.mubr.bf16.mxu0 0
  %152 = vmatmul.mubr.bf16.gmra.mxu0 %v91
  %v153 = vpop.f32.mrf.mxu0
  %v154 = vadd.f32 %v38, %v153
  %v155 = vpop.f32.mrf.mxu0
  %v156 = vpop.f32.mrf.mxu0
  %v157 = vadd.f32 %v38, %v156
  %v158 = vpop.f32.mrf.mxu0
  %159 = vmatprep.mubr.bf16.mxu0 0
  %160 = vmatmul.mubr.bf16.gmra.mxu0 %v94
  %v161 = vpop.f32.mrf.mxu0
  %v162 = vadd.f32 %v38, %v161
  %v163 = vpop.f32.mrf.mxu0
  %v164 = vpop.f32.mrf.mxu0
  %v165 = vadd.f32 %v38, %v164
  %v166 = vpop.f32.mrf.mxu0
  %167 = vmatprep.mubr.bf16.mxu0 0
  %168 = vmatmul.mubr.bf16.gmra.mxu0 %v97
  %v169 = vpop.f32.mrf.mxu0
  %v170 = vadd.f32 %v38, %v169
  %v171 = vpop.f32.mrf.mxu0
  %v172 = vpop.f32.mrf.mxu0
  %v173 = vadd.f32 %v38, %v172
  %v174 = vpop.f32.mrf.mxu0
  %175 = vmatprep.mubr.bf16.mxu0 0
  %176 = vmatmul.mubr.bf16.gmra.mxu0 %v100
  %v177 = vpop.f32.mrf.mxu0
  %v178 = vadd.f32 %v38, %v177
  %v179 = vpop.f32.mrf.mxu0
  %v180 = vpop.f32.mrf.mxu0
  %v181 = vadd.f32 %v38, %v180
  %v182 = vpop.f32.mrf.mxu0
  %183 = vmatprep.mubr.bf16.mxu0 0
  %184 = vmatmul.mubr.bf16.gmra.mxu0 %v103
  %v185 = vpop.f32.mrf.mxu0
  %v186 = vadd.f32 %v38, %v185
  %v187 = vpop.f32.mrf.mxu0
  %v188 = vpop.f32.mrf.mxu0
  %v189 = vadd.f32 %v38, %v188
  %v190 = vpop.f32.mrf.mxu0
  %191 = vmatprep.mubr.bf16.mxu0 0
  %192 = vmatmul.mubr.bf16.gmra.mxu0 %v106
  %v193 = vpop.f32.mrf.mxu0
  %v194 = vadd.f32 %v38, %v193
  %v195 = vpop.f32.mrf.mxu0
  %v196 = vpop.f32.mrf.mxu0
  %v197 = vadd.f32 %v38, %v196
  %v198 = vpop.f32.mrf.mxu0
  %199 = vmatprep.mubr.bf16.mxu0 0
  %200 = vmatmul.mubr.bf16.gmra.mxu0 %v109
  %v201 = vpop.f32.mrf.mxu0
  %v202 = vadd.f32 %v38, %v201
  %v203 = vpop.f32.mrf.mxu0
  %v204 = vpop.f32.mrf.mxu0
  %v205 = vadd.f32 %v38, %v204
  %v206 = vpop.f32.mrf.mxu0
  %207 = vdwg.mxu0
  %v208 = vmax.f32 %v146, 0.0
  %v209 = vmax.f32 %v149, 0.0
  %v210 = vmax.f32 %v154, 0.0
  %v211 = vmax.f32 %v157, 0.0
  %v212 = vmax.f32 %v162, 0.0
  %v213 = vmax.f32 %v165, 0.0
  %v214 = vmax.f32 %v170, 0.0
  %v215 = vmax.f32 %v173, 0.0
  %v216 = vmax.f32 %v178, 0.0
  %v217 = vmax.f32 %v181, 0.0
  %v218 = vmax.f32 %v186, 0.0
  %v219 = vmax.f32 %v189, 0.0
  %v220 = vmax.f32 %v194, 0.0
  %v221 = vmax.f32 %v197, 0.0
  %v222 = vmax.f32 %v202, 0.0
  %v223 = vmax.f32 %v205, 0.0
  %v224 = vpack.c.bf16 %v209, %v208
  %v225 = vpack.c.bf16 %v211, %v210
  %v226 = vpack.c.bf16 %v213, %v212
  %v227 = vpack.c.bf16 %v215, %v214
  %v228 = vpack.c.bf16 %v217, %v216
  %v229 = vpack.c.bf16 %v219, %v218
  %v230 = vpack.c.bf16 %v221, %v220
  %v231 = vpack.c.bf16 %v223, %v222
  %v240 = vunpack.c.l.b16 %v224
  %v241 = vunpack.c.h.b16 %v224
  %v242 = vunpack.c.l.b16 %v225
  %v243 = vunpack.c.h.b16 %v225
  %v244 = vunpack.c.l.b16 %v226
  %v245 = vunpack.c.h.b16 %v226
  %v246 = vunpack.c.l.b16 %v227
  %v247 = vunpack.c.h.b16 %v227
  %v248 = vunpack.c.l.b16 %v228
  %v249 = vunpack.c.h.b16 %v228
  %v250 = vunpack.c.l.b16 %v229
  %v251 = vunpack.c.h.b16 %v229
  %v252 = vunpack.c.l.b16 %v230
  %v253 = vunpack.c.h.b16 %v230
  %v254 = vunpack.c.l.b16 %v231
  %v255 = vunpack.c.h.b16 %v231
  %v256 = vpack.c.b16 %v240, %v240
  %v257 = vpack.c.b16 %v241, %v241
  %v258 = vpack.c.b16 %v242, %v242
  %v259 = vpack.c.b16 %v243, %v243
  %v260 = vpack.c.b16 %v244, %v244
  %v261 = vpack.c.b16 %v245, %v245
  %v262 = vpack.c.b16 %v246, %v246
  %v263 = vpack.c.b16 %v247, %v247
  %v264 = vpack.c.b16 %v248, %v248
  %v265 = vpack.c.b16 %v249, %v249
  %v266 = vpack.c.b16 %v250, %v250
  %v267 = vpack.c.b16 %v251, %v251
  %v268 = vpack.c.b16 %v252, %v252
  %v269 = vpack.c.b16 %v253, %v253
  %v270 = vpack.c.b16 %v254, %v254
  %v271 = vpack.c.b16 %v255, %v255
  %288 = vst [vmem:[%s3] sm:$0xf] %v256
  %289 = vst [vmem:[%s3 + $0x4] sm:$0xf] %v257
  %290 = vst [vmem:[%s3 + $0x8] sm:$0xf] %v258
  %291 = vst [vmem:[%s3 + $0xc] sm:$0xf] %v259
  %292 = vst [vmem:[%s3 + $0x10] sm:$0xf] %v260
  %293 = vst [vmem:[%s3 + $0x14] sm:$0xf] %v261
  %294 = vst [vmem:[%s3 + $0x18] sm:$0xf] %v262
  %295 = vst [vmem:[%s3 + $0x1c] sm:$0xf] %v263
  %296 = vst [vmem:[%s3 + $0x20] sm:$0xf] %v264
  %297 = vst [vmem:[%s3 + $0x24] sm:$0xf] %v265
  %298 = vst [vmem:[%s3 + $0x28] sm:$0xf] %v266
  %299 = vst [vmem:[%s3 + $0x2c] sm:$0xf] %v267
  %300 = vst [vmem:[%s3 + $0x30] sm:$0xf] %v268
  %301 = vst [vmem:[%s3 + $0x34] sm:$0xf] %v269
  %302 = vst [vmem:[%s3 + $0x38] sm:$0xf] %v270
  %303 = vst [vmem:[%s3 + $0x3c] sm:$0xf] %v271
  // Predicated region
  $region14: #{deeplab_forward.28} parent=0 // pred_check
    _
  $region15: #{deeplab_forward.28} parent=0 // pred_check_branch
    %305 = sbr.rel (0) target = $region17
  $region16: #{deeplab_forward.28} parent=0 // pred_region
    _
  $region17: #{deeplab_forward.28} parent=0 // pred_fallthru
    _
  // Predicated region
  $region18: #{deeplab_forward.28} parent=0 // pred_check
    _
  $region19: #{deeplab_forward.28} parent=0 // pred_check_branch
    %307 = sbr.rel (0) target = $region21
  $region20: #{deeplab_forward.28} parent=0 // pred_region
    _
  $region21: #{deeplab_forward.28} parent=0 // pred_fallthru
    _

// kernel: deeplab_forward.30
$region0: #{deeplab_forward.30}
  #allocation0 [shape = 'u32[]', space=smem, size = 0x4, offset = 0x4, fixed_abs, tag = 'smem constant byte address 0x4 - core index']
  #allocation1 [shape = 'u32[144,128]{1,0:T(1,128)}', space=vmem, size = 0x12000, scoped, tag = 'internal scratch']
  %s0 = inlined_call_operand.vmem [shape: bf16[128,368], index: 0, kind: input, shape index: {}]
  %s1 = inlined_call_operand.vmem [shape: bf16[368,128], index: 1, kind: input, shape index: {}]
  %s2 = inlined_call_operand.vmem [shape: f32[1,128], index: 2, kind: input, shape index: {}]
  %s3 = inlined_call_operand.vmem [shape: bf16[128,128], index: 3, kind: output, shape index: {}]
  %s4 = sld [smem:[#allocation0]]
  $region22: #{deeplab_forward.30} parent=0
    _
  %s6 = ssub.s32 1, %s4
  %s7 = scalar_select 0, %s6, %s4
  // Predicated region
  $region2: #{deeplab_forward.30} parent=0 // pred_check
    _
  $region3: #{deeplab_forward.30} parent=0 // pred_check_branch
    %9 = sbr.rel (0) target = $region5
  $region4: #{deeplab_forward.30} parent=0 // pred_region
    _
  $region5: #{deeplab_forward.30} parent=0 // pred_fallthru
    _
  // Predicated region
  $region6: #{deeplab_forward.30} parent=0 // pred_check
    _
  $region7: #{deeplab_forward.30} parent=0 // pred_check_branch
    %11 = sbr.rel (0) target = $region9
  $region8: #{deeplab_forward.30} parent=0 // pred_region
    _
  $region9: #{deeplab_forward.30} parent=0 // pred_fallthru
    _
  // Predicated region
  $region10: #{deeplab_forward.30} parent=0 // pred_check
    _
  $region11: #{deeplab_forward.30} parent=0 // pred_check_branch
    %13 = sbr.rel (0) target = $region13
  $region12: #{deeplab_forward.30} parent=0 // pred_region
    _
  $region13: #{deeplab_forward.30} parent=0 // pred_fallthru
    _
  %v15 = vld [vmem:[%s0] sm:$0xff]
  %v16 = vld [vmem:[%s0 + $0x8] sm:$0xf]
  %v17 = vld [vmem:[%s0 + $0xc] sm:$0xff]
  %v18 = vld [vmem:[%s0 + $0x14] sm:$0xf]
  %v19 = vld [vmem:[%s0 + $0x18] sm:$0xff]
  %v20 = vld [vmem:[%s0 + $0x20] sm:$0xf]
  %v21 = vld [vmem:[%s0 + $0x24] sm:$0xff]
  %v22 = vld [vmem:[%s0 + $0x2c] sm:$0xf]
  %v23 = vld [vmem:[%s0 + $0x30] sm:$0xff]
  %v24 = vld [vmem:[%s0 + $0x38] sm:$0xf]
  %v25 = vld [vmem:[%s0 + $0x3c] sm:$0xff]
  %v26 = vld [vmem:[%s0 + $0x44] sm:$0xf]
  %v27 = vld [vmem:[%s0 + $0x48] sm:$0xff]
  %v28 = vld [vmem:[%s0 + $0x50] sm:$0xf]
  %v29 = vld [vmem:[%s0 + $0x54] sm:$0xff]
  %v30 = vld [vmem:[%s0 + $0x5c] sm:$0xf]
  %v31 = vld [vmem:[%s0 + $0x60] sm:$0xff]
  %v32 = vld [vmem:[%s0 + $0x68] sm:$0xf]
  %v33 = vld [vmem:[%s0 + $0x6c] sm:$0xff]
  %v34 = vld [vmem:[%s0 + $0x74] sm:$0xf]
  %v35 = vld [vmem:[%s0 + $0x78] sm:$0xff]
  %v36 = vld [vmem:[%s0 + $0x80] sm:$0xf]
  %v37 = vld [vmem:[%s0 + $0x84] sm:$0xff]
  %v38 = vld [vmem:[%s0 + $0x8c] sm:$0xf]
  %v39 = vld [vmem:[%s0 + $0x90] sm:$0xff]
  %v40 = vld [vmem:[%s0 + $0x98] sm:$0xf]
  %v41 = vld [vmem:[%s0 + $0x9c] sm:$0xff]
  %v42 = vld [vmem:[%s0 + $0xa4] sm:$0xf]
  %v43 = vld [vmem:[%s0 + $0xa8] sm:$0xff]
  %v44 = vld [vmem:[%s0 + $0xb0] sm:$0xf]
  %v45 = vld [vmem:[%s0 + $0xb4] sm:$0xff]
  %v46 = vld [vmem:[%s0 + $0xbc] sm:$0xf]
  %v47 = vld [vmem:[%s1] sm:$0xf]
  %v48 = vld [vmem:[%s1 + $0x4] sm:$0xf]
  %v49 = vld [vmem:[%s1 + $0x8] sm:$0xf]
  %v50 = vld [vmem:[%s1 + $0xc] sm:$0xf]
  %v51 = vld [vmem:[%s1 + $0x10] sm:$0xf]
  %v52 = vld [vmem:[%s1 + $0x14] sm:$0xf]
  %v53 = vld [vmem:[%s1 + $0x18] sm:$0xf]
  %v54 = vld [vmem:[%s1 + $0x1c] sm:$0xf]
  %v55 = vld [vmem:[%s1 + $0x20] sm:$0xf]
  %v56 = vld [vmem:[%s1 + $0x24] sm:$0xf]
  %v57 = vld [vmem:[%s1 + $0x28] sm:$0xf]
  %v58 = vld [vmem:[%s1 + $0x2c] sm:$0xf]
  %v59 = vld [vmem:[%s1 + $0x30] sm:$0xf]
  %v60 = vld [vmem:[%s1 + $0x34] sm:$0xf]
  %v61 = vld [vmem:[%s1 + $0x38] sm:$0xf]
  %v62 = vld [vmem:[%s1 + $0x3c] sm:$0xf]
  %v63 = vld [vmem:[%s1 + $0x40] sm:$0xf]
  %v64 = vld [vmem:[%s1 + $0x44] sm:$0xf]
  %v65 = vld [vmem:[%s1 + $0x48] sm:$0xf]
  %v66 = vld [vmem:[%s1 + $0x4c] sm:$0xf]
  %v67 = vld [vmem:[%s1 + $0x50] sm:$0xf]
  %v68 = vld [vmem:[%s1 + $0x54] sm:$0xf]
  %v69 = vld [vmem:[%s1 + $0x58] sm:$0xf]
  %v70 = vld [vmem:[%s1 + $0x5c] sm:$0xf]
  %v71 = vld [vmem:[%s1 + $0x60] sm:$0xf]
  %v72 = vld [vmem:[%s1 + $0x64] sm:$0xf]
  %v73 = vld [vmem:[%s1 + $0x68] sm:$0xf]
  %v74 = vld [vmem:[%s1 + $0x6c] sm:$0xf]
  %v75 = vld [vmem:[%s1 + $0x70] sm:$0xf]
  %v76 = vld [vmem:[%s1 + $0x74] sm:$0xf]
  %v77 = vld [vmem:[%s1 + $0x78] sm:$0xf]
  %v78 = vld [vmem:[%s1 + $0x7c] sm:$0xf]
  %v79 = vld [vmem:[%s1 + $0x80] sm:$0xf]
  %v80 = vld [vmem:[%s1 + $0x84] sm:$0xf]
  %v81 = vld [vmem:[%s1 + $0x88] sm:$0xf]
  %v82 = vld [vmem:[%s1 + $0x8c] sm:$0xf]
  %v83 = vld [vmem:[%s1 + $0x90] sm:$0xf]
  %v84 = vld [vmem:[%s1 + $0x94] sm:$0xf]
  %v85 = vld [vmem:[%s1 + $0x98] sm:$0xf]
  %v86 = vld [vmem:[%s1 + $0x9c] sm:$0xf]
  %v87 = vld [vmem:[%s1 + $0xa0] sm:$0xf]
  %v88 = vld [vmem:[%s1 + $0xa4] sm:$0xf]
  %v89 = vld [vmem:[%s1 + $0xa8] sm:$0xf]
  %v90 = vld [vmem:[%s1 + $0xac] sm:$0xf]
  %v91 = vld [vmem:[%s1 + $0xb0] sm:$0xf]
  %v92 = vld [vmem:[%s1 + $0xb4] sm:$0xf]
  %v93 = vld [vmem:[%s2] sm:$0x1]
  %v95 = vlaneseq
  %v96 = vshrl.u32 %v95, 7
  %v97 = vsub.s32 0, %v96
  %v98 = vrot.slane %v93, %v97
  %v132 = vunpack.c.l.b16 %v15
  %v133 = vunpack.c.h.b16 %v15
  %v134 = vunpack.c.l.b16 %v16
  %v135 = vunpack.c.l.b16 %v17
  %v136 = vunpack.c.h.b16 %v17
  %v137 = vunpack.c.l.b16 %v18
  %v138 = vunpack.c.l.b16 %v19
  %v139 = vunpack.c.h.b16 %v19
  %v140 = vunpack.c.l.b16 %v20
  %v141 = vunpack.c.l.b16 %v21
  %v142 = vunpack.c.h.b16 %v21
  %v143 = vunpack.c.l.b16 %v22
  %v144 = vunpack.c.l.b16 %v23
  %v145 = vunpack.c.h.b16 %v23
  %v146 = vunpack.c.l.b16 %v24
  %v147 = vunpack.c.l.b16 %v25
  %v148 = vunpack.c.h.b16 %v25
  %v149 = vunpack.c.l.b16 %v26
  %v150 = vunpack.c.l.b16 %v27
  %v151 = vunpack.c.h.b16 %v27
  %v152 = vunpack.c.l.b16 %v28
  %v153 = vunpack.c.l.b16 %v29
  %v154 = vunpack.c.h.b16 %v29
  %v155 = vunpack.c.l.b16 %v30
  %v156 = vunpack.c.l.b16 %v31
  %v157 = vunpack.c.h.b16 %v31
  %v158 = vunpack.c.l.b16 %v32
  %v159 = vunpack.c.l.b16 %v33
  %v160 = vunpack.c.h.b16 %v33
  %v161 = vunpack.c.l.b16 %v34
  %v162 = vunpack.c.l.b16 %v35
  %v163 = vunpack.c.h.b16 %v35
  %v164 = vunpack.c.l.b16 %v36
  %v165 = vunpack.c.l.b16 %v37
  %v166 = vunpack.c.h.b16 %v37
  %v167 = vunpack.c.l.b16 %v38
  %v168 = vunpack.c.l.b16 %v39
  %v169 = vunpack.c.h.b16 %v39
  %v170 = vunpack.c.l.b16 %v40
  %v171 = vunpack.c.l.b16 %v41
  %v172 = vunpack.c.h.b16 %v41
  %v173 = vunpack.c.l.b16 %v42
  %v174 = vunpack.c.l.b16 %v43
  %v175 = vunpack.c.h.b16 %v43
  %v176 = vunpack.c.l.b16 %v44
  %v177 = vunpack.c.l.b16 %v45
  %v178 = vunpack.c.h.b16 %v45
  %v179 = vunpack.c.l.b16 %v46
  %v180 = vpack.c.b16 %v135, %v132
  %v181 = vpack.c.b16 %v136, %v133
  %v182 = vpack.c.b16 %v137, %v134
  %v183 = vpack.c.b16 %v141, %v138
  %v184 = vpack.c.b16 %v142, %v139
  %v185 = vpack.c.b16 %v143, %v140
  %v186 = vpack.c.b16 %v147, %v144
  %v187 = vpack.c.b16 %v148, %v145
  %v188 = vpack.c.b16 %v149, %v146
  %v189 = vpack.c.b16 %v153, %v150
  %v190 = vpack.c.b16 %v154, %v151
  %v191 = vpack.c.b16 %v155, %v152
  %v192 = vpack.c.b16 %v159, %v156
  %v193 = vpack.c.b16 %v160, %v157
  %v194 = vpack.c.b16 %v161, %v158
  %v195 = vpack.c.b16 %v165, %v162
  %v196 = vpack.c.b16 %v166, %v163
  %v197 = vpack.c.b16 %v167, %v164
  %v198 = vpack.c.b16 %v171, %v168
  %v199 = vpack.c.b16 %v172, %v169
  %v200 = vpack.c.b16 %v173, %v170
  %v201 = vpack.c.b16 %v177, %v174
  %v202 = vpack.c.b16 %v178, %v175
  %v203 = vpack.c.b16 %v179, %v176
  %v266 = vunpack.c.l.b16 %v47
  %v267 = vunpack.c.l.b16 %v48
  %v268 = vunpack.c.l.b16 %v49
  %v269 = vunpack.c.l.b16 %v50
  %v270 = vunpack.c.l.b16 %v51
  %v271 = vunpack.c.l.b16 %v52
  %v272 = vunpack.c.l.b16 %v53
  %v273 = vunpack.c.l.b16 %v54
  %v274 = vunpack.c.l.b16 %v55
  %v275 = vunpack.c.l.b16 %v56
  %v276 = vunpack.c.l.b16 %v57
  %v277 = vunpack.c.l.b16 %v58
  %v278 = vunpack.c.l.b16 %v59
  %v279 = vunpack.c.l.b16 %v60
  %v280 = vunpack.c.l.b16 %v61
  %v281 = vunpack.c.l.b16 %v62
  %v282 = vunpack.c.l.b16 %v63
  %v283 = vunpack.c.l.b16 %v64
  %v284 = vunpack.c.l.b16 %v65
  %v285 = vunpack.c.l.b16 %v66
  %v286 = vunpack.c.l.b16 %v67
  %v287 = vunpack.c.l.b16 %v68
  %v288 = vunpack.c.l.b16 %v69
  %v289 = vunpack.c.l.b16 %v70
  %v290 = vunpack.c.l.b16 %v71
  %v291 = vunpack.c.l.b16 %v72
  %v292 = vunpack.c.l.b16 %v73
  %v293 = vunpack.c.l.b16 %v74
  %v294 = vunpack.c.l.b16 %v75
  %v295 = vunpack.c.l.b16 %v76
  %v296 = vunpack.c.l.b16 %v77
  %v297 = vunpack.c.l.b16 %v78
  %v298 = vunpack.c.l.b16 %v79
  %v299 = vunpack.c.l.b16 %v80
  %v300 = vunpack.c.l.b16 %v81
  %v301 = vunpack.c.l.b16 %v82
  %v302 = vunpack.c.l.b16 %v83
  %v303 = vunpack.c.l.b16 %v84
  %v304 = vunpack.c.l.b16 %v85
  %v305 = vunpack.c.l.b16 %v86
  %v306 = vunpack.c.l.b16 %v87
  %v307 = vunpack.c.l.b16 %v88
  %v308 = vunpack.c.l.b16 %v89
  %v309 = vunpack.c.l.b16 %v90
  %v310 = vunpack.c.l.b16 %v91
  %v311 = vunpack.c.l.b16 %v92
  %v312 = vpack.c.b16 %v267, %v266
  %v313 = vpack.c.b16 %v269, %v268
  %v314 = vpack.c.b16 %v271, %v270
  %v315 = vpack.c.b16 %v273, %v272
  %v316 = vpack.c.b16 %v275, %v274
  %v317 = vpack.c.b16 %v277, %v276
  %v318 = vpack.c.b16 %v279, %v278
  %v319 = vpack.c.b16 %v281, %v280
  %v320 = vpack.c.b16 %v283, %v282
  %v321 = vpack.c.b16 %v285, %v284
  %v322 = vpack.c.b16 %v287, %v286
  %v323 = vpack.c.b16 %v289, %v288
  %v324 = vpack.c.b16 %v291, %v290
  %v325 = vpack.c.b16 %v293, %v292
  %v326 = vpack.c.b16 %v295, %v294
  %v327 = vpack.c.b16 %v297, %v296
  %v328 = vpack.c.b16 %v299, %v298
  %v329 = vpack.c.b16 %v301, %v300
  %v330 = vpack.c.b16 %v303, %v302
  %v331 = vpack.c.b16 %v305, %v304
  %v332 = vpack.c.b16 %v307, %v306
  %v333 = vpack.c.b16 %v309, %v308
  %v334 = vpack.c.b16 %v311, %v310
  %vm358 = vcmask 916480
  %v360 = vsel %vm358, %v182, 0
  %v363 = vsel %vm358, %v185, 0
  %v366 = vsel %vm358, %v188, 0
  %v369 = vsel %vm358, %v191, 0
  %v372 = vsel %vm358, %v194, 0
  %v375 = vsel %vm358, %v197, 0
  %v378 = vsel %vm358, %v200, 0
  %v381 = vsel %vm358, %v203, 0
  %383 = vmatprep.subr.bf16.mxu0 0
  %384 = vmatpush1.bf16.msra.mxu0 %v319
  %385 = vmatprep.subr.bf16.mxu0 0
  %386 = vmatpush1.bf16.msra.mxu0 %v318
  %387 = vmatprep.subr.bf16.mxu0 0
  %388 = vmatpush1.bf16.msra.mxu0 %v317
  %389 = vmatprep.subr.bf16.mxu0 0
  %390 = vmatpush1.bf16.msra.mxu0 %v316
  %391 = vmatprep.subr.bf16.mxu0 0
  %392 = vmatpush1.bf16.msra.mxu0 %v315
  %393 = vmatprep.subr.bf16.mxu0 0
  %394 = vmatpush1.bf16.msra.mxu0 %v314
  %395 = vmatprep.subr.bf16.mxu0 0
  %396 = vmatpush1.bf16.msra.mxu0 %v313
  %397 = vmatprep.subr.bf16.mxu0 0
  %398 = vmatpush1.bf16.msra.mxu0 %v312
  %399 = vmatprep.subr.bf16.mxu0 0
  %400 = vmatpush2.bf16.msra.mxu0 %v327
  %401 = vmatprep.subr.bf16.mxu0 0
  %402 = vmatpush2.bf16.msra.mxu0 %v326
  %403 = vmatprep.subr.bf16.mxu0 0
  %404 = vmatpush2.bf16.msra.mxu0 %v325
  %405 = vmatprep.subr.bf16.mxu0 0
  %406 = vmatpush2.bf16.msra.mxu0 %v324
  %407 = vmatprep.subr.bf16.mxu0 0
  %408 = vmatpush2.bf16.msra.mxu0 %v323
  %409 = vmatprep.subr.bf16.mxu0 0
  %410 = vmatpush2.bf16.msra.mxu0 %v322
  %411 = vmatprep.subr.bf16.mxu0 0
  %412 = vmatpush2.bf16.msra.mxu0 %v321
  %413 = vmatprep.subr.bf16.mxu0 0
  %414 = vmatpush2.bf16.msra.mxu0 %v320
  %415 = vmatprep.mubr.bf16.mxu0 %v181
  %416 = vmatmul.mubr.bf16.gmra.mxu0 %v180
  %v417 = vpop.f32.mrf.mxu0
  %v418 = vadd.f32 %v98, %v417
  %v419 = vpop.f32.mrf.mxu0
  %v420 = vpop.f32.mrf.mxu0
  %v421 = vadd.f32 %v98, %v420
  %v422 = vpop.f32.mrf.mxu0
  %423 = vmatprep.mubr.bf16.mxu0 %v184
  %424 = vmatmul.mubr.bf16.gmra.mxu0 %v183
  %v425 = vpop.f32.mrf.mxu0
  %v426 = vadd.f32 %v98, %v425
  %v427 = vpop.f32.mrf.mxu0
  %v428 = vpop.f32.mrf.mxu0
  %v429 = vadd.f32 %v98, %v428
  %v430 = vpop.f32.mrf.mxu0
  %431 = vmatprep.mubr.bf16.mxu0 %v187
  %432 = vmatmul.mubr.bf16.gmra.mxu0 %v186
  %v433 = vpop.f32.mrf.mxu0
  %v434 = vadd.f32 %v98, %v433
  %v435 = vpop.f32.mrf.mxu0
  %v436 = vpop.f32.mrf.mxu0
  %v437 = vadd.f32 %v98, %v436
  %v438 = vpop.f32.mrf.mxu0
  %439 = vmatprep.mubr.bf16.mxu0 %v190
  %440 = vmatmul.mubr.bf16.gmra.mxu0 %v189
  %v441 = vpop.f32.mrf.mxu0
  %v442 = vadd.f32 %v98, %v441
  %v443 = vpop.f32.mrf.mxu0
  %v444 = vpop.f32.mrf.mxu0
  %v445 = vadd.f32 %v98, %v444
  %v446 = vpop.f32.mrf.mxu0
  %447 = vmatprep.mubr.bf16.mxu0 %v193
  %448 = vmatmul.mubr.bf16.gmra.mxu0 %v192
  %v449 = vpop.f32.mrf.mxu0
  %v450 = vadd.f32 %v98, %v449
  %v451 = vpop.f32.mrf.mxu0
  %v452 = vpop.f32.mrf.mxu0
  %v453 = vadd.f32 %v98, %v452
  %v454 = vpop.f32.mrf.mxu0
  %455 = vmatprep.mubr.bf16.mxu0 %v196
  %456 = vmatmul.mubr.bf16.gmra.mxu0 %v195
  %v457 = vpop.f32.mrf.mxu0
  %v458 = vadd.f32 %v98, %v457
  %v459 = vpop.f32.mrf.mxu0
  %v460 = vpop.f32.mrf.mxu0
  %v461 = vadd.f32 %v98, %v460
  %v462 = vpop.f32.mrf.mxu0
  %463 = vmatprep.mubr.bf16.mxu0 %v199
  %464 = vmatmul.mubr.bf16.gmra.mxu0 %v198
  %v465 = vpop.f32.mrf.mxu0
  %v466 = vadd.f32 %v98, %v465
  %v467 = vpop.f32.mrf.mxu0
  %v468 = vpop.f32.mrf.mxu0
  %v469 = vadd.f32 %v98, %v468
  %v470 = vpop.f32.mrf.mxu0
  %471 = vmatprep.mubr.bf16.mxu0 %v202
  %472 = vmatmul.mubr.bf16.gmra.mxu0 %v201
  %v473 = vpop.f32.mrf.mxu0
  %v474 = vadd.f32 %v98, %v473
  %v475 = vpop.f32.mrf.mxu0
  %v476 = vpop.f32.mrf.mxu0
  %v477 = vadd.f32 %v98, %v476
  %v478 = vpop.f32.mrf.mxu0
  %479 = vdwg.mxu0
  %480 = vmatprep.subr.bf16.mxu0 0
  %481 = vmatpush1.bf16.msra.mxu0 0
  %482 = vmatprep.subr.bf16.mxu0 0
  %483 = vmatpush1.bf16.msra.mxu0 %v334
  %484 = vmatprep.subr.bf16.mxu0 0
  %485 = vmatpush1.bf16.msra.mxu0 %v333
  %486 = vmatprep.subr.bf16.mxu0 0
  %487 = vmatpush1.bf16.msra.mxu0 %v332
  %488 = vmatprep.subr.bf16.mxu0 0
  %489 = vmatpush1.bf16.msra.mxu0 %v331
  %490 = vmatprep.subr.bf16.mxu0 0
  %491 = vmatpush1.bf16.msra.mxu0 %v330
  %492 = vmatprep.subr.bf16.mxu0 0
  %493 = vmatpush1.bf16.msra.mxu0 %v329
  %494 = vmatprep.subr.bf16.mxu0 0
  %495 = vmatpush1.bf16.msra.mxu0 %v328
  %496 = vmatprep.subr.bf16.mxu0 0
  %497 = vmatpush2.bf16.msra.mxu0 0
  %498 = vmatprep.subr.bf16.mxu0 0
  %499 = vmatpush2.bf16.msra.mxu0 0
  %500 = vmatprep.subr.bf16.mxu0 0
  %501 = vmatpush2.bf16.msra.mxu0 0
  %502 = vmatprep.subr.bf16.mxu0 0
  %503 = vmatpush2.bf16.msra.mxu0 0
  %504 = vmatprep.subr.bf16.mxu0 0
  %505 = vmatpush2.bf16.msra.mxu0 0
  %506 = vmatprep.subr.bf16.mxu0 0
  %507 = vmatpush2.bf16.msra.mxu0 0
  %508 = vmatprep.subr.bf16.mxu0 0
  %509 = vmatpush2.bf16.msra.mxu0 0
  %510 = vmatprep.subr.bf16.mxu0 0
  %511 = vmatpush2.bf16.msra.mxu0 0
  %512 = vmatprep.mubr.bf16.mxu0 0
  %513 = vmatmul.mubr.bf16.gmra.mxu0 %v360
  %v514 = vpop.f32.mrf.mxu0
  %v515 = vadd.f32 %v418, %v514
  %v516 = vpop.f32.mrf.mxu0
  %v517 = vpop.f32.mrf.mxu0
  %v518 = vadd.f32 %v421, %v517
  %v519 = vpop.f32.mrf.mxu0
  %520 = vmatprep.mubr.bf16.mxu0 0
  %521 = vmatmul.mubr.bf16.gmra.mxu0 %v363
  %v522 = vpop.f32.mrf.mxu0
  %v523 = vadd.f32 %v426, %v522
  %v524 = vpop.f32.mrf.mxu0
  %v525 = vpop.f32.mrf.mxu0
  %v526 = vadd.f32 %v429, %v525
  %v527 = vpop.f32.mrf.mxu0
  %528 = vmatprep.mubr.bf16.mxu0 0
  %529 = vmatmul.mubr.bf16.gmra.mxu0 %v366
  %v530 = vpop.f32.mrf.mxu0
  %v531 = vadd.f32 %v434, %v530
  %v532 = vpop.f32.mrf.mxu0
  %v533 = vpop.f32.mrf.mxu0
  %v534 = vadd.f32 %v437, %v533
  %v535 = vpop.f32.mrf.mxu0
  %536 = vmatprep.mubr.bf16.mxu0 0
  %537 = vmatmul.mubr.bf16.gmra.mxu0 %v369
  %v538 = vpop.f32.mrf.mxu0
  %v539 = vadd.f32 %v442, %v538
  %v540 = vpop.f32.mrf.mxu0
  %v541 = vpop.f32.mrf.mxu0
  %v542 = vadd.f32 %v445, %v541
  %v543 = vpop.f32.mrf.mxu0
  %544 = vmatprep.mubr.bf16.mxu0 0
  %545 = vmatmul.mubr.bf16.gmra.mxu0 %v372
  %v546 = vpop.f32.mrf.mxu0
  %v547 = vadd.f32 %v450, %v546
  %v548 = vpop.f32.mrf.mxu0
  %v549 = vpop.f32.mrf.mxu0
  %v550 = vadd.f32 %v453, %v549
  %v551 = vpop.f32.mrf.mxu0
  %552 = vmatprep.mubr.bf16.mxu0 0
  %553 = vmatmul.mubr.bf16.gmra.mxu0 %v375
  %v554 = vpop.f32.mrf.mxu0
  %v555 = vadd.f32 %v458, %v554
  %v556 = vpop.f32.mrf.mxu0
  %v557 = vpop.f32.mrf.mxu0
  %v558 = vadd.f32 %v461, %v557
  %v559 = vpop.f32.mrf.mxu0
  %560 = vmatprep.mubr.bf16.mxu0 0
  %561 = vmatmul.mubr.bf16.gmra.mxu0 %v378
  %v562 = vpop.f32.mrf.mxu0
  %v563 = vadd.f32 %v466, %v562
  %v564 = vpop.f32.mrf.mxu0
  %v565 = vpop.f32.mrf.mxu0
  %v566 = vadd.f32 %v469, %v565
  %v567 = vpop.f32.mrf.mxu0
  %568 = vmatprep.mubr.bf16.mxu0 0
  %569 = vmatmul.mubr.bf16.gmra.mxu0 %v381
  %v570 = vpop.f32.mrf.mxu0
  %v571 = vadd.f32 %v474, %v570
  %v572 = vpop.f32.mrf.mxu0
  %v573 = vpop.f32.mrf.mxu0
  %v574 = vadd.f32 %v477, %v573
  %v575 = vpop.f32.mrf.mxu0
  %576 = vdwg.mxu0
  %v577 = vmax.f32 %v515, 0.0
  %v578 = vmax.f32 %v518, 0.0
  %v579 = vmax.f32 %v523, 0.0
  %v580 = vmax.f32 %v526, 0.0
  %v581 = vmax.f32 %v531, 0.0
  %v582 = vmax.f32 %v534, 0.0
  %v583 = vmax.f32 %v539, 0.0
  %v584 = vmax.f32 %v542, 0.0
  %v585 = vmax.f32 %v547, 0.0
  %v586 = vmax.f32 %v550, 0.0
  %v587 = vmax.f32 %v555, 0.0
  %v588 = vmax.f32 %v558, 0.0
  %v589 = vmax.f32 %v563, 0.0
  %v590 = vmax.f32 %v566, 0.0
  %v591 = vmax.f32 %v571, 0.0
  %v592 = vmax.f32 %v574, 0.0
  %v593 = vpack.c.bf16 %v578, %v577
  %v594 = vpack.c.bf16 %v580, %v579
  %v595 = vpack.c.bf16 %v582, %v581
  %v596 = vpack.c.bf16 %v584, %v583
  %v597 = vpack.c.bf16 %v586, %v585
  %v598 = vpack.c.bf16 %v588, %v587
  %v599 = vpack.c.bf16 %v590, %v589
  %v600 = vpack.c.bf16 %v592, %v591
  %v609 = vunpack.c.l.b16 %v593
  %v610 = vunpack.c.h.b16 %v593
  %v611 = vunpack.c.l.b16 %v594
  %v612 = vunpack.c.h.b16 %v594
  %v613 = vunpack.c.l.b16 %v595
  %v614 = vunpack.c.h.b16 %v595
  %v615 = vunpack.c.l.b16 %v596
  %v616 = vunpack.c.h.b16 %v596
  %v617 = vunpack.c.l.b16 %v597
  %v618 = vunpack.c.h.b16 %v597
  %v619 = vunpack.c.l.b16 %v598
  %v620 = vunpack.c.h.b16 %v598
  %v621 = vunpack.c.l.b16 %v599
  %v622 = vunpack.c.h.b16 %v599
  %v623 = vunpack.c.l.b16 %v600
  %v624 = vunpack.c.h.b16 %v600
  %v625 = vpack.c.b16 %v609, %v609
  %v626 = vpack.c.b16 %v610, %v610
  %v627 = vpack.c.b16 %v611, %v611
  %v628 = vpack.c.b16 %v612, %v612
  %v629 = vpack.c.b16 %v613, %v613
  %v630 = vpack.c.b16 %v614, %v614
  %v631 = vpack.c.b16 %v615, %v615
  %v632 = vpack.c.b16 %v616, %v616
  %v633 = vpack.c.b16 %v617, %v617
  %v634 = vpack.c.b16 %v618, %v618
  %v635 = vpack.c.b16 %v619, %v619
  %v636 = vpack.c.b16 %v620, %v620
  %v637 = vpack.c.b16 %v621, %v621
  %v638 = vpack.c.b16 %v622, %v622
  %v639 = vpack.c.b16 %v623, %v623
  %v640 = vpack.c.b16 %v624, %v624
  %657 = vst [vmem:[%s3] sm:$0xf] %v625
  %658 = vst [vmem:[%s3 + $0x4] sm:$0xf] %v626
  %659 = vst [vmem:[%s3 + $0x8] sm:$0xf] %v627
  %660 = vst [vmem:[%s3 + $0xc] sm:$0xf] %v628
  %661 = vst [vmem:[%s3 + $0x10] sm:$0xf] %v629
  %662 = vst [vmem:[%s3 + $0x14] sm:$0xf] %v630
  %663 = vst [vmem:[%s3 + $0x18] sm:$0xf] %v631
  %664 = vst [vmem:[%s3 + $0x1c] sm:$0xf] %v632
  %665 = vst [vmem:[%s3 + $0x20] sm:$0xf] %v633
  %666 = vst [vmem:[%s3 + $0x24] sm:$0xf] %v634
  %667 = vst [vmem:[%s3 + $0x28] sm:$0xf] %v635
  %668 = vst [vmem:[%s3 + $0x2c] sm:$0xf] %v636
  %669 = vst [vmem:[%s3 + $0x30] sm:$0xf] %v637
  %670 = vst [vmem:[%s3 + $0x34] sm:$0xf] %v638
  %671 = vst [vmem:[%s3 + $0x38] sm:$0xf] %v639
  %672 = vst [vmem:[%s3 + $0x3c] sm:$0xf] %v640
  // Predicated region
  $region14: #{deeplab_forward.30} parent=0 // pred_check
    _
  $region15: #{deeplab_forward.30} parent=0 // pred_check_branch
    %674 = sbr.rel (0) target = $region17
  $region16: #{deeplab_forward.30} parent=0 // pred_region
    _
  $region17: #{deeplab_forward.30} parent=0 // pred_fallthru
    _
  // Predicated region
  $region18: #{deeplab_forward.30} parent=0 // pred_check
    _
  $region19: #{deeplab_forward.30} parent=0 // pred_check_branch
    %676 = sbr.rel (0) target = $region21
  $region20: #{deeplab_forward.30} parent=0 // pred_region
    _
  $region21: #{deeplab_forward.30} parent=0 // pred_fallthru
    _

// kernel: deeplab_forward.31
$region0: #{deeplab_forward.31}
  #allocation0 [shape = 'u32[]', space=smem, size = 0x4, offset = 0x4, fixed_abs, tag = 'smem constant byte address 0x4 - core index']
  #allocation1 [shape = 'u32[144,128]{1,0:T(1,128)}', space=vmem, size = 0x12000, scoped, tag = 'internal scratch']
  %s0 = inlined_call_operand.vmem [shape: bf16[128,288], index: 0, kind: input, shape index: {}]
  %s1 = inlined_call_operand.vmem [shape: bf16[288,128], index: 1, kind: input, shape index: {}]
  %s2 = inlined_call_operand.vmem [shape: f32[1,128], index: 2, kind: input, shape index: {}]
  %s3 = inlined_call_operand.vmem [shape: bf16[128,128], index: 3, kind: output, shape index: {}]
  %s4 = sld [smem:[#allocation0]]
  $region22: #{deeplab_forward.31} parent=0
    _
  %s6 = ssub.s32 1, %s4
  %s7 = scalar_select 0, %s6, %s4
  // Predicated region
  $region2: #{deeplab_forward.31} parent=0 // pred_check
    _
  $region3: #{deeplab_forward.31} parent=0 // pred_check_branch
    %9 = sbr.rel (0) target = $region5
  $region4: #{deeplab_forward.31} parent=0 // pred_region
    _
  $region5: #{deeplab_forward.31} parent=0 // pred_fallthru
    _
  // Predicated region
  $region6: #{deeplab_forward.31} parent=0 // pred_check
    _
  $region7: #{deeplab_forward.31} parent=0 // pred_check_branch
    %11 = sbr.rel (0) target = $region9
  $region8: #{deeplab_forward.31} parent=0 // pred_region
    _
  $region9: #{deeplab_forward.31} parent=0 // pred_fallthru
    _
  // Predicated region
  $region10: #{deeplab_forward.31} parent=0 // pred_check
    _
  $region11: #{deeplab_forward.31} parent=0 // pred_check_branch
    %13 = sbr.rel (0) target = $region13
  $region12: #{deeplab_forward.31} parent=0 // pred_region
    _
  $region13: #{deeplab_forward.31} parent=0 // pred_fallthru
    _
  %v15 = vld [vmem:[%s0] sm:$0xff]
  %v16 = vld [vmem:[%s0 + $0x8] sm:$0xf]
  %v17 = vld [vmem:[%s0 + $0xc] sm:$0xff]
  %v18 = vld [vmem:[%s0 + $0x14] sm:$0xf]
  %v19 = vld [vmem:[%s0 + $0x18] sm:$0xff]
  %v20 = vld [vmem:[%s0 + $0x20] sm:$0xf]
  %v21 = vld [vmem:[%s0 + $0x24] sm:$0xff]
  %v22 = vld [vmem:[%s0 + $0x2c] sm:$0xf]
  %v23 = vld [vmem:[%s0 + $0x30] sm:$0xff]
  %v24 = vld [vmem:[%s0 + $0x38] sm:$0xf]
  %v25 = vld [vmem:[%s0 + $0x3c] sm:$0xff]
  %v26 = vld [vmem:[%s0 + $0x44] sm:$0xf]
  %v27 = vld [vmem:[%s0 + $0x48] sm:$0xff]
  %v28 = vld [vmem:[%s0 + $0x50] sm:$0xf]
  %v29 = vld [vmem:[%s0 + $0x54] sm:$0xff]
  %v30 = vld [vmem:[%s0 + $0x5c] sm:$0xf]
  %v31 = vld [vmem:[%s0 + $0x60] sm:$0xff]
  %v32 = vld [vmem:[%s0 + $0x68] sm:$0xf]
  %v33 = vld [vmem:[%s0 + $0x6c] sm:$0xff]
  %v34 = vld [vmem:[%s0 + $0x74] sm:$0xf]
  %v35 = vld [vmem:[%s0 + $0x78] sm:$0xff]
  %v36 = vld [vmem:[%s0 + $0x80] sm:$0xf]
  %v37 = vld [vmem:[%s0 + $0x84] sm:$0xff]
  %v38 = vld [vmem:[%s0 + $0x8c] sm:$0xf]
  %v39 = vld [vmem:[%s0 + $0x90] sm:$0xff]
  %v40 = vld [vmem:[%s0 + $0x98] sm:$0xf]
  %v41 = vld [vmem:[%s0 + $0x9c] sm:$0xff]
  %v42 = vld [vmem:[%s0 + $0xa4] sm:$0xf]
  %v43 = vld [vmem:[%s0 + $0xa8] sm:$0xff]
  %v44 = vld [vmem:[%s0 + $0xb0] sm:$0xf]
  %v45 = vld [vmem:[%s0 + $0xb4] sm:$0xff]
  %v46 = vld [vmem:[%s0 + $0xbc] sm:$0xf]
  %v47 = vld [vmem:[%s1] sm:$0xf]
  %v48 = vld [vmem:[%s1 + $0x4] sm:$0xf]
  %v49 = vld [vmem:[%s1 + $0x8] sm:$0xf]
  %v50 = vld [vmem:[%s1 + $0xc] sm:$0xf]
  %v51 = vld [vmem:[%s1 + $0x10] sm:$0xf]
  %v52 = vld [vmem:[%s1 + $0x14] sm:$0xf]
  %v53 = vld [vmem:[%s1 + $0x18] sm:$0xf]
  %v54 = vld [vmem:[%s1 + $0x1c] sm:$0xf]
  %v55 = vld [vmem:[%s1 + $0x20] sm:$0xf]
  %v56 = vld [vmem:[%s1 + $0x24] sm:$0xf]
  %v57 = vld [vmem:[%s1 + $0x28] sm:$0xf]
  %v58 = vld [vmem:[%s1 + $0x2c] sm:$0xf]
  %v59 = vld [vmem:[%s1 + $0x30] sm:$0xf]
  %v60 = vld [vmem:[%s1 + $0x34] sm:$0xf]
  %v61 = vld [vmem:[%s1 + $0x38] sm:$0xf]
  %v62 = vld [vmem:[%s1 + $0x3c] sm:$0xf]
  %v63 = vld [vmem:[%s1 + $0x40] sm:$0xf]
  %v64 = vld [vmem:[%s1 + $0x44] sm:$0xf]
  %v65 = vld [vmem:[%s1 + $0x48] sm:$0xf]
  %v66 = vld [vmem:[%s1 + $0x4c] sm:$0xf]
  %v67 = vld [vmem:[%s1 + $0x50] sm:$0xf]
  %v68 = vld [vmem:[%s1 + $0x54] sm:$0xf]
  %v69 = vld [vmem:[%s1 + $0x58] sm:$0xf]
  %v70 = vld [vmem:[%s1 + $0x5c] sm:$0xf]
  %v71 = vld [vmem:[%s1 + $0x60] sm:$0xf]
  %v72 = vld [vmem:[%s1 + $0x64] sm:$0xf]
  %v73 = vld [vmem:[%s1 + $0x68] sm:$0xf]
  %v74 = vld [vmem:[%s1 + $0x6c] sm:$0xf]
  %v75 = vld [vmem:[%s1 + $0x70] sm:$0xf]
  %v76 = vld [vmem:[%s1 + $0x74] sm:$0xf]
  %v77 = vld [vmem:[%s1 + $0x78] sm:$0xf]
  %v78 = vld [vmem:[%s1 + $0x7c] sm:$0xf]
  %v79 = vld [vmem:[%s1 + $0x80] sm:$0xf]
  %v80 = vld [vmem:[%s1 + $0x84] sm:$0xf]
  %v81 = vld [vmem:[%s1 + $0x88] sm:$0xf]
  %v82 = vld [vmem:[%s1 + $0x8c] sm:$0xf]
  %v83 = vld [vmem:[%s2] sm:$0x1]
  %v85 = vlaneseq
  %v86 = vshrl.u32 %v85, 7
  %v87 = vsub.s32 0, %v86
  %v88 = vrot.slane %v83, %v87
  %v122 = vunpack.c.l.b16 %v15
  %v123 = vunpack.c.h.b16 %v15
  %v124 = vunpack.c.l.b16 %v16
  %v125 = vunpack.c.l.b16 %v17
  %v126 = vunpack.c.h.b16 %v17
  %v127 = vunpack.c.l.b16 %v18
  %v128 = vunpack.c.l.b16 %v19
  %v129 = vunpack.c.h.b16 %v19
  %v130 = vunpack.c.l.b16 %v20
  %v131 = vunpack.c.l.b16 %v21
  %v132 = vunpack.c.h.b16 %v21
  %v133 = vunpack.c.l.b16 %v22
  %v134 = vunpack.c.l.b16 %v23
  %v135 = vunpack.c.h.b16 %v23
  %v136 = vunpack.c.l.b16 %v24
  %v137 = vunpack.c.l.b16 %v25
  %v138 = vunpack.c.h.b16 %v25
  %v139 = vunpack.c.l.b16 %v26
  %v140 = vunpack.c.l.b16 %v27
  %v141 = vunpack.c.h.b16 %v27
  %v142 = vunpack.c.l.b16 %v28
  %v143 = vunpack.c.l.b16 %v29
  %v144 = vunpack.c.h.b16 %v29
  %v145 = vunpack.c.l.b16 %v30
  %v146 = vunpack.c.l.b16 %v31
  %v147 = vunpack.c.h.b16 %v31
  %v148 = vunpack.c.l.b16 %v32
  %v149 = vunpack.c.l.b16 %v33
  %v150 = vunpack.c.h.b16 %v33
  %v151 = vunpack.c.l.b16 %v34
  %v152 = vunpack.c.l.b16 %v35
  %v153 = vunpack.c.h.b16 %v35
  %v154 = vunpack.c.l.b16 %v36
  %v155 = vunpack.c.l.b16 %v37
  %v156 = vunpack.c.h.b16 %v37
  %v157 = vunpack.c.l.b16 %v38
  %v158 = vunpack.c.l.b16 %v39
  %v159 = vunpack.c.h.b16 %v39
  %v160 = vunpack.c.l.b16 %v40
  %v161 = vunpack.c.l.b16 %v41
  %v162 = vunpack.c.h.b16 %v41
  %v163 = vunpack.c.l.b16 %v42
  %v164 = vunpack.c.l.b16 %v43
  %v165 = vunpack.c.h.b16 %v43
  %v166 = vunpack.c.l.b16 %v44
  %v167 = vunpack.c.l.b16 %v45
  %v168 = vunpack.c.h.b16 %v45
  %v169 = vunpack.c.l.b16 %v46
  %v170 = vpack.c.b16 %v125, %v122
  %v171 = vpack.c.b16 %v126, %v123
  %v172 = vpack.c.b16 %v127, %v124
  %v173 = vpack.c.b16 %v131, %v128
  %v174 = vpack.c.b16 %v132, %v129
  %v175 = vpack.c.b16 %v133, %v130
  %v176 = vpack.c.b16 %v137, %v134
  %v177 = vpack.c.b16 %v138, %v135
  %v178 = vpack.c.b16 %v139, %v136
  %v179 = vpack.c.b16 %v143, %v140
  %v180 = vpack.c.b16 %v144, %v141
  %v181 = vpack.c.b16 %v145, %v142
  %v182 = vpack.c.b16 %v149, %v146
  %v183 = vpack.c.b16 %v150, %v147
  %v184 = vpack.c.b16 %v151, %v148
  %v185 = vpack.c.b16 %v155, %v152
  %v186 = vpack.c.b16 %v156, %v153
  %v187 = vpack.c.b16 %v157, %v154
  %v188 = vpack.c.b16 %v161, %v158
  %v189 = vpack.c.b16 %v162, %v159
  %v190 = vpack.c.b16 %v163, %v160
  %v191 = vpack.c.b16 %v167, %v164
  %v192 = vpack.c.b16 %v168, %v165
  %v193 = vpack.c.b16 %v169, %v166
  %v246 = vunpack.c.l.b16 %v47
  %v247 = vunpack.c.l.b16 %v48
  %v248 = vunpack.c.l.b16 %v49
  %v249 = vunpack.c.l.b16 %v50
  %v250 = vunpack.c.l.b16 %v51
  %v251 = vunpack.c.l.b16 %v52
  %v252 = vunpack.c.l.b16 %v53
  %v253 = vunpack.c.l.b16 %v54
  %v254 = vunpack.c.l.b16 %v55
  %v255 = vunpack.c.l.b16 %v56
  %v256 = vunpack.c.l.b16 %v57
  %v257 = vunpack.c.l.b16 %v58
  %v258 = vunpack.c.l.b16 %v59
  %v259 = vunpack.c.l.b16 %v60
  %v260 = vunpack.c.l.b16 %v61
  %v261 = vunpack.c.l.b16 %v62
  %v262 = vunpack.c.l.b16 %v63
  %v263 = vunpack.c.l.b16 %v64
  %v264 = vunpack.c.l.b16 %v65
  %v265 = vunpack.c.l.b16 %v66
  %v266 = vunpack.c.l.b16 %v67
  %v267 = vunpack.c.l.b16 %v68
  %v268 = vunpack.c.l.b16 %v69
  %v269 = vunpack.c.l.b16 %v70
  %v270 = vunpack.c.l.b16 %v71
  %v271 = vunpack.c.l.b16 %v72
  %v272 = vunpack.c.l.b16 %v73
  %v273 = vunpack.c.l.b16 %v74
  %v274 = vunpack.c.l.b16 %v75
  %v275 = vunpack.c.l.b16 %v76
  %v276 = vunpack.c.l.b16 %v77
  %v277 = vunpack.c.l.b16 %v78
  %v278 = vunpack.c.l.b16 %v79
  %v279 = vunpack.c.l.b16 %v80
  %v280 = vunpack.c.l.b16 %v81
  %v281 = vunpack.c.l.b16 %v82
  %v282 = vpack.c.b16 %v247, %v246
  %v283 = vpack.c.b16 %v249, %v248
  %v284 = vpack.c.b16 %v251, %v250
  %v285 = vpack.c.b16 %v253, %v252
  %v286 = vpack.c.b16 %v255, %v254
  %v287 = vpack.c.b16 %v257, %v256
  %v288 = vpack.c.b16 %v259, %v258
  %v289 = vpack.c.b16 %v261, %v260
  %v290 = vpack.c.b16 %v263, %v262
  %v291 = vpack.c.b16 %v265, %v264
  %v292 = vpack.c.b16 %v267, %v266
  %v293 = vpack.c.b16 %v269, %v268
  %v294 = vpack.c.b16 %v271, %v270
  %v295 = vpack.c.b16 %v273, %v272
  %v296 = vpack.c.b16 %v275, %v274
  %v297 = vpack.c.b16 %v277, %v276
  %v298 = vpack.c.b16 %v279, %v278
  %v299 = vpack.c.b16 %v281, %v280
  %vm318 = vcmask 261120
  %v320 = vsel %vm318, %v172, 0
  %v323 = vsel %vm318, %v175, 0
  %v326 = vsel %vm318, %v178, 0
  %v329 = vsel %vm318, %v181, 0
  %v332 = vsel %vm318, %v184, 0
  %v335 = vsel %vm318, %v187, 0
  %v338 = vsel %vm318, %v190, 0
  %v341 = vsel %vm318, %v193, 0
  %343 = vmatprep.subr.bf16.mxu0 0
  %344 = vmatpush1.bf16.msra.mxu0 %v289
  %345 = vmatprep.subr.bf16.mxu0 0
  %346 = vmatpush1.bf16.msra.mxu0 %v288
  %347 = vmatprep.subr.bf16.mxu0 0
  %348 = vmatpush1.bf16.msra.mxu0 %v287
  %349 = vmatprep.subr.bf16.mxu0 0
  %350 = vmatpush1.bf16.msra.mxu0 %v286
  %351 = vmatprep.subr.bf16.mxu0 0
  %352 = vmatpush1.bf16.msra.mxu0 %v285
  %353 = vmatprep.subr.bf16.mxu0 0
  %354 = vmatpush1.bf16.msra.mxu0 %v284
  %355 = vmatprep.subr.bf16.mxu0 0
  %356 = vmatpush1.bf16.msra.mxu0 %v283
  %357 = vmatprep.subr.bf16.mxu0 0
  %358 = vmatpush1.bf16.msra.mxu0 %v282
  %359 = vmatprep.subr.bf16.mxu0 0
  %360 = vmatpush2.bf16.msra.mxu0 %v297
  %361 = vmatprep.subr.bf16.mxu0 0
  %362 = vmatpush2.bf16.msra.mxu0 %v296
  %363 = vmatprep.subr.bf16.mxu0 0
  %364 = vmatpush2.bf16.msra.mxu0 %v295
  %365 = vmatprep.subr.bf16.mxu0 0
  %366 = vmatpush2.bf16.msra.mxu0 %v294
  %367 = vmatprep.subr.bf16.mxu0 0
  %368 = vmatpush2.bf16.msra.mxu0 %v293
  %369 = vmatprep.subr.bf16.mxu0 0
  %370 = vmatpush2.bf16.msra.mxu0 %v292
  %371 = vmatprep.subr.bf16.mxu0 0
  %372 = vmatpush2.bf16.msra.mxu0 %v291
  %373 = vmatprep.subr.bf16.mxu0 0
  %374 = vmatpush2.bf16.msra.mxu0 %v290
  %375 = vmatprep.mubr.bf16.mxu0 %v171
  %376 = vmatmul.mubr.bf16.gmra.mxu0 %v170
  %v377 = vpop.f32.mrf.mxu0
  %v378 = vadd.f32 %v88, %v377
  %v379 = vpop.f32.mrf.mxu0
  %v380 = vpop.f32.mrf.mxu0
  %v381 = vadd.f32 %v88, %v380
  %v382 = vpop.f32.mrf.mxu0
  %383 = vmatprep.mubr.bf16.mxu0 %v174
  %384 = vmatmul.mubr.bf16.gmra.mxu0 %v173
  %v385 = vpop.f32.mrf.mxu0
  %v386 = vadd.f32 %v88, %v385
  %v387 = vpop.f32.mrf.mxu0
  %v388 = vpop.f32.mrf.mxu0
  %v389 = vadd.f32 %v88, %v388
  %v390 = vpop.f32.mrf.mxu0
  %391 = vmatprep.mubr.bf16.mxu0 %v177
  %392 = vmatmul.mubr.bf16.gmra.mxu0 %v176
  %v393 = vpop.f32.mrf.mxu0
  %v394 = vadd.f32 %v88, %v393
  %v395 = vpop.f32.mrf.mxu0
  %v396 = vpop.f32.mrf.mxu0
  %v397 = vadd.f32 %v88, %v396
  %v398 = vpop.f32.mrf.mxu0
  %399 = vmatprep.mubr.bf16.mxu0 %v180
  %400 = vmatmul.mubr.bf16.gmra.mxu0 %v179
  %v401 = vpop.f32.mrf.mxu0
  %v402 = vadd.f32 %v88, %v401
  %v403 = vpop.f32.mrf.mxu0
  %v404 = vpop.f32.mrf.mxu0
  %v405 = vadd.f32 %v88, %v404
  %v406 = vpop.f32.mrf.mxu0
  %407 = vmatprep.mubr.bf16.mxu0 %v183
  %408 = vmatmul.mubr.bf16.gmra.mxu0 %v182
  %v409 = vpop.f32.mrf.mxu0
  %v410 = vadd.f32 %v88, %v409
  %v411 = vpop.f32.mrf.mxu0
  %v412 = vpop.f32.mrf.mxu0
  %v413 = vadd.f32 %v88, %v412
  %v414 = vpop.f32.mrf.mxu0
  %415 = vmatprep.mubr.bf16.mxu0 %v186
  %416 = vmatmul.mubr.bf16.gmra.mxu0 %v185
  %v417 = vpop.f32.mrf.mxu0
  %v418 = vadd.f32 %v88, %v417
  %v419 = vpop.f32.mrf.mxu0
  %v420 = vpop.f32.mrf.mxu0
  %v421 = vadd.f32 %v88, %v420
  %v422 = vpop.f32.mrf.mxu0
  %423 = vmatprep.mubr.bf16.mxu0 %v189
  %424 = vmatmul.mubr.bf16.gmra.mxu0 %v188
  %v425 = vpop.f32.mrf.mxu0
  %v426 = vadd.f32 %v88, %v425
  %v427 = vpop.f32.mrf.mxu0
  %v428 = vpop.f32.mrf.mxu0
  %v429 = vadd.f32 %v88, %v428
  %v430 = vpop.f32.mrf.mxu0
  %431 = vmatprep.mubr.bf16.mxu0 %v192
  %432 = vmatmul.mubr.bf16.gmra.mxu0 %v191
  %v433 = vpop.f32.mrf.mxu0
  %v434 = vadd.f32 %v88, %v433
  %v435 = vpop.f32.mrf.mxu0
  %v436 = vpop.f32.mrf.mxu0
  %v437 = vadd.f32 %v88, %v436
  %v438 = vpop.f32.mrf.mxu0
  %439 = vdwg.mxu0
  %440 = vmatprep.subr.bf16.mxu0 0
  %441 = vmatpush1.bf16.msra.mxu0 0
  %442 = vmatprep.subr.bf16.mxu0 0
  %443 = vmatpush1.bf16.msra.mxu0 0
  %444 = vmatprep.subr.bf16.mxu0 0
  %445 = vmatpush1.bf16.msra.mxu0 0
  %446 = vmatprep.subr.bf16.mxu0 0
  %447 = vmatpush1.bf16.msra.mxu0 0
  %448 = vmatprep.subr.bf16.mxu0 0
  %449 = vmatpush1.bf16.msra.mxu0 0
  %450 = vmatprep.subr.bf16.mxu0 0
  %451 = vmatpush1.bf16.msra.mxu0 0
  %452 = vmatprep.subr.bf16.mxu0 0
  %453 = vmatpush1.bf16.msra.mxu0 %v299
  %454 = vmatprep.subr.bf16.mxu0 0
  %455 = vmatpush1.bf16.msra.mxu0 %v298
  %456 = vmatprep.subr.bf16.mxu0 0
  %457 = vmatpush2.bf16.msra.mxu0 0
  %458 = vmatprep.subr.bf16.mxu0 0
  %459 = vmatpush2.bf16.msra.mxu0 0
  %460 = vmatprep.subr.bf16.mxu0 0
  %461 = vmatpush2.bf16.msra.mxu0 0
  %462 = vmatprep.subr.bf16.mxu0 0
  %463 = vmatpush2.bf16.msra.mxu0 0
  %464 = vmatprep.subr.bf16.mxu0 0
  %465 = vmatpush2.bf16.msra.mxu0 0
  %466 = vmatprep.subr.bf16.mxu0 0
  %467 = vmatpush2.bf16.msra.mxu0 0
  %468 = vmatprep.subr.bf16.mxu0 0
  %469 = vmatpush2.bf16.msra.mxu0 0
  %470 = vmatprep.subr.bf16.mxu0 0
  %471 = vmatpush2.bf16.msra.mxu0 0
  %472 = vmatprep.mubr.bf16.mxu0 0
  %473 = vmatmul.mubr.bf16.gmra.mxu0 %v320
  %v474 = vpop.f32.mrf.mxu0
  %v475 = vadd.f32 %v378, %v474
  %v476 = vpop.f32.mrf.mxu0
  %v477 = vpop.f32.mrf.mxu0
  %v478 = vadd.f32 %v381, %v477
  %v479 = vpop.f32.mrf.mxu0
  %480 = vmatprep.mubr.bf16.mxu0 0
  %481 = vmatmul.mubr.bf16.gmra.mxu0 %v323
  %v482 = vpop.f32.mrf.mxu0
  %v483 = vadd.f32 %v386, %v482
  %v484 = vpop.f32.mrf.mxu0
  %v485 = vpop.f32.mrf.mxu0
  %v486 = vadd.f32 %v389, %v485
  %v487 = vpop.f32.mrf.mxu0
  %488 = vmatprep.mubr.bf16.mxu0 0
  %489 = vmatmul.mubr.bf16.gmra.mxu0 %v326
  %v490 = vpop.f32.mrf.mxu0
  %v491 = vadd.f32 %v394, %v490
  %v492 = vpop.f32.mrf.mxu0
  %v493 = vpop.f32.mrf.mxu0
  %v494 = vadd.f32 %v397, %v493
  %v495 = vpop.f32.mrf.mxu0
  %496 = vmatprep.mubr.bf16.mxu0 0
  %497 = vmatmul.mubr.bf16.gmra.mxu0 %v329
  %v498 = vpop.f32.mrf.mxu0
  %v499 = vadd.f32 %v402, %v498
  %v500 = vpop.f32.mrf.mxu0
  %v501 = vpop.f32.mrf.mxu0
  %v502 = vadd.f32 %v405, %v501
  %v503 = vpop.f32.mrf.mxu0
  %504 = vmatprep.mubr.bf16.mxu0 0
  %505 = vmatmul.mubr.bf16.gmra.mxu0 %v332
  %v506 = vpop.f32.mrf.mxu0
  %v507 = vadd.f32 %v410, %v506
  %v508 = vpop.f32.mrf.mxu0
  %v509 = vpop.f32.mrf.mxu0
  %v510 = vadd.f32 %v413, %v509
  %v511 = vpop.f32.mrf.mxu0
  %512 = vmatprep.mubr.bf16.mxu0 0
  %513 = vmatmul.mubr.bf16.gmra.mxu0 %v335
  %v514 = vpop.f32.mrf.mxu0
  %v515 = vadd.f32 %v418, %v514
  %v516 = vpop.f32.mrf.mxu0
  %v517 = vpop.f32.mrf.mxu0
  %v518 = vadd.f32 %v421, %v517
  %v519 = vpop.f32.mrf.mxu0
  %520 = vmatprep.mubr.bf16.mxu0 0
  %521 = vmatmul.mubr.bf16.gmra.mxu0 %v338
  %v522 = vpop.f32.mrf.mxu0
  %v523 = vadd.f32 %v426, %v522
  %v524 = vpop.f32.mrf.mxu0
  %v525 = vpop.f32.mrf.mxu0
  %v526 = vadd.f32 %v429, %v525
  %v527 = vpop.f32.mrf.mxu0
  %528 = vmatprep.mubr.bf16.mxu0 0
  %529 = vmatmul.mubr.bf16.gmra.mxu0 %v341
  %v530 = vpop.f32.mrf.mxu0
  %v531 = vadd.f32 %v434, %v530
  %v532 = vpop.f32.mrf.mxu0
  %v533 = vpop.f32.mrf.mxu0
  %v534 = vadd.f32 %v437, %v533
  %v535 = vpop.f32.mrf.mxu0
  %536 = vdwg.mxu0
  %v537 = vmax.f32 %v475, 0.0
  %v538 = vmax.f32 %v478, 0.0
  %v539 = vmax.f32 %v483, 0.0
  %v540 = vmax.f32 %v486, 0.0
  %v541 = vmax.f32 %v491, 0.0
  %v542 = vmax.f32 %v494, 0.0
  %v543 = vmax.f32 %v499, 0.0
  %v544 = vmax.f32 %v502, 0.0
  %v545 = vmax.f32 %v507, 0.0
  %v546 = vmax.f32 %v510, 0.0
  %v547 = vmax.f32 %v515, 0.0
  %v548 = vmax.f32 %v518, 0.0
  %v549 = vmax.f32 %v523, 0.0
  %v550 = vmax.f32 %v526, 0.0
  %v551 = vmax.f32 %v531, 0.0
  %v552 = vmax.f32 %v534, 0.0
  %v553 = vpack.c.bf16 %v538, %v537
  %v554 = vpack.c.bf16 %v540, %v539
  %v555 = vpack.c.bf16 %v542, %v541
  %v556 = vpack.c.bf16 %v544, %v543
  %v557 = vpack.c.bf16 %v546, %v545
  %v558 = vpack.c.bf16 %v548, %v547
  %v559 = vpack.c.bf16 %v550, %v549
  %v560 = vpack.c.bf16 %v552, %v551
  %v569 = vunpack.c.l.b16 %v553
  %v570 = vunpack.c.h.b16 %v553
  %v571 = vunpack.c.l.b16 %v554
  %v572 = vunpack.c.h.b16 %v554
  %v573 = vunpack.c.l.b16 %v555
  %v574 = vunpack.c.h.b16 %v555
  %v575 = vunpack.c.l.b16 %v556
  %v576 = vunpack.c.h.b16 %v556
  %v577 = vunpack.c.l.b16 %v557
  %v578 = vunpack.c.h.b16 %v557
  %v579 = vunpack.c.l.b16 %v558
  %v580 = vunpack.c.h.b16 %v558
  %v581 = vunpack.c.l.b16 %v559
  %v582 = vunpack.c.h.b16 %v559
  %v583 = vunpack.c.l.b16 %v560
  %v584 = vunpack.c.h.b16 %v560
  %v585 = vpack.c.b16 %v569, %v569
  %v586 = vpack.c.b16 %v570, %v570
  %v587 = vpack.c.b16 %v571, %v571
  %v588 = vpack.c.b16 %v572, %v572
  %v589 = vpack.c.b16 %v573, %v573
  %v590 = vpack.c.b16 %v574, %v574
  %v591 = vpack.c.b16 %v575, %v575
  %v592 = vpack.c.b16 %v576, %v576
  %v593 = vpack.c.b16 %v577, %v577
  %v594 = vpack.c.b16 %v578, %v578
  %v595 = vpack.c.b16 %v579, %v579
  %v596 = vpack.c.b16 %v580, %v580
  %v597 = vpack.c.b16 %v581, %v581
  %v598 = vpack.c.b16 %v582, %v582
  %v599 = vpack.c.b16 %v583, %v583
  %v600 = vpack.c.b16 %v584, %v584
  %617 = vst [vmem:[%s3] sm:$0xf] %v585
  %618 = vst [vmem:[%s3 + $0x4] sm:$0xf] %v586
  %619 = vst [vmem:[%s3 + $0x8] sm:$0xf] %v587
  %620 = vst [vmem:[%s3 + $0xc] sm:$0xf] %v588
  %621 = vst [vmem:[%s3 + $0x10] sm:$0xf] %v589
  %622 = vst [vmem:[%s3 + $0x14] sm:$0xf] %v590
  %623 = vst [vmem:[%s3 + $0x18] sm:$0xf] %v591
  %624 = vst [vmem:[%s3 + $0x1c] sm:$0xf] %v592
  %625 = vst [vmem:[%s3 + $0x20] sm:$0xf] %v593
  %626 = vst [vmem:[%s3 + $0x24] sm:$0xf] %v594
  %627 = vst [vmem:[%s3 + $0x28] sm:$0xf] %v595
  %628 = vst [vmem:[%s3 + $0x2c] sm:$0xf] %v596
  %629 = vst [vmem:[%s3 + $0x30] sm:$0xf] %v597
  %630 = vst [vmem:[%s3 + $0x34] sm:$0xf] %v598
  %631 = vst [vmem:[%s3 + $0x38] sm:$0xf] %v599
  %632 = vst [vmem:[%s3 + $0x3c] sm:$0xf] %v600
  // Predicated region
  $region14: #{deeplab_forward.31} parent=0 // pred_check
    _
  $region15: #{deeplab_forward.31} parent=0 // pred_check_branch
    %634 = sbr.rel (0) target = $region17
  $region16: #{deeplab_forward.31} parent=0 // pred_region
    _
  $region17: #{deeplab_forward.31} parent=0 // pred_fallthru
    _
  // Predicated region
  $region18: #{deeplab_forward.31} parent=0 // pred_check
    _
  $region19: #{deeplab_forward.31} parent=0 // pred_check_branch
    %636 = sbr.rel (0) target = $region21
  $region20: #{deeplab_forward.31} parent=0 // pred_region
    _
  $region21: #{deeplab_forward.31} parent=0 // pred_fallthru
    _

// kernel: deeplab_forward.32
$region0: #{deeplab_forward.32}
  #allocation0 [shape = 'u32[]', space=smem, size = 0x4, offset = 0x4, fixed_abs, tag = 'smem constant byte address 0x4 - core index']
  #allocation1 [shape = 'u32[144,128]{1,0:T(1,128)}', space=vmem, size = 0x12000, scoped, tag = 'internal scratch']
  %s0 = inlined_call_operand.vmem [shape: bf16[128,32], index: 0, kind: input, shape index: {}]
  %s1 = inlined_call_operand.vmem [shape: bf16[32,128], index: 1, kind: input, shape index: {}]
  %s2 = inlined_call_operand.vmem [shape: f32[1,128], index: 2, kind: input, shape index: {}]
  %s3 = inlined_call_operand.vmem [shape: bf16[128,128], index: 3, kind: output, shape index: {}]
  %s4 = sld [smem:[#allocation0]]
  $region22: #{deeplab_forward.32} parent=0
    _
  %s6 = ssub.s32 1, %s4
  %s7 = scalar_select 0, %s6, %s4
  // Predicated region
  $region2: #{deeplab_forward.32} parent=0 // pred_check
    _
  $region3: #{deeplab_forward.32} parent=0 // pred_check_branch
    %9 = sbr.rel (0) target = $region5
  $region4: #{deeplab_forward.32} parent=0 // pred_region
    _
  $region5: #{deeplab_forward.32} parent=0 // pred_fallthru
    _
  // Predicated region
  $region6: #{deeplab_forward.32} parent=0 // pred_check
    _
  $region7: #{deeplab_forward.32} parent=0 // pred_check_branch
    %11 = sbr.rel (0) target = $region9
  $region8: #{deeplab_forward.32} parent=0 // pred_region
    _
  $region9: #{deeplab_forward.32} parent=0 // pred_fallthru
    _
  // Predicated region
  $region10: #{deeplab_forward.32} parent=0 // pred_check
    _
  $region11: #{deeplab_forward.32} parent=0 // pred_check_branch
    %13 = sbr.rel (0) target = $region13
  $region12: #{deeplab_forward.32} parent=0 // pred_region
    _
  $region13: #{deeplab_forward.32} parent=0 // pred_fallthru
    _
  %v15 = vld [vmem:[%s0] sm:$0xf]
  %v16 = vld [vmem:[%s0 + $0x4] sm:$0xf]
  %v17 = vld [vmem:[%s0 + $0x8] sm:$0xf]
  %v18 = vld [vmem:[%s0 + $0xc] sm:$0xf]
  %v19 = vld [vmem:[%s0 + $0x10] sm:$0xf]
  %v20 = vld [vmem:[%s0 + $0x14] sm:$0xf]
  %v21 = vld [vmem:[%s0 + $0x18] sm:$0xf]
  %v22 = vld [vmem:[%s0 + $0x1c] sm:$0xf]
  %v23 = vld [vmem:[%s0 + $0x20] sm:$0xf]
  %v24 = vld [vmem:[%s0 + $0x24] sm:$0xf]
  %v25 = vld [vmem:[%s0 + $0x28] sm:$0xf]
  %v26 = vld [vmem:[%s0 + $0x2c] sm:$0xf]
  %v27 = vld [vmem:[%s0 + $0x30] sm:$0xf]
  %v28 = vld [vmem:[%s0 + $0x34] sm:$0xf]
  %v29 = vld [vmem:[%s0 + $0x38] sm:$0xf]
  %v30 = vld [vmem:[%s0 + $0x3c] sm:$0xf]
  %v31 = vld [vmem:[%s1] sm:$0xf]
  %v32 = vld [vmem:[%s1 + $0x4] sm:$0xf]
  %v33 = vld [vmem:[%s1 + $0x8] sm:$0xf]
  %v34 = vld [vmem:[%s1 + $0xc] sm:$0xf]
  %v35 = vld [vmem:[%s2] sm:$0x1]
  %v37 = vlaneseq
  %v38 = vshrl.u32 %v37, 7
  %v39 = vsub.s32 0, %v38
  %v40 = vrot.slane %v35, %v39
  %v58 = vunpack.c.l.b16 %v15
  %v59 = vunpack.c.l.b16 %v16
  %v60 = vunpack.c.l.b16 %v17
  %v61 = vunpack.c.l.b16 %v18
  %v62 = vunpack.c.l.b16 %v19
  %v63 = vunpack.c.l.b16 %v20
  %v64 = vunpack.c.l.b16 %v21
  %v65 = vunpack.c.l.b16 %v22
  %v66 = vunpack.c.l.b16 %v23
  %v67 = vunpack.c.l.b16 %v24
  %v68 = vunpack.c.l.b16 %v25
  %v69 = vunpack.c.l.b16 %v26
  %v70 = vunpack.c.l.b16 %v27
  %v71 = vunpack.c.l.b16 %v28
  %v72 = vunpack.c.l.b16 %v29
  %v73 = vunpack.c.l.b16 %v30
  %v74 = vpack.c.b16 %v59, %v58
  %v75 = vpack.c.b16 %v61, %v60
  %v76 = vpack.c.b16 %v63, %v62
  %v77 = vpack.c.b16 %v65, %v64
  %v78 = vpack.c.b16 %v67, %v66
  %v79 = vpack.c.b16 %v69, %v68
  %v80 = vpack.c.b16 %v71, %v70
  %v81 = vpack.c.b16 %v73, %v72
  %v86 = vunpack.c.l.b16 %v31
  %v87 = vunpack.c.l.b16 %v32
  %v88 = vunpack.c.l.b16 %v33
  %v89 = vunpack.c.l.b16 %v34
  %v90 = vpack.c.b16 %v87, %v86
  %v91 = vpack.c.b16 %v89, %v88
  %vm94 = vcmask 261120
  %v96 = vsel %vm94, %v74, 0
  %v99 = vsel %vm94, %v75, 0
  %v102 = vsel %vm94, %v76, 0
  %v105 = vsel %vm94, %v77, 0
  %v108 = vsel %vm94, %v78, 0
  %v111 = vsel %vm94, %v79, 0
  %v114 = vsel %vm94, %v80, 0
  %v117 = vsel %vm94, %v81, 0
  %119 = vmatprep.subr.bf16.mxu0 0
  %120 = vmatpush1.bf16.msra.mxu0 0
  %121 = vmatprep.subr.bf16.mxu0 0
  %122 = vmatpush1.bf16.msra.mxu0 0
  %123 = vmatprep.subr.bf16.mxu0 0
  %124 = vmatpush1.bf16.msra.mxu0 0
  %125 = vmatprep.subr.bf16.mxu0 0
  %126 = vmatpush1.bf16.msra.mxu0 0
  %127 = vmatprep.subr.bf16.mxu0 0
  %128 = vmatpush1.bf16.msra.mxu0 0
  %129 = vmatprep.subr.bf16.mxu0 0
  %130 = vmatpush1.bf16.msra.mxu0 0
  %131 = vmatprep.subr.bf16.mxu0 0
  %132 = vmatpush1.bf16.msra.mxu0 %v91
  %133 = vmatprep.subr.bf16.mxu0 0
  %134 = vmatpush1.bf16.msra.mxu0 %v90
  %135 = vmatprep.subr.bf16.mxu0 0
  %136 = vmatpush2.bf16.msra.mxu0 0
  %137 = vmatprep.subr.bf16.mxu0 0
  %138 = vmatpush2.bf16.msra.mxu0 0
  %139 = vmatprep.subr.bf16.mxu0 0
  %140 = vmatpush2.bf16.msra.mxu0 0
  %141 = vmatprep.subr.bf16.mxu0 0
  %142 = vmatpush2.bf16.msra.mxu0 0
  %143 = vmatprep.subr.bf16.mxu0 0
  %144 = vmatpush2.bf16.msra.mxu0 0
  %145 = vmatprep.subr.bf16.mxu0 0
  %146 = vmatpush2.bf16.msra.mxu0 0
  %147 = vmatprep.subr.bf16.mxu0 0
  %148 = vmatpush2.bf16.msra.mxu0 0
  %149 = vmatprep.subr.bf16.mxu0 0
  %150 = vmatpush2.bf16.msra.mxu0 0
  %151 = vmatprep.mubr.bf16.mxu0 0
  %152 = vmatmul.mubr.bf16.gmra.mxu0 %v96
  %v153 = vpop.f32.mrf.mxu0
  %v154 = vadd.f32 %v40, %v153
  %v155 = vpop.f32.mrf.mxu0
  %v156 = vpop.f32.mrf.mxu0
  %v157 = vadd.f32 %v40, %v156
  %v158 = vpop.f32.mrf.mxu0
  %159 = vmatprep.mubr.bf16.mxu0 0
  %160 = vmatmul.mubr.bf16.gmra.mxu0 %v99
  %v161 = vpop.f32.mrf.mxu0
  %v162 = vadd.f32 %v40, %v161
  %v163 = vpop.f32.mrf.mxu0
  %v164 = vpop.f32.mrf.mxu0
  %v165 = vadd.f32 %v40, %v164
  %v166 = vpop.f32.mrf.mxu0
  %167 = vmatprep.mubr.bf16.mxu0 0
  %168 = vmatmul.mubr.bf16.gmra.mxu0 %v102
  %v169 = vpop.f32.mrf.mxu0
  %v170 = vadd.f32 %v40, %v169
  %v171 = vpop.f32.mrf.mxu0
  %v172 = vpop.f32.mrf.mxu0
  %v173 = vadd.f32 %v40, %v172
  %v174 = vpop.f32.mrf.mxu0
  %175 = vmatprep.mubr.bf16.mxu0 0
  %176 = vmatmul.mubr.bf16.gmra.mxu0 %v105
  %v177 = vpop.f32.mrf.mxu0
  %v178 = vadd.f32 %v40, %v177
  %v179 = vpop.f32.mrf.mxu0
  %v180 = vpop.f32.mrf.mxu0
  %v181 = vadd.f32 %v40, %v180
  %v182 = vpop.f32.mrf.mxu0
  %183 = vmatprep.mubr.bf16.mxu0 0
  %184 = vmatmul.mubr.bf16.gmra.mxu0 %v108
  %v185 = vpop.f32.mrf.mxu0
  %v186 = vadd.f32 %v40, %v185
  %v187 = vpop.f32.mrf.mxu0
  %v188 = vpop.f32.mrf.mxu0
  %v189 = vadd.f32 %v40, %v188
  %v190 = vpop.f32.mrf.mxu0
  %191 = vmatprep.mubr.bf16.mxu0 0
  %192 = vmatmul.mubr.bf16.gmra.mxu0 %v111
  %v193 = vpop.f32.mrf.mxu0
  %v194 = vadd.f32 %v40, %v193
  %v195 = vpop.f32.mrf.mxu0
  %v196 = vpop.f32.mrf.mxu0
  %v197 = vadd.f32 %v40, %v196
  %v198 = vpop.f32.mrf.mxu0
  %199 = vmatprep.mubr.bf16.mxu0 0
  %200 = vmatmul.mubr.bf16.gmra.mxu0 %v114
  %v201 = vpop.f32.mrf.mxu0
  %v202 = vadd.f32 %v40, %v201
  %v203 = vpop.f32.mrf.mxu0
  %v204 = vpop.f32.mrf.mxu0
  %v205 = vadd.f32 %v40, %v204
  %v206 = vpop.f32.mrf.mxu0
  %207 = vmatprep.mubr.bf16.mxu0 0
  %208 = vmatmul.mubr.bf16.gmra.mxu0 %v117
  %v209 = vpop.f32.mrf.mxu0
  %v210 = vadd.f32 %v40, %v209
  %v211 = vpop.f32.mrf.mxu0
  %v212 = vpop.f32.mrf.mxu0
  %v213 = vadd.f32 %v40, %v212
  %v214 = vpop.f32.mrf.mxu0
  %215 = vdwg.mxu0
  %v216 = vpack.c.bf16 %v157, %v154
  %v217 = vpack.c.bf16 %v165, %v162
  %v218 = vpack.c.bf16 %v173, %v170
  %v219 = vpack.c.bf16 %v181, %v178
  %v220 = vpack.c.bf16 %v189, %v186
  %v221 = vpack.c.bf16 %v197, %v194
  %v222 = vpack.c.bf16 %v205, %v202
  %v223 = vpack.c.bf16 %v213, %v210
  %v232 = vunpack.c.l.b16 %v216
  %v233 = vunpack.c.h.b16 %v216
  %v234 = vunpack.c.l.b16 %v217
  %v235 = vunpack.c.h.b16 %v217
  %v236 = vunpack.c.l.b16 %v218
  %v237 = vunpack.c.h.b16 %v218
  %v238 = vunpack.c.l.b16 %v219
  %v239 = vunpack.c.h.b16 %v219
  %v240 = vunpack.c.l.b16 %v220
  %v241 = vunpack.c.h.b16 %v220
  %v242 = vunpack.c.l.b16 %v221
  %v243 = vunpack.c.h.b16 %v221
  %v244 = vunpack.c.l.b16 %v222
  %v245 = vunpack.c.h.b16 %v222
  %v246 = vunpack.c.l.b16 %v223
  %v247 = vunpack.c.h.b16 %v223
  %v248 = vpack.c.b16 %v232, %v232
  %v249 = vpack.c.b16 %v233, %v233
  %v250 = vpack.c.b16 %v234, %v234
  %v251 = vpack.c.b16 %v235, %v235
  %v252 = vpack.c.b16 %v236, %v236
  %v253 = vpack.c.b16 %v237, %v237
  %v254 = vpack.c.b16 %v238, %v238
  %v255 = vpack.c.b16 %v239, %v239
  %v256 = vpack.c.b16 %v240, %v240
  %v257 = vpack.c.b16 %v241, %v241
  %v258 = vpack.c.b16 %v242, %v242
  %v259 = vpack.c.b16 %v243, %v243
  %v260 = vpack.c.b16 %v244, %v244
  %v261 = vpack.c.b16 %v245, %v245
  %v262 = vpack.c.b16 %v246, %v246
  %v263 = vpack.c.b16 %v247, %v247
  %280 = vst [vmem:[%s3] sm:$0xf] %v248
  %281 = vst [vmem:[%s3 + $0x4] sm:$0xf] %v249
  %282 = vst [vmem:[%s3 + $0x8] sm:$0xf] %v250
  %283 = vst [vmem:[%s3 + $0xc] sm:$0xf] %v251
  %284 = vst [vmem:[%s3 + $0x10] sm:$0xf] %v252
  %285 = vst [vmem:[%s3 + $0x14] sm:$0xf] %v253
  %286 = vst [vmem:[%s3 + $0x18] sm:$0xf] %v254
  %287 = vst [vmem:[%s3 + $0x1c] sm:$0xf] %v255
  %288 = vst [vmem:[%s3 + $0x20] sm:$0xf] %v256
  %289 = vst [vmem:[%s3 + $0x24] sm:$0xf] %v257
  %290 = vst [vmem:[%s3 + $0x28] sm:$0xf] %v258
  %291 = vst [vmem:[%s3 + $0x2c] sm:$0xf] %v259
  %292 = vst [vmem:[%s3 + $0x30] sm:$0xf] %v260
  %293 = vst [vmem:[%s3 + $0x34] sm:$0xf] %v261
  %294 = vst [vmem:[%s3 + $0x38] sm:$0xf] %v262
  %295 = vst [vmem:[%s3 + $0x3c] sm:$0xf] %v263
  // Predicated region
  $region14: #{deeplab_forward.32} parent=0 // pred_check
    _
  $region15: #{deeplab_forward.32} parent=0 // pred_check_branch
    %297 = sbr.rel (0) target = $region17
  $region16: #{deeplab_forward.32} parent=0 // pred_region
    _
  $region17: #{deeplab_forward.32} parent=0 // pred_fallthru
    _
  // Predicated region
  $region18: #{deeplab_forward.32} parent=0 // pred_check
    _
  $region19: #{deeplab_forward.32} parent=0 // pred_check_branch
    %299 = sbr.rel (0) target = $region21
  $region20: #{deeplab_forward.32} parent=0 // pred_region
    _
  $region21: #{deeplab_forward.32} parent=0 // pred_fallthru
    _

// kernel: deeplab_forward.33
$region0: #{deeplab_forward.33}
  #allocation0 [shape = 'u32[]', space=smem, size = 0x4, offset = 0x4, fixed_abs, tag = 'smem constant byte address 0x4 - core index']
  #allocation1 [shape = 'u32[144,128]{1,0:T(1,128)}', space=vmem, size = 0x12000, scoped, tag = 'internal scratch']
  %s0 = inlined_call_operand.vmem [shape: bf16[16,64], index: 0, kind: input, shape index: {}]
  %s1 = inlined_call_operand.vmem [shape: bf16[64,1024], index: 1, kind: input, shape index: {}]
  %s2 = inlined_call_operand.vmem [shape: f32[16,1024], index: 2, kind: output, shape index: {0}]
  %s3 = inlined_call_operand.vmem [shape: f32[16,1024], index: 3, kind: output, shape index: {1}]
  %s4 = inlined_call_operand.vmem [shape: f32[16,1024], index: 4, kind: output, shape index: {2}]
  %5 = xla_tuple %s2, %s3, %s4
  %s6 = sld [smem:[#allocation0]]
  $region34: #{deeplab_forward.33} parent=0
    _
  %s8 = ssub.s32 1, %s6
  %s9 = scalar_select 0, %s8, %s6
  // Predicated region
  $region2: #{deeplab_forward.33} parent=0 // pred_check
    _
  $region3: #{deeplab_forward.33} parent=0 // pred_check_branch
    %11 = sbr.rel (0) target = $region5
  $region4: #{deeplab_forward.33} parent=0 // pred_region
    _
  $region5: #{deeplab_forward.33} parent=0 // pred_fallthru
    _
  // Predicated region
  $region6: #{deeplab_forward.33} parent=0 // pred_check
    _
  $region7: #{deeplab_forward.33} parent=0 // pred_check_branch
    %13 = sbr.rel (0) target = $region9
  $region8: #{deeplab_forward.33} parent=0 // pred_region
    _
  $region9: #{deeplab_forward.33} parent=0 // pred_fallthru
    _
  %v15 = vld [vmem:[%s0] sm:$0xf]
  %v16 = vld [vmem:[%s0 + $0x4] sm:$0xf]
  %v17 = vld [vmem:[%s1] sm:$0xff]
  %v18 = vld [vmem:[%s1 + $0x8] sm:$0xff]
  %v19 = vld [vmem:[%s1 + $0x10] sm:$0xff]
  %v20 = vld [vmem:[%s1 + $0x18] sm:$0xff]
  %v21 = vld [vmem:[%s1 + $0x20] sm:$0xff]
  %v22 = vld [vmem:[%s1 + $0x28] sm:$0xff]
  %v23 = vld [vmem:[%s1 + $0x30] sm:$0xff]
  %v24 = vld [vmem:[%s1 + $0x38] sm:$0xff]
  %v25 = vld [vmem:[%s1 + $0x40] sm:$0xff]
  %v26 = vld [vmem:[%s1 + $0x48] sm:$0xff]
  %v27 = vld [vmem:[%s1 + $0x50] sm:$0xff]
  %v28 = vld [vmem:[%s1 + $0x58] sm:$0xff]
  %v29 = vld [vmem:[%s1 + $0x60] sm:$0xff]
  %v30 = vld [vmem:[%s1 + $0x68] sm:$0xff]
  %v31 = vld [vmem:[%s1 + $0x70] sm:$0xff]
  %v32 = vld [vmem:[%s1 + $0x78] sm:$0xff]
  %v33 = vld [vmem:[%s1 + $0x80] sm:$0xff]
  %v34 = vld [vmem:[%s1 + $0x88] sm:$0xff]
  %v35 = vld [vmem:[%s1 + $0x90] sm:$0xff]
  %v36 = vld [vmem:[%s1 + $0x98] sm:$0xff]
  %v37 = vld [vmem:[%s1 + $0xa0] sm:$0xff]
  %v38 = vld [vmem:[%s1 + $0xa8] sm:$0xff]
  %v39 = vld [vmem:[%s1 + $0xb0] sm:$0xff]
  %v40 = vld [vmem:[%s1 + $0xb8] sm:$0xff]
  %v41 = vld [vmem:[%s1 + $0xc0] sm:$0xff]
  %v42 = vld [vmem:[%s1 + $0xc8] sm:$0xff]
  %v43 = vld [vmem:[%s1 + $0xd0] sm:$0xff]
  %v44 = vld [vmem:[%s1 + $0xd8] sm:$0xff]
  %v45 = vld [vmem:[%s1 + $0xe0] sm:$0xff]
  %v46 = vld [vmem:[%s1 + $0xe8] sm:$0xff]
  %v47 = vld [vmem:[%s1 + $0xf0] sm:$0xff]
  %v48 = vld [vmem:[%s1 + $0xf8] sm:$0xff]
  %v51 = vunpack.c.l.b16 %v15
  %v52 = vunpack.c.l.b16 %v16
  %v53 = vpack.c.b16 %v52, %v51
  %v86 = vunpack.c.l.b16 %v17
  %v87 = vunpack.c.h.b16 %v17
  %v88 = vunpack.c.l.b16 %v18
  %v89 = vunpack.c.h.b16 %v18
  %v90 = vunpack.c.l.b16 %v19
  %v91 = vunpack.c.h.b16 %v19
  %v92 = vunpack.c.l.b16 %v20
  %v93 = vunpack.c.h.b16 %v20
  %v94 = vunpack.c.l.b16 %v21
  %v95 = vunpack.c.h.b16 %v21
  %v96 = vunpack.c.l.b16 %v22
  %v97 = vunpack.c.h.b16 %v22
  %v98 = vunpack.c.l.b16 %v23
  %v99 = vunpack.c.h.b16 %v23
  %v100 = vunpack.c.l.b16 %v24
  %v101 = vunpack.c.h.b16 %v24
  %v102 = vunpack.c.l.b16 %v25
  %v103 = vunpack.c.h.b16 %v25
  %v104 = vunpack.c.l.b16 %v26
  %v105 = vunpack.c.h.b16 %v26
  %v106 = vunpack.c.l.b16 %v27
  %v107 = vunpack.c.h.b16 %v27
  %v108 = vunpack.c.l.b16 %v28
  %v109 = vunpack.c.h.b16 %v28
  %v110 = vunpack.c.l.b16 %v29
  %v111 = vunpack.c.h.b16 %v29
  %v112 = vunpack.c.l.b16 %v30
  %v113 = vunpack.c.h.b16 %v30
  %v114 = vunpack.c.l.b16 %v31
  %v115 = vunpack.c.h.b16 %v31
  %v116 = vunpack.c.l.b16 %v32
  %v117 = vunpack.c.h.b16 %v32
  %v118 = vunpack.c.l.b16 %v33
  %v119 = vunpack.c.h.b16 %v33
  %v120 = vunpack.c.l.b16 %v34
  %v121 = vunpack.c.h.b16 %v34
  %v122 = vunpack.c.l.b16 %v35
  %v123 = vunpack.c.h.b16 %v35
  %v124 = vunpack.c.l.b16 %v36
  %v125 = vunpack.c.h.b16 %v36
  %v126 = vunpack.c.l.b16 %v37
  %v127 = vunpack.c.h.b16 %v37
  %v128 = vunpack.c.l.b16 %v38
  %v129 = vunpack.c.h.b16 %v38
  %v130 = vunpack.c.l.b16 %v39
  %v131 = vunpack.c.h.b16 %v39
  %v132 = vunpack.c.l.b16 %v40
  %v133 = vunpack.c.h.b16 %v40
  %v134 = vunpack.c.l.b16 %v41
  %v135 = vunpack.c.h.b16 %v41
  %v136 = vunpack.c.l.b16 %v42
  %v137 = vunpack.c.h.b16 %v42
  %v138 = vunpack.c.l.b16 %v43
  %v139 = vunpack.c.h.b16 %v43
  %v140 = vunpack.c.l.b16 %v44
  %v141 = vunpack.c.h.b16 %v44
  %v142 = vunpack.c.l.b16 %v45
  %v143 = vunpack.c.h.b16 %v45
  %v144 = vunpack.c.l.b16 %v46
  %v145 = vunpack.c.h.b16 %v46
  %v146 = vunpack.c.l.b16 %v47
  %v147 = vunpack.c.h.b16 %v47
  %v148 = vunpack.c.l.b16 %v48
  %v149 = vunpack.c.h.b16 %v48
  %v150 = vpack.c.b16 %v94, %v86
  %v151 = vpack.c.b16 %v95, %v87
  %v152 = vpack.c.b16 %v96, %v88
  %v153 = vpack.c.b16 %v97, %v89
  %v154 = vpack.c.b16 %v98, %v90
  %v155 = vpack.c.b16 %v99, %v91
  %v156 = vpack.c.b16 %v100, %v92
  %v157 = vpack.c.b16 %v101, %v93
  %v158 = vpack.c.b16 %v110, %v102
  %v159 = vpack.c.b16 %v111, %v103
  %v160 = vpack.c.b16 %v112, %v104
  %v161 = vpack.c.b16 %v113, %v105
  %v162 = vpack.c.b16 %v114, %v106
  %v163 = vpack.c.b16 %v115, %v107
  %v164 = vpack.c.b16 %v116, %v108
  %v165 = vpack.c.b16 %v117, %v109
  %v166 = vpack.c.b16 %v126, %v118
  %v167 = vpack.c.b16 %v127, %v119
  %v168 = vpack.c.b16 %v128, %v120
  %v169 = vpack.c.b16 %v129, %v121
  %v170 = vpack.c.b16 %v130, %v122
  %v171 = vpack.c.b16 %v131, %v123
  %v172 = vpack.c.b16 %v132, %v124
  %v173 = vpack.c.b16 %v133, %v125
  %v174 = vpack.c.b16 %v142, %v134
  %v175 = vpack.c.b16 %v143, %v135
  %v176 = vpack.c.b16 %v144, %v136
  %v177 = vpack.c.b16 %v145, %v137
  %v178 = vpack.c.b16 %v146, %v138
  %v179 = vpack.c.b16 %v147, %v139
  %v180 = vpack.c.b16 %v148, %v140
  %v181 = vpack.c.b16 %v149, %v141
  %vm214 = vcmask 523264
  %v216 = vsel %vm214, %v53, 0
  %218 = vmatprep.subr.bf16.mxu0 0
  %219 = vmatpush1.bf16.msra.mxu0 0
  %220 = vmatprep.subr.bf16.mxu0 0
  %221 = vmatpush1.bf16.msra.mxu0 0
  %222 = vmatprep.subr.bf16.mxu0 0
  %223 = vmatpush1.bf16.msra.mxu0 0
  %224 = vmatprep.subr.bf16.mxu0 0
  %225 = vmatpush1.bf16.msra.mxu0 0
  %226 = vmatprep.subr.bf16.mxu0 %v175
  %227 = vmatpush1.bf16.msra.mxu0 %v174
  %228 = vmatprep.subr.bf16.mxu0 %v167
  %229 = vmatpush1.bf16.msra.mxu0 %v166
  %230 = vmatprep.subr.bf16.mxu0 %v159
  %231 = vmatpush1.bf16.msra.mxu0 %v158
  %232 = vmatprep.subr.bf16.mxu0 %v151
  %233 = vmatpush1.bf16.msra.mxu0 %v150
  %234 = vmatprep.subr.bf16.mxu0 0
  %235 = vmatpush2.bf16.msra.mxu0 0
  %236 = vmatprep.subr.bf16.mxu0 0
  %237 = vmatpush2.bf16.msra.mxu0 0
  %238 = vmatprep.subr.bf16.mxu0 0
  %239 = vmatpush2.bf16.msra.mxu0 0
  %240 = vmatprep.subr.bf16.mxu0 0
  %241 = vmatpush2.bf16.msra.mxu0 0
  %242 = vmatprep.subr.bf16.mxu0 0
  %243 = vmatpush2.bf16.msra.mxu0 0
  %244 = vmatprep.subr.bf16.mxu0 0
  %245 = vmatpush2.bf16.msra.mxu0 0
  %246 = vmatprep.subr.bf16.mxu0 0
  %247 = vmatpush2.bf16.msra.mxu0 0
  %248 = vmatprep.subr.bf16.mxu0 0
  %249 = vmatpush2.bf16.msra.mxu0 0
  %250 = vmatprep.mubr.bf16.mxu0 0
  %251 = vmatmul.mubr.bf16.gmra.mxu0 %v216
  %v252 = vpop.f32.mrf.mxu0
  %v253 = vadd.f32 0.0, %v252
  %v254 = vpop.f32.mrf.mxu0
  %v255 = vadd.f32 0.0, %v254
  %v256 = vpop.f32.mrf.mxu0
  %v257 = vadd.f32 0.0, %v256
  %v258 = vpop.f32.mrf.mxu0
  %v259 = vadd.f32 0.0, %v258
  %260 = vdwg.mxu0
  %261 = vmatprep.subr.bf16.mxu0 0
  %262 = vmatpush1.bf16.msra.mxu0 0
  %263 = vmatprep.subr.bf16.mxu0 0
  %264 = vmatpush1.bf16.msra.mxu0 0
  %265 = vmatprep.subr.bf16.mxu0 0
  %266 = vmatpush1.bf16.msra.mxu0 0
  %267 = vmatprep.subr.bf16.mxu0 0
  %268 = vmatpush1.bf16.msra.mxu0 0
  %269 = vmatprep.subr.bf16.mxu0 %v177
  %270 = vmatpush1.bf16.msra.mxu0 %v176
  %271 = vmatprep.subr.bf16.mxu0 %v169
  %272 = vmatpush1.bf16.msra.mxu0 %v168
  %273 = vmatprep.subr.bf16.mxu0 %v161
  %274 = vmatpush1.bf16.msra.mxu0 %v160
  %275 = vmatprep.subr.bf16.mxu0 %v153
  %276 = vmatpush1.bf16.msra.mxu0 %v152
  %277 = vmatprep.subr.bf16.mxu0 0
  %278 = vmatpush2.bf16.msra.mxu0 0
  %279 = vmatprep.subr.bf16.mxu0 0
  %280 = vmatpush2.bf16.msra.mxu0 0
  %281 = vmatprep.subr.bf16.mxu0 0
  %282 = vmatpush2.bf16.msra.mxu0 0
  %283 = vmatprep.subr.bf16.mxu0 0
  %284 = vmatpush2.bf16.msra.mxu0 0
  %285 = vmatprep.subr.bf16.mxu0 0
  %286 = vmatpush2.bf16.msra.mxu0 0
  %287 = vmatprep.subr.bf16.mxu0 0
  %288 = vmatpush2.bf16.msra.mxu0 0
  %289 = vmatprep.subr.bf16.mxu0 0
  %290 = vmatpush2.bf16.msra.mxu0 0
  %291 = vmatprep.subr.bf16.mxu0 0
  %292 = vmatpush2.bf16.msra.mxu0 0
  %293 = vmatprep.mubr.bf16.mxu0 0
  %294 = vmatmul.mubr.bf16.gmra.mxu0 %v216
  %v295 = vpop.f32.mrf.mxu0
  %v296 = vadd.f32 0.0, %v295
  %v297 = vpop.f32.mrf.mxu0
  %v298 = vadd.f32 0.0, %v297
  %v299 = vpop.f32.mrf.mxu0
  %v300 = vadd.f32 0.0, %v299
  %v301 = vpop.f32.mrf.mxu0
  %v302 = vadd.f32 0.0, %v301
  %303 = vdwg.mxu0
  %304 = vmatprep.subr.bf16.mxu0 0
  %305 = vmatpush1.bf16.msra.mxu0 0
  %306 = vmatprep.subr.bf16.mxu0 0
  %307 = vmatpush1.bf16.msra.mxu0 0
  %308 = vmatprep.subr.bf16.mxu0 0
  %309 = vmatpush1.bf16.msra.mxu0 0
  %310 = vmatprep.subr.bf16.mxu0 0
  %311 = vmatpush1.bf16.msra.mxu0 0
  %312 = vmatprep.subr.bf16.mxu0 %v179
  %313 = vmatpush1.bf16.msra.mxu0 %v178
  %314 = vmatprep.subr.bf16.mxu0 %v171
  %315 = vmatpush1.bf16.msra.mxu0 %v170
  %316 = vmatprep.subr.bf16.mxu0 %v163
  %317 = vmatpush1.bf16.msra.mxu0 %v162
  %318 = vmatprep.subr.bf16.mxu0 %v155
  %319 = vmatpush1.bf16.msra.mxu0 %v154
  %320 = vmatprep.subr.bf16.mxu0 0
  %321 = vmatpush2.bf16.msra.mxu0 0
  %322 = vmatprep.subr.bf16.mxu0 0
  %323 = vmatpush2.bf16.msra.mxu0 0
  %324 = vmatprep.subr.bf16.mxu0 0
  %325 = vmatpush2.bf16.msra.mxu0 0
  %326 = vmatprep.subr.bf16.mxu0 0
  %327 = vmatpush2.bf16.msra.mxu0 0
  %328 = vmatprep.subr.bf16.mxu0 0
  %329 = vmatpush2.bf16.msra.mxu0 0
  %330 = vmatprep.subr.bf16.mxu0 0
  %331 = vmatpush2.bf16.msra.mxu0 0
  %332 = vmatprep.subr.bf16.mxu0 0
  %333 = vmatpush2.bf16.msra.mxu0 0
  %334 = vmatprep.subr.bf16.mxu0 0
  %335 = vmatpush2.bf16.msra.mxu0 0
  %336 = vmatprep.mubr.bf16.mxu0 0
  %337 = vmatmul.mubr.bf16.gmra.mxu0 %v216
  %v338 = vpop.f32.mrf.mxu0
  %v339 = vadd.f32 0.0, %v338
  %v340 = vpop.f32.mrf.mxu0
  %v341 = vadd.f32 0.0, %v340
  %v342 = vpop.f32.mrf.mxu0
  %v343 = vadd.f32 0.0, %v342
  %v344 = vpop.f32.mrf.mxu0
  %v345 = vadd.f32 0.0, %v344
  %346 = vdwg.mxu0
  %347 = vmatprep.subr.bf16.mxu0 0
  %348 = vmatpush1.bf16.msra.mxu0 0
  %349 = vmatprep.subr.bf16.mxu0 0
  %350 = vmatpush1.bf16.msra.mxu0 0
  %351 = vmatprep.subr.bf16.mxu0 0
  %352 = vmatpush1.bf16.msra.mxu0 0
  %353 = vmatprep.subr.bf16.mxu0 0
  %354 = vmatpush1.bf16.msra.mxu0 0
  %355 = vmatprep.subr.bf16.mxu0 %v181
  %356 = vmatpush1.bf16.msra.mxu0 %v180
  %357 = vmatprep.subr.bf16.mxu0 %v173
  %358 = vmatpush1.bf16.msra.mxu0 %v172
  %359 = vmatprep.subr.bf16.mxu0 %v165
  %360 = vmatpush1.bf16.msra.mxu0 %v164
  %361 = vmatprep.subr.bf16.mxu0 %v157
  %362 = vmatpush1.bf16.msra.mxu0 %v156
  %363 = vmatprep.subr.bf16.mxu0 0
  %364 = vmatpush2.bf16.msra.mxu0 0
  %365 = vmatprep.subr.bf16.mxu0 0
  %366 = vmatpush2.bf16.msra.mxu0 0
  %367 = vmatprep.subr.bf16.mxu0 0
  %368 = vmatpush2.bf16.msra.mxu0 0
  %369 = vmatprep.subr.bf16.mxu0 0
  %370 = vmatpush2.bf16.msra.mxu0 0
  %371 = vmatprep.subr.bf16.mxu0 0
  %372 = vmatpush2.bf16.msra.mxu0 0
  %373 = vmatprep.subr.bf16.mxu0 0
  %374 = vmatpush2.bf16.msra.mxu0 0
  %375 = vmatprep.subr.bf16.mxu0 0
  %376 = vmatpush2.bf16.msra.mxu0 0
  %377 = vmatprep.subr.bf16.mxu0 0
  %378 = vmatpush2.bf16.msra.mxu0 0
  %379 = vmatprep.mubr.bf16.mxu0 0
  %380 = vmatmul.mubr.bf16.gmra.mxu0 %v216
  %v381 = vpop.f32.mrf.mxu0
  %v382 = vadd.f32 0.0, %v381
  %v383 = vpop.f32.mrf.mxu0
  %v384 = vadd.f32 0.0, %v383
  %v385 = vpop.f32.mrf.mxu0
  %v386 = vadd.f32 0.0, %v385
  %v387 = vpop.f32.mrf.mxu0
  %v388 = vadd.f32 0.0, %v387
  %389 = vdwg.mxu0
  %390 = vst [vmem:[%s2] sm:$0xff] %v253
  %391 = vst [vmem:[%s2 + $0x8] sm:$0xff] %v255
  %392 = vst [vmem:[%s2 + $0x10] sm:$0xff] %v296
  %393 = vst [vmem:[%s2 + $0x18] sm:$0xff] %v298
  %394 = vst [vmem:[%s2 + $0x20] sm:$0xff] %v339
  %395 = vst [vmem:[%s2 + $0x28] sm:$0xff] %v341
  %396 = vst [vmem:[%s2 + $0x30] sm:$0xff] %v382
  %397 = vst [vmem:[%s2 + $0x38] sm:$0xff] %v384
  %398 = vst [vmem:[%s2 + $0x40] sm:$0xff] %v257
  %399 = vst [vmem:[%s2 + $0x48] sm:$0xff] %v259
  %400 = vst [vmem:[%s2 + $0x50] sm:$0xff] %v300
  %401 = vst [vmem:[%s2 + $0x58] sm:$0xff] %v302
  %402 = vst [vmem:[%s2 + $0x60] sm:$0xff] %v343
  %403 = vst [vmem:[%s2 + $0x68] sm:$0xff] %v345
  %404 = vst [vmem:[%s2 + $0x70] sm:$0xff] %v386
  %405 = vst [vmem:[%s2 + $0x78] sm:$0xff] %v388
  %v406 = vtanh.pop %v253
  %v407 = vtanh.pop %v255
  %v408 = vtanh.pop %v296
  %v409 = vtanh.pop %v298
  %v410 = vtanh.pop %v339
  %v411 = vtanh.pop %v341
  %v412 = vtanh.pop %v382
  %v413 = vtanh.pop %v384
  %v414 = vtanh.pop %v257
  %v415 = vtanh.pop %v259
  %v416 = vtanh.pop %v300
  %v417 = vtanh.pop %v302
  %v418 = vtanh.pop %v343
  %v419 = vtanh.pop %v345
  %v420 = vtanh.pop %v386
  %v421 = vtanh.pop %v388
  %422 = vst [vmem:[%s3] sm:$0xff] %v406
  %423 = vst [vmem:[%s3 + $0x8] sm:$0xff] %v407
  %424 = vst [vmem:[%s3 + $0x10] sm:$0xff] %v408
  %425 = vst [vmem:[%s3 + $0x18] sm:$0xff] %v409
  %426 = vst [vmem:[%s3 + $0x20] sm:$0xff] %v410
  %427 = vst [vmem:[%s3 + $0x28] sm:$0xff] %v411
  %428 = vst [vmem:[%s3 + $0x30] sm:$0xff] %v412
  %429 = vst [vmem:[%s3 + $0x38] sm:$0xff] %v413
  %430 = vst [vmem:[%s3 + $0x40] sm:$0xff] %v414
  %431 = vst [vmem:[%s3 + $0x48] sm:$0xff] %v415
  %432 = vst [vmem:[%s3 + $0x50] sm:$0xff] %v416
  %433 = vst [vmem:[%s3 + $0x58] sm:$0xff] %v417
  %434 = vst [vmem:[%s3 + $0x60] sm:$0xff] %v418
  %435 = vst [vmem:[%s3 + $0x68] sm:$0xff] %v419
  %436 = vst [vmem:[%s3 + $0x70] sm:$0xff] %v420
  %437 = vst [vmem:[%s3 + $0x78] sm:$0xff] %v421
  %v438 = vmul.f32 %v253, 0.5
  %v439 = vmul.f32 %v255, 0.5
  %v440 = vmul.f32 %v296, 0.5
  %v441 = vmul.f32 %v298, 0.5
  %v442 = vmul.f32 %v339, 0.5
  %v443 = vmul.f32 %v341, 0.5
  %v444 = vmul.f32 %v382, 0.5
  %v445 = vmul.f32 %v384, 0.5
  %v446 = vmul.f32 %v257, 0.5
  %v447 = vmul.f32 %v259, 0.5
  %v448 = vmul.f32 %v300, 0.5
  %v449 = vmul.f32 %v302, 0.5
  %v450 = vmul.f32 %v343, 0.5
  %v451 = vmul.f32 %v345, 0.5
  %v452 = vmul.f32 %v386, 0.5
  %v453 = vmul.f32 %v388, 0.5
  %v454 = vtanh.pop %v438
  %v455 = vtanh.pop %v439
  %v456 = vtanh.pop %v440
  %v457 = vtanh.pop %v441
  %v458 = vtanh.pop %v442
  %v459 = vtanh.pop %v443
  %v460 = vtanh.pop %v444
  %v461 = vtanh.pop %v445
  %v462 = vtanh.pop %v446
  %v463 = vtanh.pop %v447
  %v464 = vtanh.pop %v448
  %v465 = vtanh.pop %v449
  %v466 = vtanh.pop %v450
  %v467 = vtanh.pop %v451
  %v468 = vtanh.pop %v452
  %v469 = vtanh.pop %v453
  %v470 = vadd.f32 %v454, 1.0
  %v471 = vadd.f32 %v455, 1.0
  %v472 = vadd.f32 %v456, 1.0
  %v473 = vadd.f32 %v457, 1.0
  %v474 = vadd.f32 %v458, 1.0
  %v475 = vadd.f32 %v459, 1.0
  %v476 = vadd.f32 %v460, 1.0
  %v477 = vadd.f32 %v461, 1.0
  %v478 = vadd.f32 %v462, 1.0
  %v479 = vadd.f32 %v463, 1.0
  %v480 = vadd.f32 %v464, 1.0
  %v481 = vadd.f32 %v465, 1.0
  %v482 = vadd.f32 %v466, 1.0
  %v483 = vadd.f32 %v467, 1.0
  %v484 = vadd.f32 %v468, 1.0
  %v485 = vadd.f32 %v469, 1.0
  %v486 = vmul.f32 %v470, 0.5
  %v487 = vmul.f32 %v471, 0.5
  %v488 = vmul.f32 %v472, 0.5
  %v489 = vmul.f32 %v473, 0.5
  %v490 = vmul.f32 %v474, 0.5
  %v491 = vmul.f32 %v475, 0.5
  %v492 = vmul.f32 %v476, 0.5
  %v493 = vmul.f32 %v477, 0.5
  %v494 = vmul.f32 %v478, 0.5
  %v495 = vmul.f32 %v479, 0.5
  %v496 = vmul.f32 %v480, 0.5
  %v497 = vmul.f32 %v481, 0.5
  %v498 = vmul.f32 %v482, 0.5
  %v499 = vmul.f32 %v483, 0.5
  %v500 = vmul.f32 %v484, 0.5
  %v501 = vmul.f32 %v485, 0.5
  %502 = vst [vmem:[%s4] sm:$0xff] %v486
  %503 = vst [vmem:[%s4 + $0x8] sm:$0xff] %v487
  %504 = vst [vmem:[%s4 + $0x10] sm:$0xff] %v488
  %505 = vst [vmem:[%s4 + $0x18] sm:$0xff] %v489
  %506 = vst [vmem:[%s4 + $0x20] sm:$0xff] %v490
  %507 = vst [vmem:[%s4 + $0x28] sm:$0xff] %v491
  %508 = vst [vmem:[%s4 + $0x30] sm:$0xff] %v492
  %509 = vst [vmem:[%s4 + $0x38] sm:$0xff] %v493
  %510 = vst [vmem:[%s4 + $0x40] sm:$0xff] %v494
  %511 = vst [vmem:[%s4 + $0x48] sm:$0xff] %v495
  %512 = vst [vmem:[%s4 + $0x50] sm:$0xff] %v496
  %513 = vst [vmem:[%s4 + $0x58] sm:$0xff] %v497
  %514 = vst [vmem:[%s4 + $0x60] sm:$0xff] %v498
  %515 = vst [vmem:[%s4 + $0x68] sm:$0xff] %v499
  %516 = vst [vmem:[%s4 + $0x70] sm:$0xff] %v500
  %517 = vst [vmem:[%s4 + $0x78] sm:$0xff] %v501
  // Predicated region
  $region10: #{deeplab_forward.33} parent=0 // pred_check
    _
  $region11: #{deeplab_forward.33} parent=0 // pred_check_branch
    %519 = sbr.rel (0) target = $region13
  $region12: #{deeplab_forward.33} parent=0 // pred_region
    _
  $region13: #{deeplab_forward.33} parent=0 // pred_fallthru
    _
  // Predicated region
  $region14: #{deeplab_forward.33} parent=0 // pred_check
    _
  $region15: #{deeplab_forward.33} parent=0 // pred_check_branch
    %521 = sbr.rel (0) target = $region17
  $region16: #{deeplab_forward.33} parent=0 // pred_region
    _
  $region17: #{deeplab_forward.33} parent=0 // pred_fallthru
    _
  // Predicated region
  $region18: #{deeplab_forward.33} parent=0 // pred_check
    _
  $region19: #{deeplab_forward.33} parent=0 // pred_check_branch
    %523 = sbr.rel (0) target = $region21
  $region20: #{deeplab_forward.33} parent=0 // pred_region
    _
  $region21: #{deeplab_forward.33} parent=0 // pred_fallthru
    _
  // Predicated region
  $region22: #{deeplab_forward.33} parent=0 // pred_check
    _
  $region23: #{deeplab_forward.33} parent=0 // pred_check_branch
    %525 = sbr.rel (0) target = $region25
  $region24: #{deeplab_forward.33} parent=0 // pred_region
    _
  $region25: #{deeplab_forward.33} parent=0 // pred_fallthru
    _
  // Predicated region
  $region26: #{deeplab_forward.33} parent=0 // pred_check
    _
  $region27: #{deeplab_forward.33} parent=0 // pred_check_branch
    %527 = sbr.rel (0) target = $region29
  $region28: #{deeplab_forward.33} parent=0 // pred_region
    _
  $region29: #{deeplab_forward.33} parent=0 // pred_fallthru
    _
  // Predicated region
  $region30: #{deeplab_forward.33} parent=0 // pred_check
    _
  $region31: #{deeplab_forward.33} parent=0 // pred_check_branch
    %529 = sbr.rel (0) target = $region33
  $region32: #{deeplab_forward.33} parent=0 // pred_region
    _
  $region33: #{deeplab_forward.33} parent=0 // pred_fallthru
    _

</llo_original>
